<compile_context>
chip_gen: v6e
topology: v6e:2x2x1
jax: 0.10.0
libtpu: 0.0.40
codegen_flags: <defaults>
</compile_context>

<pallas_src>
import functools

import jax
import jax.numpy as jnp
from jax.experimental import pallas as pl
from jax.experimental.pallas import tpu as pltpu

NEG_SLOPE_ATT = 0.2    # GATConv leaky_relu on attention logits
NEG_SLOPE_ACT = 0.01   # F.leaky_relu default
LN_EPS = 1e-5
MASK_VAL = -1e30

_VMEM = pl.BlockSpec(memory_space=pltpu.MemorySpace.VMEM)


# ---------------------------------------------------------------------------
# Fused Pallas kernel
# ---------------------------------------------------------------------------
def _graph_encoder_kernel(
    # graph / pooling inputs
    x_ref, edstT_ref, esrc_ref, edst_ref, ea_ref, bsel_ref, cnt_ref, colmask_ref,
    # layer-1 params
    w1_ref, asrc1_ref, adst1_ref, coef1_ref, bias1_ref, gamma1_ref, beta1_ref,
    # layer-2 params
    w2_ref, asrc2_ref, adst2_ref, coef2_ref, bias2_ref, gamma2_ref, beta2_ref,
    # merge params
    wm_ref, bm_ref,
    # outputs
    xout_ref, pooled_ref, att1_ref, att2_ref):
  """Whole GraphEncoder forward in one kernel invocation."""
  x = x_ref[...]               # (N, F)
  edst_T = edstT_ref[...]      # (N, E')  one-hot of dst nodes, transposed
  esrc = esrc_ref[...]         # (E', N)  one-hot of src nodes
  edst = edst_ref[...]         # (E', N)  one-hot of dst nodes
  ea = ea_ref[...]             # (1, E')  edge attrs (incl. mean-filled self loops)
  colmask = colmask_ref[...]   # (H, HC)  1.0 where output column belongs to head h

  heads = colmask.shape[0]
  N = x.shape[0]
  Ep = esrc.shape[0]

  # In-kernel densification (replaces XLA scatters): M[i,j]=1 / A[i,j]=attr for edge j->i.
  M = jnp.dot(edst_T, esrc, preferred_element_type=jnp.float32)        # (N, N)
  A = jnp.dot(edst_T * ea, esrc, preferred_element_type=jnp.float32)   # (N, N)
  edge_mask = M[None] > 0.0                                            # (1, N, N)

  edst_b = jnp.broadcast_to(edst[None], (heads, Ep, N))                # hoisted: shared by both layers
  esrc_b = jnp.broadcast_to(esrc[None], (heads, Ep, N))

  def gat_layer(h_in, W, asrc_p, adst_p, coef, bias, gamma, beta, att_out_ref):
    hc = W.shape[1]
    xw = jnp.dot(h_in, W, preferred_element_type=jnp.float32)          # (N, HC)

    # All-heads attention coefficients: two A @ B^T matmuls (no per-head lane slicing).
    a_src = jax.lax.dot_general(asrc_p, xw, (((1,), (1,)), ((), ())),
                                preferred_element_type=jnp.float32)    # (H, N)
    a_dst = jax.lax.dot_general(adst_p, xw, (((1,), (1,)), ((), ())),
                                preferred_element_type=jnp.float32)    # (H, N)

    # logits[h,i,j] = a_dst[h,i] + a_src[h,j] + edge_attr[i,j] * coef[h]
    logits = (a_dst[:, :, None] + a_src[:, None, :]
              + A[None] * coef[:, :, None])                            # (H, N, N)
    logits = jnp.where(logits > 0, logits, NEG_SLOPE_ATT * logits)     # leaky_relu(0.2)
    logits = jnp.where(edge_mask, logits, MASK_VAL)                    # single mask step
    logits = logits - jnp.max(logits, axis=-1, keepdims=True)
    p = jnp.exp(logits)                                                # non-edges underflow to 0
    alpha = p * pl.reciprocal(jnp.sum(p, axis=-1, keepdims=True), approx=True)

    # Edge-list attention values gathered in-kernel: att[h,e] = alpha[h, dst[e], src[e]].
    t = jnp.einsum('hen,hnm->hem', edst_b, alpha,
                   preferred_element_type=jnp.float32)                 # (H, E', N)
    att_out_ref[...] = jnp.sum(t * esrc_b, axis=-1)                    # (H, E')

    # Head-batched aggregation: one batched matmul, heads recombined by column mask.
    xw_b = jnp.broadcast_to(xw[None], (heads, N, hc))
    agg = jnp.einsum('hij,hjk->hik', alpha, xw_b,
                     preferred_element_type=jnp.float32)               # (H, N, HC)
    out = jnp.sum(agg * colmask[:, None, :], axis=0) + bias            # (N, HC) concat-equivalent

    out = jnp.where(out > 0, out, NEG_SLOPE_ACT * out)                 # F.leaky_relu
    mean = jnp.mean(out, axis=-1, keepdims=True)                       # LayerNorm
    var = jnp.mean((out - mean) ** 2, axis=-1, keepdims=True)
    out = (out - mean) * jax.lax.rsqrt(var + LN_EPS)
    # TODO(synk): nn.Dropout(0.5) kept as identity (eval-mode semantics).
    return out * gamma + beta

  x1 = gat_layer(x, w1_ref[...], asrc1_ref[...], adst1_ref[...], coef1_ref[...],
                 bias1_ref[...], gamma1_ref[...], beta1_ref[...], att1_ref)
  x2 = gat_layer(x1, w2_ref[...], asrc2_ref[...], adst2_ref[...], coef2_ref[...],
                 bias2_ref[...], gamma2_ref[...], beta2_ref[...], att2_ref)

  # merge Linear + leaky_relu + global_mean_pool (one-hot batch matmul)
  y = jnp.dot(x2, wm_ref[...], preferred_element_type=jnp.float32) + bm_ref[...]
  y = jnp.where(y > 0, y, NEG_SLOPE_ACT * y)
  xout_ref[...] = y
  pooled = jnp.dot(bsel_ref[...], y, preferred_element_type=jnp.float32)   # (G, HC) sums
  pooled_ref[...] = pooled / cnt_ref[...]                                   # mean per graph


# ---------------------------------------------------------------------------
# Parameter init (deterministic, synthetic)
# ---------------------------------------------------------------------------
def _glorot(key, shape):
  fan_in, fan_out = shape[0], shape[-1]
  lim = (6.0 / (fan_in + fan_out)) ** 0.5
  return jax.random.uniform(key, shape, jnp.float32, -lim, lim)


def init_params(key, num_features, hidden, heads=5):
  C = hidden // heads
  ks = jax.random.split(key, 12)

  def gat_params(kw, ks_, kd, ke, kwe, in_dim):
    return {
        'W': _glorot(kw, (in_dim, hidden)),           # lin.weight^T
        'att_src': _glorot(ks_, (heads, C)),
        'att_dst': _glorot(kd, (heads, C)),
        'att_edge': _glorot(ke, (heads, C)),
        'we': _glorot(kwe, (1, hidden)),              # lin_edge.weight (edge_dim=1), flattened
        'bias': jnp.zeros((1, hidden), jnp.float32),
        'gamma': jnp.ones((1, hidden), jnp.float32),  # LayerNorm weight
        'beta': jnp.zeros((1, hidden), jnp.float32),  # LayerNorm bias
    }

  return {
      'conv1': gat_params(ks[0], ks[1], ks[2], ks[3], ks[4], num_features),
      'conv2': gat_params(ks[5], ks[6], ks[7], ks[8], ks[9], hidden),
      'merge': {
          'W': _glorot(ks[10], (hidden, hidden)),     # xavier_uniform, stored as (in, out)
          'b': jax.random.uniform(ks[11], (1, hidden), jnp.float32,
                                  -1.0 / hidden ** 0.5, 1.0 / hidden ** 0.5),
      },
  }


# ---------------------------------------------------------------------------
# Forward: scatter-free prologue + ONE fused pallas_call
# ---------------------------------------------------------------------------
def graph_encoder_forward(params, x, edge_index, edge_attr, batch, num_graphs, heads=5):
  N = x.shape[0]
  hidden = params['conv1']['W'].shape[1]
  C = hidden // heads

  src, dst = edge_index[0], edge_index[1]
  ea = edge_attr[:, 0]  # CustomGATConv squeezes (E,1) -> (E,)
  node_ids = jnp.arange(N, dtype=src.dtype)

  # add_self_loops(fill_value='mean'): self-loop attr of node i = mean of incoming edge attrs.
  # (example inputs contain no self-loops, so remove_self_loops is a no-op)
  edst_orig = (dst[:, None] == node_ids[None, :]).astype(jnp.float32)       # (E, N) one-hot
  sums = ea @ edst_orig                                                      # (N,)
  cnts = jnp.sum(edst_orig, axis=0)                                          # (N,)
  loop_attr = sums / jnp.maximum(cnts, 1.0)

  src_all = jnp.concatenate([src, node_ids])
  dst_all = jnp.concatenate([dst, node_ids])
  ea_all = jnp.concatenate([ea, loop_attr])
  edge_index_sl = jnp.stack([src_all, dst_all], axis=0)

  # one-hot connectivity (broadcast compares, NO scatters)
  esrc = (src_all[:, None] == node_ids[None, :]).astype(jnp.float32)         # (E', N)
  edst = (dst_all[:, None] == node_ids[None, :]).astype(jnp.float32)         # (E', N)
  edst_T = edst.T                                                            # (N, E')
  ea_row = ea_all[None, :]                                                   # (1, E')

  # pooling selectors (empty-graph guard on the count)
  bsel = (batch[None, :] == jnp.arange(num_graphs)[:, None]).astype(jnp.float32)  # (G, N)
  cnt = jnp.maximum(jnp.sum(bsel, axis=1, keepdims=True), 1.0)                     # (G, 1)

  # head-column mask / block-structured attention projections (all heads in one matmul)
  head_mask = (jnp.arange(hidden)[None, :] // C
               == jnp.arange(heads)[:, None]).astype(jnp.float32)            # (H, HC)

  def layer_inputs(p):
    asrc_p = head_mask * jnp.tile(p['att_src'], (1, heads))                  # (H, HC)
    adst_p = head_mask * jnp.tile(p['att_dst'], (1, heads))                  # (H, HC)
    coef = jnp.sum(p['we'].reshape(heads, C) * p['att_edge'],
                   axis=-1, keepdims=True)                                   # (H, 1)
    return (p['W'], asrc_p, adst_p, coef, p['bias'], p['gamma'], p['beta'])

  l1 = layer_inputs(params['conv1'])
  l2 = layer_inputs(params['conv2'])
  Ep = src_all.shape[0]

  x_out, pooled, att1_he, att2_he = pl.pallas_call(
      _graph_encoder_kernel,
      out_shape=(jax.ShapeDtypeStruct((N, hidden), jnp.float32),
                 jax.ShapeDtypeStruct((num_graphs, hidden), jnp.float32),
                 jax.ShapeDtypeStruct((heads, Ep), jnp.float32),
                 jax.ShapeDtypeStruct((heads, Ep), jnp.float32)),
      in_specs=[_VMEM] * 24,
      out_specs=(_VMEM, _VMEM, _VMEM, _VMEM),
  )(x, edst_T, esrc, edst, ea_row, bsel, cnt, head_mask,
    *l1, *l2, params['merge']['W'], params['merge']['b'])

  att1 = (edge_index_sl, att1_he.T)   # (E', H), PyG layout
  att2 = (edge_index_sl, att2_he.T)
  return x_out, pooled, att1, att2


# ---------------------------------------------------------------------------
if __name__ == "__main__":
  key = jax.random.PRNGKey(0)
  N, F, hidden, heads, G = 16, 16, 40, 5, 2            # hidden_channels=40 -> per_head=8

  kx, ke, kp = jax.random.split(key, 3)
  x = jax.random.normal(kx, (N, F), jnp.float32)

  # two bidirectional ring graphs of 8 nodes each (no self-loops)
  src_list, dst_list = [], []
  for g in range(G):
    off = g * 8
    for i in range(8):
      a, b = off + i, off + (i + 1) % 8
      src_list += [a, b]
      dst_list += [b, a]
  edge_index = jnp.array([src_list, dst_list], dtype=jnp.int32)     # (2, E)
  edge_attr = jax.random.uniform(ke, (edge_index.shape[1], 1), jnp.float32)
  batch = jnp.array([0] * 8 + [1] * 8, dtype=jnp.int32)

  params = init_params(kp, F, hidden, heads)

  fwd = jax.jit(functools.partial(graph_encoder_forward, num_graphs=G, heads=heads))
  x_out, x_pooled, att1, att2 = fwd(params, x, edge_index, edge_attr, batch)

  jax.block_until_ready((x_out, x_pooled, att1[1], att2[1]))
  Ep = edge_index.shape[1] + N
  assert x_out.shape == (N, hidden)
  assert x_pooled.shape == (G, hidden)
  assert att1[1].shape == (Ep, heads)
  assert att2[1].shape == (Ep, heads)
  print("KERNEL_OK")
</pallas_src>

<mosaic_0001>
module attributes {stable_mosaic.version = 11 : i64} {
  func.func @_graph_encoder_kernel(%arg0: memref<16x16xf32, #tpu.memory_space<vmem>>, %arg1: memref<16x48xf32, #tpu.memory_space<vmem>>, %arg2: memref<48x16xf32, #tpu.memory_space<vmem>>, %arg3: memref<48x16xf32, #tpu.memory_space<vmem>>, %arg4: memref<1x48xf32, #tpu.memory_space<vmem>>, %arg5: memref<2x16xf32, #tpu.memory_space<vmem>>, %arg6: memref<2x1xf32, #tpu.memory_space<vmem>>, %arg7: memref<5x40xf32, #tpu.memory_space<vmem>>, %arg8: memref<16x40xf32, #tpu.memory_space<vmem>>, %arg9: memref<5x40xf32, #tpu.memory_space<vmem>>, %arg10: memref<5x40xf32, #tpu.memory_space<vmem>>, %arg11: memref<5x1xf32, #tpu.memory_space<vmem>>, %arg12: memref<1x40xf32, #tpu.memory_space<vmem>>, %arg13: memref<1x40xf32, #tpu.memory_space<vmem>>, %arg14: memref<1x40xf32, #tpu.memory_space<vmem>>, %arg15: memref<40x40xf32, #tpu.memory_space<vmem>>, %arg16: memref<5x40xf32, #tpu.memory_space<vmem>>, %arg17: memref<5x40xf32, #tpu.memory_space<vmem>>, %arg18: memref<5x1xf32, #tpu.memory_space<vmem>>, %arg19: memref<1x40xf32, #tpu.memory_space<vmem>>, %arg20: memref<1x40xf32, #tpu.memory_space<vmem>>, %arg21: memref<1x40xf32, #tpu.memory_space<vmem>>, %arg22: memref<40x40xf32, #tpu.memory_space<vmem>>, %arg23: memref<1x40xf32, #tpu.memory_space<vmem>>, %arg24: memref<16x40xf32, #tpu.memory_space<vmem>>, %arg25: memref<2x40xf32, #tpu.memory_space<vmem>>, %arg26: memref<5x48xf32, #tpu.memory_space<vmem>>, %arg27: memref<5x48xf32, #tpu.memory_space<vmem>>) attributes {dimension_semantics = [], scalar_prefetch = 0 : i64, scratch_operands = 0 : i64, tpu.core_type = #tpu.core_type<tc>} {
    %c0 = arith.constant 0 : index
    %c0_0 = arith.constant 0 : index
    %0 = vector.load %arg0[%c0, %c0_0] : memref<16x16xf32, #tpu.memory_space<vmem>>, vector<16x16xf32>
    %c0_1 = arith.constant 0 : index
    %c0_2 = arith.constant 0 : index
    %1 = vector.load %arg1[%c0_1, %c0_2] : memref<16x48xf32, #tpu.memory_space<vmem>>, vector<16x48xf32>
    %c0_3 = arith.constant 0 : index
    %c0_4 = arith.constant 0 : index
    %2 = vector.load %arg2[%c0_3, %c0_4] : memref<48x16xf32, #tpu.memory_space<vmem>>, vector<48x16xf32>
    %c0_5 = arith.constant 0 : index
    %c0_6 = arith.constant 0 : index
    %3 = vector.load %arg3[%c0_5, %c0_6] : memref<48x16xf32, #tpu.memory_space<vmem>>, vector<48x16xf32>
    %c0_7 = arith.constant 0 : index
    %c0_8 = arith.constant 0 : index
    %4 = vector.load %arg4[%c0_7, %c0_8] : memref<1x48xf32, #tpu.memory_space<vmem>>, vector<1x48xf32>
    %c0_9 = arith.constant 0 : index
    %c0_10 = arith.constant 0 : index
    %5 = vector.load %arg7[%c0_9, %c0_10] : memref<5x40xf32, #tpu.memory_space<vmem>>, vector<5x40xf32>
    %cst = arith.constant dense<0.000000e+00> : vector<16x16xf32>
    %6 = tpu.matmul %1, %2, %cst {dimension_numbers = #tpu.dot_dimension_numbers<[1], [0], [0], [1], [0, 0, 1, 1], [], []>} : vector<16x48xf32>, vector<48x16xf32>, vector<16x16xf32> -> vector<16x16xf32>
    %7 = vector.broadcast %4 : vector<1x48xf32> to vector<16x48xf32>
    %8 = arith.mulf %1, %7 : vector<16x48xf32>
    %cst_11 = arith.constant dense<0.000000e+00> : vector<16x16xf32>
    %9 = tpu.matmul %8, %2, %cst_11 {dimension_numbers = #tpu.dot_dimension_numbers<[1], [0], [0], [1], [0, 0, 1, 1], [], []>} : vector<16x48xf32>, vector<48x16xf32>, vector<16x16xf32> -> vector<16x16xf32>
    %10 = vector.shape_cast %6 : vector<16x16xf32> to vector<1x16x16xf32>
    %cst_12 = arith.constant 0.000000e+00 : f32
    %11 = vector.broadcast %cst_12 : f32 to vector<1x16x16xf32>
    %12 = arith.cmpf ogt, %10, %11 : vector<1x16x16xf32>
    %13 = vector.shape_cast %3 : vector<48x16xf32> to vector<1x48x16xf32>
    %14 = vector.shape_cast %13 : vector<1x48x16xf32> to vector<1x48x16xf32>
    %15 = vector.broadcast %14 : vector<1x48x16xf32> to vector<5x48x16xf32>
    %16 = vector.shape_cast %2 : vector<48x16xf32> to vector<1x48x16xf32>
    %17 = vector.shape_cast %16 : vector<1x48x16xf32> to vector<1x48x16xf32>
    %18 = vector.broadcast %17 : vector<1x48x16xf32> to vector<5x48x16xf32>
    %c0_13 = arith.constant 0 : index
    %c0_14 = arith.constant 0 : index
    %19 = vector.load %arg8[%c0_13, %c0_14] : memref<16x40xf32, #tpu.memory_space<vmem>>, vector<16x40xf32>
    %c0_15 = arith.constant 0 : index
    %c0_16 = arith.constant 0 : index
    %20 = vector.load %arg9[%c0_15, %c0_16] : memref<5x40xf32, #tpu.memory_space<vmem>>, vector<5x40xf32>
    %c0_17 = arith.constant 0 : index
    %c0_18 = arith.constant 0 : index
    %21 = vector.load %arg10[%c0_17, %c0_18] : memref<5x40xf32, #tpu.memory_space<vmem>>, vector<5x40xf32>
    %c0_19 = arith.constant 0 : index
    %c0_20 = arith.constant 0 : index
    %22 = vector.load %arg11[%c0_19, %c0_20] : memref<5x1xf32, #tpu.memory_space<vmem>>, vector<5x1xf32>
    %c0_21 = arith.constant 0 : index
    %c0_22 = arith.constant 0 : index
    %23 = vector.load %arg12[%c0_21, %c0_22] : memref<1x40xf32, #tpu.memory_space<vmem>>, vector<1x40xf32>
    %c0_23 = arith.constant 0 : index
    %c0_24 = arith.constant 0 : index
    %24 = vector.load %arg13[%c0_23, %c0_24] : memref<1x40xf32, #tpu.memory_space<vmem>>, vector<1x40xf32>
    %c0_25 = arith.constant 0 : index
    %c0_26 = arith.constant 0 : index
    %25 = vector.load %arg14[%c0_25, %c0_26] : memref<1x40xf32, #tpu.memory_space<vmem>>, vector<1x40xf32>
    %cst_27 = arith.constant dense<0.000000e+00> : vector<16x40xf32>
    %26 = tpu.matmul %0, %19, %cst_27 {dimension_numbers = #tpu.dot_dimension_numbers<[1], [0], [0], [1], [0, 0, 1, 1], [], []>} : vector<16x16xf32>, vector<16x40xf32>, vector<16x40xf32> -> vector<16x40xf32>
    %cst_28 = arith.constant dense<0.000000e+00> : vector<5x16xf32>
    %27 = tpu.matmul %20, %26, %cst_28 {dimension_numbers = #tpu.dot_dimension_numbers<[1], [1], [0], [0], [0, 0, 1, 0], [], []>} : vector<5x40xf32>, vector<16x40xf32>, vector<5x16xf32> -> vector<5x16xf32>
    %cst_29 = arith.constant dense<0.000000e+00> : vector<5x16xf32>
    %28 = tpu.matmul %21, %26, %cst_29 {dimension_numbers = #tpu.dot_dimension_numbers<[1], [1], [0], [0], [0, 0, 1, 0], [], []>} : vector<5x40xf32>, vector<16x40xf32>, vector<5x16xf32> -> vector<5x16xf32>
    %29 = vector.shape_cast %28 : vector<5x16xf32> to vector<5x16x1xf32>
    %30 = vector.shape_cast %27 : vector<5x16xf32> to vector<5x1x16xf32>
    %31 = vector.broadcast %29 : vector<5x16x1xf32> to vector<5x16x16xf32>
    %32 = vector.broadcast %30 : vector<5x1x16xf32> to vector<5x16x16xf32>
    %33 = arith.addf %31, %32 : vector<5x16x16xf32>
    %34 = vector.shape_cast %9 : vector<16x16xf32> to vector<1x16x16xf32>
    %35 = vector.shape_cast %22 : vector<5x1xf32> to vector<5x1x1xf32>
    %36 = vector.broadcast %34 : vector<1x16x16xf32> to vector<5x16x16xf32>
    %37 = vector.broadcast %35 : vector<5x1x1xf32> to vector<5x16x16xf32>
    %38 = arith.mulf %36, %37 : vector<5x16x16xf32>
    %39 = arith.addf %33, %38 : vector<5x16x16xf32>
    %cst_30 = arith.constant 0.000000e+00 : f32
    %40 = vector.broadcast %cst_30 : f32 to vector<5x16x16xf32>
    %41 = arith.cmpf ogt, %39, %40 : vector<5x16x16xf32>
    %cst_31 = arith.constant 2.000000e-01 : f32
    %42 = vector.broadcast %cst_31 : f32 to vector<5x16x16xf32>
    %43 = arith.mulf %42, %39 : vector<5x16x16xf32>
    %44 = arith.select %41, %39, %43 : vector<5x16x16xi1>, vector<5x16x16xf32>
    %cst_32 = arith.constant -1.000000e+30 : f32
    %45 = vector.shape_cast %12 : vector<1x16x16xi1> to vector<1x16x16xi1>
    %46 = vector.broadcast %45 : vector<1x16x16xi1> to vector<5x16x16xi1>
    %47 = vector.broadcast %cst_32 : f32 to vector<5x16x16xf32>
    %48 = arith.select %46, %44, %47 : vector<5x16x16xi1>, vector<5x16x16xf32>
    %cst_33 = arith.constant dense<0xFF800000> : vector<5x16xf32>
    %49 = vector.multi_reduction <maximumf>, %48, %cst_33 [2] : vector<5x16x16xf32> to vector<5x16xf32>
    %50 = vector.shape_cast %49 : vector<5x16xf32> to vector<5x16x1xf32>
    %51 = vector.broadcast %50 : vector<5x16x1xf32> to vector<5x16x16xf32>
    %52 = arith.subf %48, %51 : vector<5x16x16xf32>
    %53 = math.exp %52 : vector<5x16x16xf32>
    %cst_34 = arith.constant dense<0.000000e+00> : vector<5x16xf32>
    %54 = vector.multi_reduction <add>, %53, %cst_34 [2] : vector<5x16x16xf32> to vector<5x16xf32>
    %55 = vector.shape_cast %54 : vector<5x16xf32> to vector<5x16x1xf32>
    %56 = tpu.reciprocal %55 {approx = true} : vector<5x16x1xf32> -> vector<5x16x1xf32>
    %57 = vector.broadcast %56 : vector<5x16x1xf32> to vector<5x16x16xf32>
    %58 = arith.mulf %53, %57 : vector<5x16x16xf32>
    "tpu.trace_start"() <{level = 10 : i32, message = "hen,hnm->hem"}> : () -> ()
    %cst_35 = arith.constant dense<0.000000e+00> : vector<5x48x16xf32>
    %59 = tpu.matmul %15, %58, %cst_35 {dimension_numbers = #tpu.dot_dimension_numbers<[2], [1], [1], [2], [0, 0, 0, 1, 1, 2], [0], [0]>} : vector<5x48x16xf32>, vector<5x16x16xf32>, vector<5x48x16xf32> -> vector<5x48x16xf32>
    "tpu.trace_stop"() : () -> ()
    %60 = arith.mulf %59, %18 : vector<5x48x16xf32>
    %cst_36 = arith.constant dense<0.000000e+00> : vector<5x48xf32>
    %61 = vector.multi_reduction <add>, %60, %cst_36 [2] : vector<5x48x16xf32> to vector<5x48xf32>
    %c0_37 = arith.constant 0 : index
    %c0_38 = arith.constant 0 : index
    %62 = vector.load %arg26[%c0_37, %c0_38] : memref<5x48xf32, #tpu.memory_space<vmem>>, vector<5x48xf32>
    tpu.vector_store %arg26[%c0_37, %c0_38], %61 {strides = array<i32>} : memref<5x48xf32, #tpu.memory_space<vmem>>, vector<5x48xf32>,
    %63 = vector.shape_cast %26 : vector<16x40xf32> to vector<1x16x40xf32>
    %64 = vector.shape_cast %63 : vector<1x16x40xf32> to vector<1x16x40xf32>
    %65 = vector.broadcast %64 : vector<1x16x40xf32> to vector<5x16x40xf32>
    "tpu.trace_start"() <{level = 10 : i32, message = "hij,hjk->hik"}> : () -> ()
    %cst_39 = arith.constant dense<0.000000e+00> : vector<5x16x40xf32>
    %66 = tpu.matmul %58, %65, %cst_39 {dimension_numbers = #tpu.dot_dimension_numbers<[2], [1], [1], [2], [0, 0, 0, 1, 1, 2], [0], [0]>} : vector<5x16x16xf32>, vector<5x16x40xf32>, vector<5x16x40xf32> -> vector<5x16x40xf32>
    "tpu.trace_stop"() : () -> ()
    %67 = vector.shape_cast %5 : vector<5x40xf32> to vector<5x1x40xf32>
    %68 = vector.broadcast %67 : vector<5x1x40xf32> to vector<5x16x40xf32>
    %69 = arith.mulf %66, %68 : vector<5x16x40xf32>
    %cst_40 = arith.constant dense<0.000000e+00> : vector<16x40xf32>
    %70 = vector.multi_reduction <add>, %69, %cst_40 [0] : vector<5x16x40xf32> to vector<16x40xf32>
    %71 = vector.broadcast %23 : vector<1x40xf32> to vector<16x40xf32>
    %72 = arith.addf %70, %71 : vector<16x40xf32>
    %cst_41 = arith.constant 0.000000e+00 : f32
    %73 = vector.broadcast %cst_41 : f32 to vector<16x40xf32>
    %74 = arith.cmpf ogt, %72, %73 : vector<16x40xf32>
    %cst_42 = arith.constant 0.00999999977 : f32
    %75 = vector.broadcast %cst_42 : f32 to vector<16x40xf32>
    %76 = arith.mulf %75, %72 : vector<16x40xf32>
    %77 = arith.select %74, %72, %76 : vector<16x40xi1>, vector<16x40xf32>
    %cst_43 = arith.constant dense<0.000000e+00> : vector<16xf32>
    %78 = vector.multi_reduction <add>, %77, %cst_43 [1] : vector<16x40xf32> to vector<16xf32>
    %79 = vector.shape_cast %78 : vector<16xf32> to vector<16x1xf32>
    %cst_44 = arith.constant 4.000000e+01 : f32
    %80 = vector.broadcast %cst_44 : f32 to vector<16x1xf32>
    %81 = arith.divf %79, %80 : vector<16x1xf32>
    %82 = vector.broadcast %81 : vector<16x1xf32> to vector<16x40xf32>
    %83 = arith.subf %77, %82 : vector<16x40xf32>
    %84 = arith.mulf %83, %83 : vector<16x40xf32>
    %cst_45 = arith.constant dense<0.000000e+00> : vector<16xf32>
    %85 = vector.multi_reduction <add>, %84, %cst_45 [1] : vector<16x40xf32> to vector<16xf32>
    %86 = vector.shape_cast %85 : vector<16xf32> to vector<16x1xf32>
    %cst_46 = arith.constant 4.000000e+01 : f32
    %87 = vector.broadcast %cst_46 : f32 to vector<16x1xf32>
    %88 = arith.divf %86, %87 : vector<16x1xf32>
    %89 = vector.broadcast %81 : vector<16x1xf32> to vector<16x40xf32>
    %90 = arith.subf %77, %89 : vector<16x40xf32>
    %cst_47 = arith.constant 9.99999974E-6 : f32
    %91 = vector.broadcast %cst_47 : f32 to vector<16x1xf32>
    %92 = arith.addf %88, %91 : vector<16x1xf32>
    %93 = math.rsqrt %92 : vector<16x1xf32>
    %94 = vector.broadcast %93 : vector<16x1xf32> to vector<16x40xf32>
    %95 = arith.mulf %90, %94 : vector<16x40xf32>
    %96 = vector.broadcast %24 : vector<1x40xf32> to vector<16x40xf32>
    %97 = arith.mulf %95, %96 : vector<16x40xf32>
    %98 = vector.broadcast %25 : vector<1x40xf32> to vector<16x40xf32>
    %99 = arith.addf %97, %98 : vector<16x40xf32>
    %c0_48 = arith.constant 0 : index
    %c0_49 = arith.constant 0 : index
    %100 = vector.load %arg15[%c0_48, %c0_49] : memref<40x40xf32, #tpu.memory_space<vmem>>, vector<40x40xf32>
    %c0_50 = arith.constant 0 : index
    %c0_51 = arith.constant 0 : index
    %101 = vector.load %arg16[%c0_50, %c0_51] : memref<5x40xf32, #tpu.memory_space<vmem>>, vector<5x40xf32>
    %c0_52 = arith.constant 0 : index
    %c0_53 = arith.constant 0 : index
    %102 = vector.load %arg17[%c0_52, %c0_53] : memref<5x40xf32, #tpu.memory_space<vmem>>, vector<5x40xf32>
    %c0_54 = arith.constant 0 : index
    %c0_55 = arith.constant 0 : index
    %103 = vector.load %arg18[%c0_54, %c0_55] : memref<5x1xf32, #tpu.memory_space<vmem>>, vector<5x1xf32>
    %c0_56 = arith.constant 0 : index
    %c0_57 = arith.constant 0 : index
    %104 = vector.load %arg19[%c0_56, %c0_57] : memref<1x40xf32, #tpu.memory_space<vmem>>, vector<1x40xf32>
    %c0_58 = arith.constant 0 : index
    %c0_59 = arith.constant 0 : index
    %105 = vector.load %arg20[%c0_58, %c0_59] : memref<1x40xf32, #tpu.memory_space<vmem>>, vector<1x40xf32>
    %c0_60 = arith.constant 0 : index
    %c0_61 = arith.constant 0 : index
    %106 = vector.load %arg21[%c0_60, %c0_61] : memref<1x40xf32, #tpu.memory_space<vmem>>, vector<1x40xf32>
    %cst_62 = arith.constant dense<0.000000e+00> : vector<16x40xf32>
    %107 = tpu.matmul %99, %100, %cst_62 {dimension_numbers = #tpu.dot_dimension_numbers<[1], [0], [0], [1], [0, 0, 1, 1], [], []>} : vector<16x40xf32>, vector<40x40xf32>, vector<16x40xf32> -> vector<16x40xf32>
    %cst_63 = arith.constant dense<0.000000e+00> : vector<5x16xf32>
    %108 = tpu.matmul %101, %107, %cst_63 {dimension_numbers = #tpu.dot_dimension_numbers<[1], [1], [0], [0], [0, 0, 1, 0], [], []>} : vector<5x40xf32>, vector<16x40xf32>, vector<5x16xf32> -> vector<5x16xf32>
    %cst_64 = arith.constant dense<0.000000e+00> : vector<5x16xf32>
    %109 = tpu.matmul %102, %107, %cst_64 {dimension_numbers = #tpu.dot_dimension_numbers<[1], [1], [0], [0], [0, 0, 1, 0], [], []>} : vector<5x40xf32>, vector<16x40xf32>, vector<5x16xf32> -> vector<5x16xf32>
    %110 = vector.shape_cast %109 : vector<5x16xf32> to vector<5x16x1xf32>
    %111 = vector.shape_cast %108 : vector<5x16xf32> to vector<5x1x16xf32>
    %112 = vector.broadcast %110 : vector<5x16x1xf32> to vector<5x16x16xf32>
    %113 = vector.broadcast %111 : vector<5x1x16xf32> to vector<5x16x16xf32>
    %114 = arith.addf %112, %113 : vector<5x16x16xf32>
    %115 = vector.shape_cast %9 : vector<16x16xf32> to vector<1x16x16xf32>
    %116 = vector.shape_cast %103 : vector<5x1xf32> to vector<5x1x1xf32>
    %117 = vector.broadcast %115 : vector<1x16x16xf32> to vector<5x16x16xf32>
    %118 = vector.broadcast %116 : vector<5x1x1xf32> to vector<5x16x16xf32>
    %119 = arith.mulf %117, %118 : vector<5x16x16xf32>
    %120 = arith.addf %114, %119 : vector<5x16x16xf32>
    %cst_65 = arith.constant 0.000000e+00 : f32
    %121 = vector.broadcast %cst_65 : f32 to vector<5x16x16xf32>
    %122 = arith.cmpf ogt, %120, %121 : vector<5x16x16xf32>
    %cst_66 = arith.constant 2.000000e-01 : f32
    %123 = vector.broadcast %cst_66 : f32 to vector<5x16x16xf32>
    %124 = arith.mulf %123, %120 : vector<5x16x16xf32>
    %125 = arith.select %122, %120, %124 : vector<5x16x16xi1>, vector<5x16x16xf32>
    %cst_67 = arith.constant -1.000000e+30 : f32
    %126 = vector.shape_cast %12 : vector<1x16x16xi1> to vector<1x16x16xi1>
    %127 = vector.broadcast %126 : vector<1x16x16xi1> to vector<5x16x16xi1>
    %128 = vector.broadcast %cst_67 : f32 to vector<5x16x16xf32>
    %129 = arith.select %127, %125, %128 : vector<5x16x16xi1>, vector<5x16x16xf32>
    %cst_68 = arith.constant dense<0xFF800000> : vector<5x16xf32>
    %130 = vector.multi_reduction <maximumf>, %129, %cst_68 [2] : vector<5x16x16xf32> to vector<5x16xf32>
    %131 = vector.shape_cast %130 : vector<5x16xf32> to vector<5x16x1xf32>
    %132 = vector.broadcast %131 : vector<5x16x1xf32> to vector<5x16x16xf32>
    %133 = arith.subf %129, %132 : vector<5x16x16xf32>
    %134 = math.exp %133 : vector<5x16x16xf32>
    %cst_69 = arith.constant dense<0.000000e+00> : vector<5x16xf32>
    %135 = vector.multi_reduction <add>, %134, %cst_69 [2] : vector<5x16x16xf32> to vector<5x16xf32>
    %136 = vector.shape_cast %135 : vector<5x16xf32> to vector<5x16x1xf32>
    %137 = tpu.reciprocal %136 {approx = true} : vector<5x16x1xf32> -> vector<5x16x1xf32>
    %138 = vector.broadcast %137 : vector<5x16x1xf32> to vector<5x16x16xf32>
    %139 = arith.mulf %134, %138 : vector<5x16x16xf32>
    "tpu.trace_start"() <{level = 10 : i32, message = "hen,hnm->hem"}> : () -> ()
    %cst_70 = arith.constant dense<0.000000e+00> : vector<5x48x16xf32>
    %140 = tpu.matmul %15, %139, %cst_70 {dimension_numbers = #tpu.dot_dimension_numbers<[2], [1], [1], [2], [0, 0, 0, 1, 1, 2], [0], [0]>} : vector<5x48x16xf32>, vector<5x16x16xf32>, vector<5x48x16xf32> -> vector<5x48x16xf32>
    "tpu.trace_stop"() : () -> ()
    %141 = arith.mulf %140, %18 : vector<5x48x16xf32>
    %cst_71 = arith.constant dense<0.000000e+00> : vector<5x48xf32>
    %142 = vector.multi_reduction <add>, %141, %cst_71 [2] : vector<5x48x16xf32> to vector<5x48xf32>
    %c0_72 = arith.constant 0 : index
    %c0_73 = arith.constant 0 : index
    %143 = vector.load %arg27[%c0_72, %c0_73] : memref<5x48xf32, #tpu.memory_space<vmem>>, vector<5x48xf32>
    tpu.vector_store %arg27[%c0_72, %c0_73], %142 {strides = array<i32>} : memref<5x48xf32, #tpu.memory_space<vmem>>, vector<5x48xf32>,
    %144 = vector.shape_cast %107 : vector<16x40xf32> to vector<1x16x40xf32>
    %145 = vector.shape_cast %144 : vector<1x16x40xf32> to vector<1x16x40xf32>
    %146 = vector.broadcast %145 : vector<1x16x40xf32> to vector<5x16x40xf32>
    "tpu.trace_start"() <{level = 10 : i32, message = "hij,hjk->hik"}> : () -> ()
    %cst_74 = arith.constant dense<0.000000e+00> : vector<5x16x40xf32>
    %147 = tpu.matmul %139, %146, %cst_74 {dimension_numbers = #tpu.dot_dimension_numbers<[2], [1], [1], [2], [0, 0, 0, 1, 1, 2], [0], [0]>} : vector<5x16x16xf32>, vector<5x16x40xf32>, vector<5x16x40xf32> -> vector<5x16x40xf32>
    "tpu.trace_stop"() : () -> ()
    %148 = vector.shape_cast %5 : vector<5x40xf32> to vector<5x1x40xf32>
    %149 = vector.broadcast %148 : vector<5x1x40xf32> to vector<5x16x40xf32>
    %150 = arith.mulf %147, %149 : vector<5x16x40xf32>
    %cst_75 = arith.constant dense<0.000000e+00> : vector<16x40xf32>
    %151 = vector.multi_reduction <add>, %150, %cst_75 [0] : vector<5x16x40xf32> to vector<16x40xf32>
    %152 = vector.broadcast %104 : vector<1x40xf32> to vector<16x40xf32>
    %153 = arith.addf %151, %152 : vector<16x40xf32>
    %cst_76 = arith.constant 0.000000e+00 : f32
    %154 = vector.broadcast %cst_76 : f32 to vector<16x40xf32>
    %155 = arith.cmpf ogt, %153, %154 : vector<16x40xf32>
    %cst_77 = arith.constant 0.00999999977 : f32
    %156 = vector.broadcast %cst_77 : f32 to vector<16x40xf32>
    %157 = arith.mulf %156, %153 : vector<16x40xf32>
    %158 = arith.select %155, %153, %157 : vector<16x40xi1>, vector<16x40xf32>
    %cst_78 = arith.constant dense<0.000000e+00> : vector<16xf32>
    %159 = vector.multi_reduction <add>, %158, %cst_78 [1] : vector<16x40xf32> to vector<16xf32>
    %160 = vector.shape_cast %159 : vector<16xf32> to vector<16x1xf32>
    %cst_79 = arith.constant 4.000000e+01 : f32
    %161 = vector.broadcast %cst_79 : f32 to vector<16x1xf32>
    %162 = arith.divf %160, %161 : vector<16x1xf32>
    %163 = vector.broadcast %162 : vector<16x1xf32> to vector<16x40xf32>
    %164 = arith.subf %158, %163 : vector<16x40xf32>
    %165 = arith.mulf %164, %164 : vector<16x40xf32>
    %cst_80 = arith.constant dense<0.000000e+00> : vector<16xf32>
    %166 = vector.multi_reduction <add>, %165, %cst_80 [1] : vector<16x40xf32> to vector<16xf32>
    %167 = vector.shape_cast %166 : vector<16xf32> to vector<16x1xf32>
    %cst_81 = arith.constant 4.000000e+01 : f32
    %168 = vector.broadcast %cst_81 : f32 to vector<16x1xf32>
    %169 = arith.divf %167, %168 : vector<16x1xf32>
    %170 = vector.broadcast %162 : vector<16x1xf32> to vector<16x40xf32>
    %171 = arith.subf %158, %170 : vector<16x40xf32>
    %cst_82 = arith.constant 9.99999974E-6 : f32
    %172 = vector.broadcast %cst_82 : f32 to vector<16x1xf32>
    %173 = arith.addf %169, %172 : vector<16x1xf32>
    %174 = math.rsqrt %173 : vector<16x1xf32>
    %175 = vector.broadcast %174 : vector<16x1xf32> to vector<16x40xf32>
    %176 = arith.mulf %171, %175 : vector<16x40xf32>
    %177 = vector.broadcast %105 : vector<1x40xf32> to vector<16x40xf32>
    %178 = arith.mulf %176, %177 : vector<16x40xf32>
    %179 = vector.broadcast %106 : vector<1x40xf32> to vector<16x40xf32>
    %180 = arith.addf %178, %179 : vector<16x40xf32>
    %c0_83 = arith.constant 0 : index
    %c0_84 = arith.constant 0 : index
    %181 = vector.load %arg22[%c0_83, %c0_84] : memref<40x40xf32, #tpu.memory_space<vmem>>, vector<40x40xf32>
    %cst_85 = arith.constant dense<0.000000e+00> : vector<16x40xf32>
    %182 = tpu.matmul %180, %181, %cst_85 {dimension_numbers = #tpu.dot_dimension_numbers<[1], [0], [0], [1], [0, 0, 1, 1], [], []>} : vector<16x40xf32>, vector<40x40xf32>, vector<16x40xf32> -> vector<16x40xf32>
    %c0_86 = arith.constant 0 : index
    %c0_87 = arith.constant 0 : index
    %183 = vector.load %arg23[%c0_86, %c0_87] : memref<1x40xf32, #tpu.memory_space<vmem>>, vector<1x40xf32>
    %184 = vector.broadcast %183 : vector<1x40xf32> to vector<16x40xf32>
    %185 = arith.addf %182, %184 : vector<16x40xf32>
    %cst_88 = arith.constant 0.000000e+00 : f32
    %186 = vector.broadcast %cst_88 : f32 to vector<16x40xf32>
    %187 = arith.cmpf ogt, %185, %186 : vector<16x40xf32>
    %cst_89 = arith.constant 0.00999999977 : f32
    %188 = vector.broadcast %cst_89 : f32 to vector<16x40xf32>
    %189 = arith.mulf %188, %185 : vector<16x40xf32>
    %190 = arith.select %187, %185, %189 : vector<16x40xi1>, vector<16x40xf32>
    %c0_90 = arith.constant 0 : index
    %c0_91 = arith.constant 0 : index
    %191 = vector.load %arg24[%c0_90, %c0_91] : memref<16x40xf32, #tpu.memory_space<vmem>>, vector<16x40xf32>
    tpu.vector_store %arg24[%c0_90, %c0_91], %190 {strides = array<i32>} : memref<16x40xf32, #tpu.memory_space<vmem>>, vector<16x40xf32>,
    %c0_92 = arith.constant 0 : index
    %c0_93 = arith.constant 0 : index
    %192 = vector.load %arg5[%c0_92, %c0_93] : memref<2x16xf32, #tpu.memory_space<vmem>>, vector<2x16xf32>
    %cst_94 = arith.constant dense<0.000000e+00> : vector<2x40xf32>
    %193 = tpu.matmul %192, %190, %cst_94 {dimension_numbers = #tpu.dot_dimension_numbers<[1], [0], [0], [1], [0, 0, 1, 1], [], []>} : vector<2x16xf32>, vector<16x40xf32>, vector<2x40xf32> -> vector<2x40xf32>
    %c0_95 = arith.constant 0 : index
    %c0_96 = arith.constant 0 : index
    %194 = vector.load %arg6[%c0_95, %c0_96] : memref<2x1xf32, #tpu.memory_space<vmem>>, vector<2x1xf32>
    %195 = vector.broadcast %194 : vector<2x1xf32> to vector<2x40xf32>
    %196 = arith.divf %193, %195 : vector<2x40xf32>
    %c0_97 = arith.constant 0 : index
    %c0_98 = arith.constant 0 : index
    %197 = vector.load %arg25[%c0_97, %c0_98] : memref<2x40xf32, #tpu.memory_space<vmem>>, vector<2x40xf32>
    tpu.vector_store %arg25[%c0_97, %c0_98], %196 {strides = array<i32>} : memref<2x40xf32, #tpu.memory_space<vmem>>, vector<2x40xf32>,
    return
  }
}

</mosaic_0001>

<llo_original>
// kernel: tile.24
$region0: #{tile.24}
  %s0 = inlined_call_operand.vmem [shape: f32[5,5,8], index: 0, kind: input, shape index: {}]
  %s1 = inlined_call_operand.vmem [shape: f32[5,40], index: 1, kind: output, shape index: {}]
  %v2 = vld [vmem:[%s0] ss:$8 sm:$0xf]
  %s3 = scalar_lea.vmem %s0, 28
  %v4 = vld [vmem:[%s3] sm:$0x10]
  %vm5 = vcmask 1044484
  %v6 = vsel %vm5, %v4, %v2
  %vm7 = vcmask 64512
  %8 = vst.msk [vmem:[%s1] sm:$0x1f] %vm7, %v6
  %s9 = scalar_lea.vmem %s0, 4
  %v10 = vld [vmem:[%s9] ss:$8 sm:$0xf]
  %s11 = scalar_lea.vmem %s0, 32
  %v12 = vld [vmem:[%s11] sm:$0x10]
  %vm13 = vcmask 1044484
  %v14 = vsel %vm13, %v12, %v10
  %15 = vrot.lane.b32.xlu0 %v14, 32
  %v16 = vpop.permute.xlu0 %15
  %vm17 = vcmask 326912
  %18 = vst.msk [vmem:[%s1] sm:$0x1f] %vm17, %v16
  %s19 = scalar_lea.vmem %s0, 3
  %v20 = vld [vmem:[%s19] ss:$8 sm:$0xf]
  %s21 = scalar_lea.vmem %s0, 31
  %v22 = vld [vmem:[%s21] sm:$0x10]
  %vm23 = vcmask 1044484
  %v24 = vsel %vm23, %v22, %v20
  %25 = vrot.lane.b32.xlu0 %v24, 24
  %v26 = vpop.permute.xlu0 %25
  %vm27 = vcmask 261312
  %28 = vst.msk [vmem:[%s1] sm:$0x1f] %vm27, %v26
  %s29 = scalar_lea.vmem %s0, 2
  %v30 = vld [vmem:[%s29] ss:$8 sm:$0xf]
  %s31 = scalar_lea.vmem %s0, 30
  %v32 = vld [vmem:[%s31] sm:$0x10]
  %vm33 = vcmask 1044484
  %v34 = vsel %vm33, %v32, %v30
  %35 = vrot.lane.b32.xlu0 %v34, 16
  %v36 = vpop.permute.xlu0 %35
  %vm37 = vcmask 195712
  %38 = vst.msk [vmem:[%s1] sm:$0x1f] %vm37, %v36
  %s39 = scalar_lea.vmem %s0, 1
  %v40 = vld [vmem:[%s39] ss:$8 sm:$0xf]
  %s41 = scalar_lea.vmem %s0, 29
  %v42 = vld [vmem:[%s41] sm:$0x10]
  %vm43 = vcmask 1044484
  %v44 = vsel %vm43, %v42, %v40
  %45 = vrot.lane.b32.xlu0 %v44, 8
  %v46 = vpop.permute.xlu0 %45
  %vm47 = vcmask 130112
  %48 = vst.msk [vmem:[%s1] sm:$0x1f] %vm47, %v46

// kernel: graph_encoder_forward.1
$region0: #{graph_encoder_forward.1}
  #allocation0 [shape = 'u32[]', space=smem, size = 0x4, offset = 0x4, fixed_abs, tag = 'smem constant byte address 0x4 - core index']
  #allocation1 [shape = 'u32[144,128]{1,0:T(1,128)}', space=vmem, size = 0x12000, scoped, tag = 'internal scratch']
  %s0 = inlined_call_operand.vmem [shape: f32[16,16], index: 0, kind: input, shape index: {}]
  %s1 = inlined_call_operand.vmem [shape: f32[16,48], index: 1, kind: input, shape index: {}]
  %s2 = inlined_call_operand.vmem [shape: f32[48,16], index: 2, kind: input, shape index: {}]
  %s3 = inlined_call_operand.vmem [shape: f32[48,16], index: 3, kind: input, shape index: {}]
  %s4 = inlined_call_operand.vmem [shape: f32[1,48], index: 4, kind: input, shape index: {}]
  %s5 = inlined_call_operand.vmem [shape: f32[2,16], index: 5, kind: input, shape index: {}]
  %s6 = inlined_call_operand.vmem [shape: f32[2,1], index: 6, kind: input, shape index: {}]
  %s7 = inlined_call_operand.vmem [shape: f32[5,40], index: 7, kind: input, shape index: {}]
  %s8 = inlined_call_operand.vmem [shape: f32[16,40], index: 8, kind: input, shape index: {}]
  %s9 = inlined_call_operand.vmem [shape: f32[5,40], index: 9, kind: input, shape index: {}]
  %s10 = inlined_call_operand.vmem [shape: f32[5,40], index: 10, kind: input, shape index: {}]
  %s11 = inlined_call_operand.vmem [shape: f32[5,1], index: 11, kind: input, shape index: {}]
  %s12 = inlined_call_operand.vmem [shape: f32[1,40], index: 12, kind: input, shape index: {}]
  %s13 = inlined_call_operand.vmem [shape: f32[1,40], index: 13, kind: input, shape index: {}]
  %s14 = inlined_call_operand.vmem [shape: f32[1,40], index: 14, kind: input, shape index: {}]
  %s15 = inlined_call_operand.vmem [shape: f32[40,40], index: 15, kind: input, shape index: {}]
  %s16 = inlined_call_operand.vmem [shape: f32[5,40], index: 16, kind: input, shape index: {}]
  %s17 = inlined_call_operand.vmem [shape: f32[5,40], index: 17, kind: input, shape index: {}]
  %s18 = inlined_call_operand.vmem [shape: f32[5,1], index: 18, kind: input, shape index: {}]
  %s19 = inlined_call_operand.vmem [shape: f32[1,40], index: 19, kind: input, shape index: {}]
  %s20 = inlined_call_operand.vmem [shape: f32[1,40], index: 20, kind: input, shape index: {}]
  %s21 = inlined_call_operand.vmem [shape: f32[1,40], index: 21, kind: input, shape index: {}]
  %s22 = inlined_call_operand.vmem [shape: f32[40,40], index: 22, kind: input, shape index: {}]
  %s23 = inlined_call_operand.vmem [shape: f32[1,40], index: 23, kind: input, shape index: {}]
  %s24 = inlined_call_operand.hbm [shape: f32[16,40], index: 24, kind: output, shape index: {0}]
  %s25 = inlined_call_operand.hbm [shape: f32[2,40], index: 25, kind: output, shape index: {1}]
  %s26 = inlined_call_operand.hbm [shape: f32[5,48], index: 26, kind: output, shape index: {2}]
  %s27 = inlined_call_operand.hbm [shape: f32[5,48], index: 27, kind: output, shape index: {3}]
  %28 = xla_tuple %s24, %s25, %s26, %s27
  %s29 = sld [smem:[#allocation0]]
  $region130: #{graph_encoder_forward.1} parent=0
    _
  %s31 = ssub.s32 1, %s29
  %s32 = scalar_select 0, %s31, %s29
  $region1: #{graph_encoder_forward.1} parent=0
    #allocation2 [shape = 'u8[8192]{0}', space=vmem, size = 0x2000, scoped, tag = 'output window, operand 0, single buffered']
    #allocation3 [shape = 's32[1]{0}', space=sflag, size = 0x4, scoped, tag = 'scoped memory for graph_encoder_forward.1']
    #allocation4 [shape = 'u8[1024]{0}', space=vmem, size = 0x400, scoped, tag = 'output window, operand 1, single buffered']
    #allocation5 [shape = 's32[1]{0}', space=sflag, size = 0x4, scoped, tag = 'scoped memory for graph_encoder_forward.1']
    #allocation6 [shape = 'u8[4096]{0}', space=vmem, size = 0x1000, scoped, tag = 'output window, operand 2, single buffered']
    #allocation7 [shape = 'u8[4096]{0}', space=vmem, size = 0x1000, scoped, tag = 'output window, operand 3, single buffered']
    #allocation8 [shape = 's32[1]{0}', space=sflag, size = 0x4, scoped, tag = 'scoped memory for graph_encoder_forward.1']
    %33 = vsyncpa [#allocation3], 0
    %34 = vsyncpa [#allocation5], 0
    %35 = vsyncpa [#allocation8], 0
    // Predicated region
    $region2: #{graph_encoder_forward.1} parent=1 // pred_check
      _
    $region3: #{graph_encoder_forward.1} parent=1 // pred_check_branch
      %37 = sbr.rel (0) target = $region5
    $region4: #{graph_encoder_forward.1} parent=1 // pred_region
      _
    $region5: #{graph_encoder_forward.1} parent=1 // pred_fallthru
      _
    // Predicated region
    $region6: #{graph_encoder_forward.1} parent=1 // pred_check
      _
    $region7: #{graph_encoder_forward.1} parent=1 // pred_check_branch
      %39 = sbr.rel (0) target = $region9
    $region8: #{graph_encoder_forward.1} parent=1 // pred_region
      _
    $region9: #{graph_encoder_forward.1} parent=1 // pred_fallthru
      _
    // Predicated region
    $region10: #{graph_encoder_forward.1} parent=1 // pred_check
      _
    $region11: #{graph_encoder_forward.1} parent=1 // pred_check_branch
      %41 = sbr.rel (0) target = $region13
    $region12: #{graph_encoder_forward.1} parent=1 // pred_region
      _
    $region13: #{graph_encoder_forward.1} parent=1 // pred_fallthru
      _
    // Predicated region
    $region14: #{graph_encoder_forward.1} parent=1 // pred_check
      _
    $region15: #{graph_encoder_forward.1} parent=1 // pred_check_branch
      %43 = sbr.rel (0) target = $region17
    $region16: #{graph_encoder_forward.1} parent=1 // pred_region
      _
    $region17: #{graph_encoder_forward.1} parent=1 // pred_fallthru
      _
    // Predicated region
    $region18: #{graph_encoder_forward.1} parent=1 // pred_check
      _
    $region19: #{graph_encoder_forward.1} parent=1 // pred_check_branch
      %45 = sbr.rel (0) target = $region21
    $region20: #{graph_encoder_forward.1} parent=1 // pred_region
      _
    $region21: #{graph_encoder_forward.1} parent=1 // pred_fallthru
      _
    // Predicated region
    $region22: #{graph_encoder_forward.1} parent=1 // pred_check
      _
    $region23: #{graph_encoder_forward.1} parent=1 // pred_check_branch
      %47 = sbr.rel (0) target = $region25
    $region24: #{graph_encoder_forward.1} parent=1 // pred_region
      _
    $region25: #{graph_encoder_forward.1} parent=1 // pred_fallthru
      _
    // Predicated region
    $region26: #{graph_encoder_forward.1} parent=1 // pred_check
      _
    $region27: #{graph_encoder_forward.1} parent=1 // pred_check_branch
      %49 = sbr.rel (0) target = $region29
    $region28: #{graph_encoder_forward.1} parent=1 // pred_region
      _
    $region29: #{graph_encoder_forward.1} parent=1 // pred_fallthru
      _
    // Predicated region
    $region30: #{graph_encoder_forward.1} parent=1 // pred_check
      _
    $region31: #{graph_encoder_forward.1} parent=1 // pred_check_branch
      %51 = sbr.rel (0) target = $region33
    $region32: #{graph_encoder_forward.1} parent=1 // pred_region
      _
    $region33: #{graph_encoder_forward.1} parent=1 // pred_fallthru
      _
    // Predicated region
    $region34: #{graph_encoder_forward.1} parent=1 // pred_check
      _
    $region35: #{graph_encoder_forward.1} parent=1 // pred_check_branch
      %53 = sbr.rel (0) target = $region37
    $region36: #{graph_encoder_forward.1} parent=1 // pred_region
      _
    $region37: #{graph_encoder_forward.1} parent=1 // pred_fallthru
      _
    // Predicated region
    $region38: #{graph_encoder_forward.1} parent=1 // pred_check
      _
    $region39: #{graph_encoder_forward.1} parent=1 // pred_check_branch
      %55 = sbr.rel (0) target = $region41
    $region40: #{graph_encoder_forward.1} parent=1 // pred_region
      _
    $region41: #{graph_encoder_forward.1} parent=1 // pred_fallthru
      _
    // Predicated region
    $region42: #{graph_encoder_forward.1} parent=1 // pred_check
      _
    $region43: #{graph_encoder_forward.1} parent=1 // pred_check_branch
      %57 = sbr.rel (0) target = $region45
    $region44: #{graph_encoder_forward.1} parent=1 // pred_region
      _
    $region45: #{graph_encoder_forward.1} parent=1 // pred_fallthru
      _
    // Predicated region
    $region46: #{graph_encoder_forward.1} parent=1 // pred_check
      _
    $region47: #{graph_encoder_forward.1} parent=1 // pred_check_branch
      %59 = sbr.rel (0) target = $region49
    $region48: #{graph_encoder_forward.1} parent=1 // pred_region
      _
    $region49: #{graph_encoder_forward.1} parent=1 // pred_fallthru
      _
    // Predicated region
    $region50: #{graph_encoder_forward.1} parent=1 // pred_check
      _
    $region51: #{graph_encoder_forward.1} parent=1 // pred_check_branch
      %61 = sbr.rel (0) target = $region53
    $region52: #{graph_encoder_forward.1} parent=1 // pred_region
      _
    $region53: #{graph_encoder_forward.1} parent=1 // pred_fallthru
      _
    // Predicated region
    $region54: #{graph_encoder_forward.1} parent=1 // pred_check
      _
    $region55: #{graph_encoder_forward.1} parent=1 // pred_check_branch
      %63 = sbr.rel (0) target = $region57
    $region56: #{graph_encoder_forward.1} parent=1 // pred_region
      _
    $region57: #{graph_encoder_forward.1} parent=1 // pred_fallthru
      _
    // Predicated region
    $region58: #{graph_encoder_forward.1} parent=1 // pred_check
      _
    $region59: #{graph_encoder_forward.1} parent=1 // pred_check_branch
      %65 = sbr.rel (0) target = $region61
    $region60: #{graph_encoder_forward.1} parent=1 // pred_region
      _
    $region61: #{graph_encoder_forward.1} parent=1 // pred_fallthru
      _
    // Predicated region
    $region62: #{graph_encoder_forward.1} parent=1 // pred_check
      _
    $region63: #{graph_encoder_forward.1} parent=1 // pred_check_branch
      %67 = sbr.rel (0) target = $region65
    $region64: #{graph_encoder_forward.1} parent=1 // pred_region
      _
    $region65: #{graph_encoder_forward.1} parent=1 // pred_fallthru
      _
    // Predicated region
    $region66: #{graph_encoder_forward.1} parent=1 // pred_check
      _
    $region67: #{graph_encoder_forward.1} parent=1 // pred_check_branch
      %69 = sbr.rel (0) target = $region69
    $region68: #{graph_encoder_forward.1} parent=1 // pred_region
      _
    $region69: #{graph_encoder_forward.1} parent=1 // pred_fallthru
      _
    // Predicated region
    $region70: #{graph_encoder_forward.1} parent=1 // pred_check
      _
    $region71: #{graph_encoder_forward.1} parent=1 // pred_check_branch
      %71 = sbr.rel (0) target = $region73
    $region72: #{graph_encoder_forward.1} parent=1 // pred_region
      _
    $region73: #{graph_encoder_forward.1} parent=1 // pred_fallthru
      _
    // Predicated region
    $region74: #{graph_encoder_forward.1} parent=1 // pred_check
      _
    $region75: #{graph_encoder_forward.1} parent=1 // pred_check_branch
      %73 = sbr.rel (0) target = $region77
    $region76: #{graph_encoder_forward.1} parent=1 // pred_region
      _
    $region77: #{graph_encoder_forward.1} parent=1 // pred_fallthru
      _
    // Predicated region
    $region78: #{graph_encoder_forward.1} parent=1 // pred_check
      _
    $region79: #{graph_encoder_forward.1} parent=1 // pred_check_branch
      %75 = sbr.rel (0) target = $region81
    $region80: #{graph_encoder_forward.1} parent=1 // pred_region
      _
    $region81: #{graph_encoder_forward.1} parent=1 // pred_fallthru
      _
    // Predicated region
    $region82: #{graph_encoder_forward.1} parent=1 // pred_check
      _
    $region83: #{graph_encoder_forward.1} parent=1 // pred_check_branch
      %77 = sbr.rel (0) target = $region85
    $region84: #{graph_encoder_forward.1} parent=1 // pred_region
      _
    $region85: #{graph_encoder_forward.1} parent=1 // pred_fallthru
      _
    // Predicated region
    $region86: #{graph_encoder_forward.1} parent=1 // pred_check
      _
    $region87: #{graph_encoder_forward.1} parent=1 // pred_check_branch
      %79 = sbr.rel (0) target = $region89
    $region88: #{graph_encoder_forward.1} parent=1 // pred_region
      _
    $region89: #{graph_encoder_forward.1} parent=1 // pred_fallthru
      _
    // Predicated region
    $region90: #{graph_encoder_forward.1} parent=1 // pred_check
      _
    $region91: #{graph_encoder_forward.1} parent=1 // pred_check_branch
      %81 = sbr.rel (0) target = $region93
    $region92: #{graph_encoder_forward.1} parent=1 // pred_region
      _
    $region93: #{graph_encoder_forward.1} parent=1 // pred_fallthru
      _
    // Predicated region
    $region94: #{graph_encoder_forward.1} parent=1 // pred_check
      _
    $region95: #{graph_encoder_forward.1} parent=1 // pred_check_branch
      %83 = sbr.rel (0) target = $region97
    $region96: #{graph_encoder_forward.1} parent=1 // pred_region
      _
    $region97: #{graph_encoder_forward.1} parent=1 // pred_fallthru
      _
    %v84 = vld [vmem:[%s0] sm:$0xff]
    %v85 = vld [vmem:[%s0 + $0x8] sm:$0xff]
    %v86 = vld [vmem:[%s1] sm:$0xff]
    %v87 = vld [vmem:[%s1 + $0x8] sm:$0xff]
    %v88 = vld [vmem:[%s2] sm:$0xff]
    %v89 = vld [vmem:[%s2 + $0x8] sm:$0xff]
    %v90 = vld [vmem:[%s2 + $0x10] sm:$0xff]
    %v91 = vld [vmem:[%s2 + $0x18] sm:$0xff]
    %v92 = vld [vmem:[%s2 + $0x20] sm:$0xff]
    %v93 = vld [vmem:[%s2 + $0x28] sm:$0xff]
    %v94 = vld [vmem:[%s3] sm:$0xff]
    %v95 = vld [vmem:[%s3 + $0x8] sm:$0xff]
    %v96 = vld [vmem:[%s3 + $0x10] sm:$0xff]
    %v97 = vld [vmem:[%s3 + $0x18] sm:$0xff]
    %v98 = vld [vmem:[%s3 + $0x20] sm:$0xff]
    %v99 = vld [vmem:[%s3 + $0x28] sm:$0xff]
    %v100 = vld [vmem:[%s4] sm:$0x1]
    %v101 = vld [vmem:[%s7] sm:$0x1f]
    %vm102 = vcmask 392192
    %v104 = vsel %vm102, %v86, 0
    %v107 = vsel %vm102, %v87, 0
    %109 = vmatprep.subr.mxu0 0.0
    %110 = vmatpush1.msra.mxu0 0.0
    %111 = vmatprep.subr.mxu0 0.0
    %112 = vmatpush1.msra.mxu0 0.0
    %113 = vmatprep.subr.mxu0 0.0
    %114 = vmatpush1.msra.mxu0 0.0
    %115 = vmatprep.subr.mxu0 0.0
    %116 = vmatpush1.msra.mxu0 0.0
    %117 = vmatprep.subr.mxu0 0.0
    %118 = vmatpush1.msra.mxu0 0.0
    %119 = vmatprep.subr.mxu0 0.0
    %120 = vmatpush1.msra.mxu0 0.0
    %121 = vmatprep.subr.mxu0 0.0
    %122 = vmatpush1.msra.mxu0 0.0
    %123 = vmatprep.subr.mxu0 0.0
    %124 = vmatpush1.msra.mxu0 0.0
    %125 = vmatprep.subr.mxu0 0.0
    %126 = vmatpush1.msra.mxu0 0.0
    %127 = vmatprep.subr.mxu0 0.0
    %128 = vmatpush1.msra.mxu0 0.0
    %129 = vmatprep.subr.mxu0 0.0
    %130 = vmatpush1.msra.mxu0 %v93
    %131 = vmatprep.subr.mxu0 0.0
    %132 = vmatpush1.msra.mxu0 %v92
    %133 = vmatprep.subr.mxu0 0.0
    %134 = vmatpush1.msra.mxu0 %v91
    %135 = vmatprep.subr.mxu0 0.0
    %136 = vmatpush1.msra.mxu0 %v90
    %137 = vmatprep.subr.mxu0 0.0
    %138 = vmatpush1.msra.mxu0 %v89
    %139 = vmatprep.subr.mxu0 0.0
    %140 = vmatpush1.msra.mxu0 %v88
    %141 = vmatprep.subr.mxu0 0.0
    %142 = vmatpush2.msra.mxu0 0.0
    %143 = vmatprep.subr.mxu0 0.0
    %144 = vmatpush2.msra.mxu0 0.0
    %145 = vmatprep.subr.mxu0 0.0
    %146 = vmatpush2.msra.mxu0 0.0
    %147 = vmatprep.subr.mxu0 0.0
    %148 = vmatpush2.msra.mxu0 0.0
    %149 = vmatprep.subr.mxu0 0.0
    %150 = vmatpush2.msra.mxu0 0.0
    %151 = vmatprep.subr.mxu0 0.0
    %152 = vmatpush2.msra.mxu0 0.0
    %153 = vmatprep.subr.mxu0 0.0
    %154 = vmatpush2.msra.mxu0 0.0
    %155 = vmatprep.subr.mxu0 0.0
    %156 = vmatpush2.msra.mxu0 0.0
    %157 = vmatprep.subr.mxu0 0.0
    %158 = vmatpush2.msra.mxu0 0.0
    %159 = vmatprep.subr.mxu0 0.0
    %160 = vmatpush2.msra.mxu0 0.0
    %161 = vmatprep.subr.mxu0 0.0
    %162 = vmatpush2.msra.mxu0 0.0
    %163 = vmatprep.subr.mxu0 0.0
    %164 = vmatpush2.msra.mxu0 0.0
    %165 = vmatprep.subr.mxu0 0.0
    %166 = vmatpush2.msra.mxu0 0.0
    %167 = vmatprep.subr.mxu0 0.0
    %168 = vmatpush2.msra.mxu0 0.0
    %169 = vmatprep.subr.mxu0 0.0
    %170 = vmatpush2.msra.mxu0 0.0
    %171 = vmatprep.subr.mxu0 0.0
    %172 = vmatpush2.msra.mxu0 0.0
    %173 = vmatprep.mubr.f32.mxu0 0.0
    %174 = vmatmul.mubr.f32.gmra.mxu0 %v104
    %v175 = vpop.f32.mrf.mxu0
    %v176 = vadd.f32 0.0, %v175
    %v177 = vpop.f32.mrf.mxu0
    %178 = vmatprep.mubr.f32.mxu0 0.0
    %179 = vmatmul.mubr.f32.gmra.mxu0 %v107
    %v180 = vpop.f32.mrf.mxu0
    %v181 = vadd.f32 0.0, %v180
    %v182 = vpop.f32.mrf.mxu0
    %183 = vdwg.mxu0
    %v185 = vlaneseq
    %v186 = vshrl.u32 %v185, 7
    %v187 = vsub.s32 0, %v186
    %v188 = vrot.slane %v100, %v187
    %v190 = vmul.f32 %v86, %v188
    %v191 = vmul.f32 %v87, %v188
    %v193 = vsel %vm102, %v190, 0
    %v196 = vsel %vm102, %v191, 0
    %198 = vmatprep.subr.mxu0 0.0
    %199 = vmatpush1.msra.mxu0 0.0
    %200 = vmatprep.subr.mxu0 0.0
    %201 = vmatpush1.msra.mxu0 0.0
    %202 = vmatprep.subr.mxu0 0.0
    %203 = vmatpush1.msra.mxu0 0.0
    %204 = vmatprep.subr.mxu0 0.0
    %205 = vmatpush1.msra.mxu0 0.0
    %206 = vmatprep.subr.mxu0 0.0
    %207 = vmatpush1.msra.mxu0 0.0
    %208 = vmatprep.subr.mxu0 0.0
    %209 = vmatpush1.msra.mxu0 0.0
    %210 = vmatprep.subr.mxu0 0.0
    %211 = vmatpush1.msra.mxu0 0.0
    %212 = vmatprep.subr.mxu0 0.0
    %213 = vmatpush1.msra.mxu0 0.0
    %214 = vmatprep.subr.mxu0 0.0
    %215 = vmatpush1.msra.mxu0 0.0
    %216 = vmatprep.subr.mxu0 0.0
    %217 = vmatpush1.msra.mxu0 0.0
    %218 = vmatprep.subr.mxu0 0.0
    %219 = vmatpush1.msra.mxu0 %v93
    %220 = vmatprep.subr.mxu0 0.0
    %221 = vmatpush1.msra.mxu0 %v92
    %222 = vmatprep.subr.mxu0 0.0
    %223 = vmatpush1.msra.mxu0 %v91
    %224 = vmatprep.subr.mxu0 0.0
    %225 = vmatpush1.msra.mxu0 %v90
    %226 = vmatprep.subr.mxu0 0.0
    %227 = vmatpush1.msra.mxu0 %v89
    %228 = vmatprep.subr.mxu0 0.0
    %229 = vmatpush1.msra.mxu0 %v88
    %230 = vmatprep.subr.mxu0 0.0
    %231 = vmatpush2.msra.mxu0 0.0
    %232 = vmatprep.subr.mxu0 0.0
    %233 = vmatpush2.msra.mxu0 0.0
    %234 = vmatprep.subr.mxu0 0.0
    %235 = vmatpush2.msra.mxu0 0.0
    %236 = vmatprep.subr.mxu0 0.0
    %237 = vmatpush2.msra.mxu0 0.0
    %238 = vmatprep.subr.mxu0 0.0
    %239 = vmatpush2.msra.mxu0 0.0
    %240 = vmatprep.subr.mxu0 0.0
    %241 = vmatpush2.msra.mxu0 0.0
    %242 = vmatprep.subr.mxu0 0.0
    %243 = vmatpush2.msra.mxu0 0.0
    %244 = vmatprep.subr.mxu0 0.0
    %245 = vmatpush2.msra.mxu0 0.0
    %246 = vmatprep.subr.mxu0 0.0
    %247 = vmatpush2.msra.mxu0 0.0
    %248 = vmatprep.subr.mxu0 0.0
    %249 = vmatpush2.msra.mxu0 0.0
    %250 = vmatprep.subr.mxu0 0.0
    %251 = vmatpush2.msra.mxu0 0.0
    %252 = vmatprep.subr.mxu0 0.0
    %253 = vmatpush2.msra.mxu0 0.0
    %254 = vmatprep.subr.mxu0 0.0
    %255 = vmatpush2.msra.mxu0 0.0
    %256 = vmatprep.subr.mxu0 0.0
    %257 = vmatpush2.msra.mxu0 0.0
    %258 = vmatprep.subr.mxu0 0.0
    %259 = vmatpush2.msra.mxu0 0.0
    %260 = vmatprep.subr.mxu0 0.0
    %261 = vmatpush2.msra.mxu0 0.0
    %262 = vmatprep.mubr.f32.mxu0 0.0
    %263 = vmatmul.mubr.f32.gmra.mxu0 %v193
    %v264 = vpop.f32.mrf.mxu0
    %v265 = vadd.f32 0.0, %v264
    %v266 = vpop.f32.mrf.mxu0
    %267 = vmatprep.mubr.f32.mxu0 0.0
    %268 = vmatmul.mubr.f32.gmra.mxu0 %v196
    %v269 = vpop.f32.mrf.mxu0
    %v270 = vadd.f32 0.0, %v269
    %v271 = vpop.f32.mrf.mxu0
    %272 = vdwg.mxu0
    %vm273 = vcmp.gt.f32.partialorder %v176, 0.0
    %vm274 = vcmp.gt.f32.partialorder %v181, 0.0
    %v275 = vld [vmem:[%s8] sm:$0xff]
    %v276 = vld [vmem:[%s8 + $0x8] sm:$0xff]
    %v277 = vld [vmem:[%s9] sm:$0x1f]
    %v278 = vld [vmem:[%s10] sm:$0x1f]
    %v279 = vld [vmem:[%s11] sm:$0x1f]
    %v280 = vld [vmem:[%s12] sm:$0x1]
    %v281 = vld [vmem:[%s13] sm:$0x1]
    %v282 = vld [vmem:[%s14] sm:$0x1]
    %vm283 = vcmask 130048
    %v285 = vsel %vm283, %v84, 0
    %v288 = vsel %vm283, %v85, 0
    %290 = vmatprep.subr.mxu0 0.0
    %291 = vmatpush1.msra.mxu0 0.0
    %292 = vmatprep.subr.mxu0 0.0
    %293 = vmatpush1.msra.mxu0 0.0
    %294 = vmatprep.subr.mxu0 0.0
    %295 = vmatpush1.msra.mxu0 0.0
    %296 = vmatprep.subr.mxu0 0.0
    %297 = vmatpush1.msra.mxu0 0.0
    %298 = vmatprep.subr.mxu0 0.0
    %299 = vmatpush1.msra.mxu0 0.0
    %300 = vmatprep.subr.mxu0 0.0
    %301 = vmatpush1.msra.mxu0 0.0
    %302 = vmatprep.subr.mxu0 0.0
    %303 = vmatpush1.msra.mxu0 0.0
    %304 = vmatprep.subr.mxu0 0.0
    %305 = vmatpush1.msra.mxu0 0.0
    %306 = vmatprep.subr.mxu0 0.0
    %307 = vmatpush1.msra.mxu0 0.0
    %308 = vmatprep.subr.mxu0 0.0
    %309 = vmatpush1.msra.mxu0 0.0
    %310 = vmatprep.subr.mxu0 0.0
    %311 = vmatpush1.msra.mxu0 0.0
    %312 = vmatprep.subr.mxu0 0.0
    %313 = vmatpush1.msra.mxu0 0.0
    %314 = vmatprep.subr.mxu0 0.0
    %315 = vmatpush1.msra.mxu0 0.0
    %316 = vmatprep.subr.mxu0 0.0
    %317 = vmatpush1.msra.mxu0 0.0
    %318 = vmatprep.subr.mxu0 0.0
    %319 = vmatpush1.msra.mxu0 %v276
    %320 = vmatprep.subr.mxu0 0.0
    %321 = vmatpush1.msra.mxu0 %v275
    %322 = vmatprep.subr.mxu0 0.0
    %323 = vmatpush2.msra.mxu0 0.0
    %324 = vmatprep.subr.mxu0 0.0
    %325 = vmatpush2.msra.mxu0 0.0
    %326 = vmatprep.subr.mxu0 0.0
    %327 = vmatpush2.msra.mxu0 0.0
    %328 = vmatprep.subr.mxu0 0.0
    %329 = vmatpush2.msra.mxu0 0.0
    %330 = vmatprep.subr.mxu0 0.0
    %331 = vmatpush2.msra.mxu0 0.0
    %332 = vmatprep.subr.mxu0 0.0
    %333 = vmatpush2.msra.mxu0 0.0
    %334 = vmatprep.subr.mxu0 0.0
    %335 = vmatpush2.msra.mxu0 0.0
    %336 = vmatprep.subr.mxu0 0.0
    %337 = vmatpush2.msra.mxu0 0.0
    %338 = vmatprep.subr.mxu0 0.0
    %339 = vmatpush2.msra.mxu0 0.0
    %340 = vmatprep.subr.mxu0 0.0
    %341 = vmatpush2.msra.mxu0 0.0
    %342 = vmatprep.subr.mxu0 0.0
    %343 = vmatpush2.msra.mxu0 0.0
    %344 = vmatprep.subr.mxu0 0.0
    %345 = vmatpush2.msra.mxu0 0.0
    %346 = vmatprep.subr.mxu0 0.0
    %347 = vmatpush2.msra.mxu0 0.0
    %348 = vmatprep.subr.mxu0 0.0
    %349 = vmatpush2.msra.mxu0 0.0
    %350 = vmatprep.subr.mxu0 0.0
    %351 = vmatpush2.msra.mxu0 0.0
    %352 = vmatprep.subr.mxu0 0.0
    %353 = vmatpush2.msra.mxu0 0.0
    %354 = vmatprep.mubr.f32.mxu0 0.0
    %355 = vmatmul.mubr.f32.gmra.mxu0 %v285
    %v356 = vpop.f32.mrf.mxu0
    %v357 = vadd.f32 0.0, %v356
    %v358 = vpop.f32.mrf.mxu0
    %359 = vmatprep.mubr.f32.mxu0 0.0
    %360 = vmatmul.mubr.f32.gmra.mxu0 %v288
    %v361 = vpop.f32.mrf.mxu0
    %v362 = vadd.f32 0.0, %v361
    %v363 = vpop.f32.mrf.mxu0
    %364 = vdwg.mxu0
    %vm365 = vcmask 326656
    %v367 = vsel %vm365, %v277, 0
    %v370 = vsel %vm365, %v357, 0
    %v373 = vsel %vm365, %v362, 0
    %375 = vmatprep.subr.mxu0 0.0
    %376 = vmatpush1.xpose.msra.mxu0 0.0
    %377 = vmatprep.subr.mxu0 0.0
    %378 = vmatpush1.xpose.msra.mxu0 0.0
    %379 = vmatprep.subr.mxu0 0.0
    %380 = vmatpush1.xpose.msra.mxu0 0.0
    %381 = vmatprep.subr.mxu0 0.0
    %382 = vmatpush1.xpose.msra.mxu0 0.0
    %383 = vmatprep.subr.mxu0 0.0
    %384 = vmatpush1.xpose.msra.mxu0 0.0
    %385 = vmatprep.subr.mxu0 0.0
    %386 = vmatpush1.xpose.msra.mxu0 0.0
    %387 = vmatprep.subr.mxu0 0.0
    %388 = vmatpush1.xpose.msra.mxu0 0.0
    %389 = vmatprep.subr.mxu0 0.0
    %390 = vmatpush1.xpose.msra.mxu0 0.0
    %391 = vmatprep.subr.mxu0 0.0
    %392 = vmatpush1.xpose.msra.mxu0 0.0
    %393 = vmatprep.subr.mxu0 0.0
    %394 = vmatpush1.xpose.msra.mxu0 0.0
    %395 = vmatprep.subr.mxu0 0.0
    %396 = vmatpush1.xpose.msra.mxu0 0.0
    %397 = vmatprep.subr.mxu0 0.0
    %398 = vmatpush1.xpose.msra.mxu0 0.0
    %399 = vmatprep.subr.mxu0 0.0
    %400 = vmatpush1.xpose.msra.mxu0 0.0
    %401 = vmatprep.subr.mxu0 0.0
    %402 = vmatpush1.xpose.msra.mxu0 0.0
    %403 = vmatprep.subr.mxu0 0.0
    %404 = vmatpush1.xpose.msra.mxu0 %v373
    %405 = vmatprep.subr.mxu0 0.0
    %406 = vmatpush1.xpose.msra.mxu0 %v370
    %407 = vmatprep.subr.mxu0 0.0
    %408 = vmatpush2.xpose.msra.mxu0 0.0
    %409 = vmatprep.subr.mxu0 0.0
    %410 = vmatpush2.xpose.msra.mxu0 0.0
    %411 = vmatprep.subr.mxu0 0.0
    %412 = vmatpush2.xpose.msra.mxu0 0.0
    %413 = vmatprep.subr.mxu0 0.0
    %414 = vmatpush2.xpose.msra.mxu0 0.0
    %415 = vmatprep.subr.mxu0 0.0
    %416 = vmatpush2.xpose.msra.mxu0 0.0
    %417 = vmatprep.subr.mxu0 0.0
    %418 = vmatpush2.xpose.msra.mxu0 0.0
    %419 = vmatprep.subr.mxu0 0.0
    %420 = vmatpush2.xpose.msra.mxu0 0.0
    %421 = vmatprep.subr.mxu0 0.0
    %422 = vmatpush2.xpose.msra.mxu0 0.0
    %423 = vmatprep.subr.mxu0 0.0
    %424 = vmatpush2.xpose.msra.mxu0 0.0
    %425 = vmatprep.subr.mxu0 0.0
    %426 = vmatpush2.xpose.msra.mxu0 0.0
    %427 = vmatprep.subr.mxu0 0.0
    %428 = vmatpush2.xpose.msra.mxu0 0.0
    %429 = vmatprep.subr.mxu0 0.0
    %430 = vmatpush2.xpose.msra.mxu0 0.0
    %431 = vmatprep.subr.mxu0 0.0
    %432 = vmatpush2.xpose.msra.mxu0 0.0
    %433 = vmatprep.subr.mxu0 0.0
    %434 = vmatpush2.xpose.msra.mxu0 0.0
    %435 = vmatprep.subr.mxu0 0.0
    %436 = vmatpush2.xpose.msra.mxu0 0.0
    %437 = vmatprep.subr.mxu0 0.0
    %438 = vmatpush2.xpose.msra.mxu0 0.0
    %439 = vmatprep.mubr.f32.mxu0 0.0
    %440 = vmatmul.mubr.f32.gmra.mxu0 %v367
    %v441 = vpop.f32.mrf.mxu0
    %v442 = vadd.f32 0.0, %v441
    %v443 = vpop.f32.mrf.mxu0
    %444 = vdwg.mxu0
    %v446 = vsel %vm365, %v278, 0
    %448 = vmatprep.subr.mxu0 0.0
    %449 = vmatpush1.xpose.msra.mxu0 0.0
    %450 = vmatprep.subr.mxu0 0.0
    %451 = vmatpush1.xpose.msra.mxu0 0.0
    %452 = vmatprep.subr.mxu0 0.0
    %453 = vmatpush1.xpose.msra.mxu0 0.0
    %454 = vmatprep.subr.mxu0 0.0
    %455 = vmatpush1.xpose.msra.mxu0 0.0
    %456 = vmatprep.subr.mxu0 0.0
    %457 = vmatpush1.xpose.msra.mxu0 0.0
    %458 = vmatprep.subr.mxu0 0.0
    %459 = vmatpush1.xpose.msra.mxu0 0.0
    %460 = vmatprep.subr.mxu0 0.0
    %461 = vmatpush1.xpose.msra.mxu0 0.0
    %462 = vmatprep.subr.mxu0 0.0
    %463 = vmatpush1.xpose.msra.mxu0 0.0
    %464 = vmatprep.subr.mxu0 0.0
    %465 = vmatpush1.xpose.msra.mxu0 0.0
    %466 = vmatprep.subr.mxu0 0.0
    %467 = vmatpush1.xpose.msra.mxu0 0.0
    %468 = vmatprep.subr.mxu0 0.0
    %469 = vmatpush1.xpose.msra.mxu0 0.0
    %470 = vmatprep.subr.mxu0 0.0
    %471 = vmatpush1.xpose.msra.mxu0 0.0
    %472 = vmatprep.subr.mxu0 0.0
    %473 = vmatpush1.xpose.msra.mxu0 0.0
    %474 = vmatprep.subr.mxu0 0.0
    %475 = vmatpush1.xpose.msra.mxu0 0.0
    %476 = vmatprep.subr.mxu0 0.0
    %477 = vmatpush1.xpose.msra.mxu0 %v373
    %478 = vmatprep.subr.mxu0 0.0
    %479 = vmatpush1.xpose.msra.mxu0 %v370
    %480 = vmatprep.subr.mxu0 0.0
    %481 = vmatpush2.xpose.msra.mxu0 0.0
    %482 = vmatprep.subr.mxu0 0.0
    %483 = vmatpush2.xpose.msra.mxu0 0.0
    %484 = vmatprep.subr.mxu0 0.0
    %485 = vmatpush2.xpose.msra.mxu0 0.0
    %486 = vmatprep.subr.mxu0 0.0
    %487 = vmatpush2.xpose.msra.mxu0 0.0
    %488 = vmatprep.subr.mxu0 0.0
    %489 = vmatpush2.xpose.msra.mxu0 0.0
    %490 = vmatprep.subr.mxu0 0.0
    %491 = vmatpush2.xpose.msra.mxu0 0.0
    %492 = vmatprep.subr.mxu0 0.0
    %493 = vmatpush2.xpose.msra.mxu0 0.0
    %494 = vmatprep.subr.mxu0 0.0
    %495 = vmatpush2.xpose.msra.mxu0 0.0
    %496 = vmatprep.subr.mxu0 0.0
    %497 = vmatpush2.xpose.msra.mxu0 0.0
    %498 = vmatprep.subr.mxu0 0.0
    %499 = vmatpush2.xpose.msra.mxu0 0.0
    %500 = vmatprep.subr.mxu0 0.0
    %501 = vmatpush2.xpose.msra.mxu0 0.0
    %502 = vmatprep.subr.mxu0 0.0
    %503 = vmatpush2.xpose.msra.mxu0 0.0
    %504 = vmatprep.subr.mxu0 0.0
    %505 = vmatpush2.xpose.msra.mxu0 0.0
    %506 = vmatprep.subr.mxu0 0.0
    %507 = vmatpush2.xpose.msra.mxu0 0.0
    %508 = vmatprep.subr.mxu0 0.0
    %509 = vmatpush2.xpose.msra.mxu0 0.0
    %510 = vmatprep.subr.mxu0 0.0
    %511 = vmatpush2.xpose.msra.mxu0 0.0
    %512 = vmatprep.mubr.f32.mxu0 0.0
    %513 = vmatmul.mubr.f32.gmra.mxu0 %v446
    %v514 = vpop.f32.mrf.mxu0
    %v515 = vadd.f32 0.0, %v514
    %v516 = vpop.f32.mrf.mxu0
    %517 = vdwg.mxu0
    %v518 = vlaneseq
    %v519 = vshrl.u32 %v518, 7
    %v520 = vsub.s32 0, %v519
    %v521 = vrot.slane %v515, %v520
    %523 = vbcast.lane.b32.xlu0 %v521, 256
    %v524 = vpop.permute.xlu0 %523
    %s526 = sor.u32 256, 8
    %527 = vbcast.lane.b32.xlu0 %v521, %s526
    %v528 = vpop.permute.xlu0 %527
    %v529 = vlaneseq
    %v530 = vshrl.u32 %v529, 7
    %v531 = vsub.s32 1, %v530
    %v532 = vrot.slane %v515, %v531
    %534 = vbcast.lane.b32.xlu0 %v532, 256
    %v535 = vpop.permute.xlu0 %534
    %s537 = sor.u32 256, 8
    %538 = vbcast.lane.b32.xlu0 %v532, %s537
    %v539 = vpop.permute.xlu0 %538
    %v540 = vlaneseq
    %v541 = vshrl.u32 %v540, 7
    %v542 = vsub.s32 2, %v541
    %v543 = vrot.slane %v515, %v542
    %545 = vbcast.lane.b32.xlu0 %v543, 256
    %v546 = vpop.permute.xlu0 %545
    %s548 = sor.u32 256, 8
    %549 = vbcast.lane.b32.xlu0 %v543, %s548
    %v550 = vpop.permute.xlu0 %549
    %v551 = vlaneseq
    %v552 = vshrl.u32 %v551, 7
    %v553 = vsub.s32 3, %v552
    %v554 = vrot.slane %v515, %v553
    %556 = vbcast.lane.b32.xlu0 %v554, 256
    %v557 = vpop.permute.xlu0 %556
    %s559 = sor.u32 256, 8
    %560 = vbcast.lane.b32.xlu0 %v554, %s559
    %v561 = vpop.permute.xlu0 %560
    %v562 = vlaneseq
    %v563 = vshrl.u32 %v562, 7
    %v564 = vsub.s32 4, %v563
    %v565 = vrot.slane %v515, %v564
    %567 = vbcast.lane.b32.xlu0 %v565, 256
    %v568 = vpop.permute.xlu0 %567
    %s570 = sor.u32 256, 8
    %571 = vbcast.lane.b32.xlu0 %v565, %s570
    %v572 = vpop.permute.xlu0 %571
    %v574 = vcombine.high %v442, %v442
    %v576 = vunpack.c.l.s4 1966171168
    %v577 = vunpack.c.0.s8 %v576
    %v578 = vlaneseq
    %v579 = vshrl.u32 %v578, 7
    %v580 = vsub.s32 %v577, %v579
    %v581 = vrot.slane %v442, %v580
    %v583 = vunpack.c.l.s4 1966171168
    %v584 = vunpack.c.0.s8 %v583
    %v585 = vlaneseq
    %v586 = vshrl.u32 %v585, 7
    %v587 = vsub.s32 %v584, %v586
    %v588 = vrot.slane %v574, %v587
    %v589 = vcombine.high %v581, %v581
    %v591 = vunpack.c.l.s4 1966171168
    %v592 = vunpack.c.0.s8 %v591
    %v593 = vlaneseq
    %v594 = vshrl.u32 %v593, 7
    %v595 = vsub.s32 %v592, %v594
    %v596 = vrot.slane %v581, %v595
    %v598 = vunpack.c.l.s4 1966171168
    %v599 = vunpack.c.0.s8 %v598
    %v600 = vlaneseq
    %v601 = vshrl.u32 %v600, 7
    %v602 = vsub.s32 %v599, %v601
    %v603 = vrot.slane %v588, %v602
    %v605 = vunpack.c.l.s4 1966171168
    %v606 = vunpack.c.0.s8 %v605
    %v607 = vlaneseq
    %v608 = vshrl.u32 %v607, 7
    %v609 = vsub.s32 %v606, %v608
    %v610 = vrot.slane %v589, %v609
    %v611 = vcombine.high %v596, %v596
    %v612 = vcombine.high %v610, %v610
    %v613 = vlaneseq
    %v614 = vshrl.u32 %v613, 7
    %v615 = vsub.s32 0, %v614
    %v616 = vrot.slane %v596, %v615
    %v617 = vlaneseq
    %v618 = vshrl.u32 %v617, 7
    %v619 = vsub.s32 0, %v618
    %v620 = vrot.slane %v610, %v619
    %v621 = vlaneseq
    %v622 = vshrl.u32 %v621, 7
    %v623 = vsub.s32 0, %v622
    %v624 = vrot.slane %v611, %v623
    %v625 = vlaneseq
    %v626 = vshrl.u32 %v625, 7
    %v627 = vsub.s32 0, %v626
    %v628 = vrot.slane %v612, %v627
    %v629 = vlaneseq
    %v630 = vshrl.u32 %v629, 7
    %v631 = vsub.s32 0, %v630
    %v632 = vrot.slane %v603, %v631
    %v638 = vadd.f32 %v524, %v616
    %v639 = vadd.f32 %v528, %v616
    %v640 = vadd.f32 %v535, %v620
    %v641 = vadd.f32 %v539, %v620
    %v642 = vadd.f32 %v546, %v624
    %v643 = vadd.f32 %v550, %v624
    %v644 = vadd.f32 %v557, %v628
    %v645 = vadd.f32 %v561, %v628
    %v646 = vadd.f32 %v568, %v632
    %v647 = vadd.f32 %v572, %v632
    %v649 = vcombine.high %v279, %v279
    %v651 = vunpack.c.l.s4 1966171168
    %v652 = vunpack.c.0.s8 %v651
    %v653 = vlaneseq
    %v654 = vshrl.u32 %v653, 7
    %v655 = vsub.s32 %v652, %v654
    %v656 = vrot.slane %v279, %v655
    %v658 = vunpack.c.l.s4 1966171168
    %v659 = vunpack.c.0.s8 %v658
    %v660 = vlaneseq
    %v661 = vshrl.u32 %v660, 7
    %v662 = vsub.s32 %v659, %v661
    %v663 = vrot.slane %v649, %v662
    %v664 = vcombine.high %v656, %v656
    %v666 = vunpack.c.l.s4 1966171168
    %v667 = vunpack.c.0.s8 %v666
    %v668 = vlaneseq
    %v669 = vshrl.u32 %v668, 7
    %v670 = vsub.s32 %v667, %v669
    %v671 = vrot.slane %v656, %v670
    %v673 = vunpack.c.l.s4 1966171168
    %v674 = vunpack.c.0.s8 %v673
    %v675 = vlaneseq
    %v676 = vshrl.u32 %v675, 7
    %v677 = vsub.s32 %v674, %v676
    %v678 = vrot.slane %v663, %v677
    %v680 = vunpack.c.l.s4 1966171168
    %v681 = vunpack.c.0.s8 %v680
    %v682 = vlaneseq
    %v683 = vshrl.u32 %v682, 7
    %v684 = vsub.s32 %v681, %v683
    %v685 = vrot.slane %v664, %v684
    %v686 = vcombine.high %v671, %v671
    %v687 = vcombine.high %v685, %v685
    %v688 = vlaneseq
    %v689 = vshrl.u32 %v688, 7
    %v690 = vsub.s32 0, %v689
    %v691 = vrot.slane %v671, %v690
    %v692 = vlaneseq
    %v693 = vshrl.u32 %v692, 7
    %v694 = vsub.s32 0, %v693
    %v695 = vrot.slane %v685, %v694
    %v696 = vlaneseq
    %v697 = vshrl.u32 %v696, 7
    %v698 = vsub.s32 0, %v697
    %v699 = vrot.slane %v686, %v698
    %v700 = vlaneseq
    %v701 = vshrl.u32 %v700, 7
    %v702 = vsub.s32 0, %v701
    %v703 = vrot.slane %v687, %v702
    %v704 = vlaneseq
    %v705 = vshrl.u32 %v704, 7
    %v706 = vsub.s32 0, %v705
    %v707 = vrot.slane %v678, %v706
    %708 = vset.pattern.permute.xlu0 0
    %709 = vperm.xlu0 %708, %v691
    %v710 = vpop.permute.xlu0 %709
    %712 = vset.pattern.permute.xlu0 0
    %713 = vperm.xlu0 %712, %v695
    %v714 = vpop.permute.xlu0 %713
    %716 = vset.pattern.permute.xlu0 0
    %717 = vperm.xlu0 %716, %v699
    %v718 = vpop.permute.xlu0 %717
    %720 = vset.pattern.permute.xlu0 0
    %721 = vperm.xlu0 %720, %v703
    %v722 = vpop.permute.xlu0 %721
    %724 = vset.pattern.permute.xlu0 0
    %725 = vperm.xlu0 %724, %v707
    %v726 = vpop.permute.xlu0 %725
    %v728 = vmul.f32 %v265, %v710
    %v729 = vmul.f32 %v270, %v710
    %v730 = vmul.f32 %v265, %v714
    %v731 = vmul.f32 %v270, %v714
    %v732 = vmul.f32 %v265, %v718
    %v733 = vmul.f32 %v270, %v718
    %v734 = vmul.f32 %v265, %v722
    %v735 = vmul.f32 %v270, %v722
    %v736 = vmul.f32 %v265, %v726
    %v737 = vmul.f32 %v270, %v726
    %v738 = vadd.f32 %v638, %v728
    %v739 = vadd.f32 %v639, %v729
    %v740 = vadd.f32 %v640, %v730
    %v741 = vadd.f32 %v641, %v731
    %v742 = vadd.f32 %v642, %v732
    %v743 = vadd.f32 %v643, %v733
    %v744 = vadd.f32 %v644, %v734
    %v745 = vadd.f32 %v645, %v735
    %v746 = vadd.f32 %v646, %v736
    %v747 = vadd.f32 %v647, %v737
    %vm748 = vcmp.gt.f32.partialorder %v738, 0.0
    %vm749 = vcmp.gt.f32.partialorder %v739, 0.0
    %vm750 = vcmp.gt.f32.partialorder %v740, 0.0
    %vm751 = vcmp.gt.f32.partialorder %v741, 0.0
    %vm752 = vcmp.gt.f32.partialorder %v742, 0.0
    %vm753 = vcmp.gt.f32.partialorder %v743, 0.0
    %vm754 = vcmp.gt.f32.partialorder %v744, 0.0
    %vm755 = vcmp.gt.f32.partialorder %v745, 0.0
    %vm756 = vcmp.gt.f32.partialorder %v746, 0.0
    %vm757 = vcmp.gt.f32.partialorder %v747, 0.0
    %v758 = vmul.f32 %v738, 0.2
    %v759 = vmul.f32 %v739, 0.2
    %v760 = vmul.f32 %v740, 0.2
    %v761 = vmul.f32 %v741, 0.2
    %v762 = vmul.f32 %v742, 0.2
    %v763 = vmul.f32 %v743, 0.2
    %v764 = vmul.f32 %v744, 0.2
    %v765 = vmul.f32 %v745, 0.2
    %v766 = vmul.f32 %v746, 0.2
    %v767 = vmul.f32 %v747, 0.2
    %v768 = vsel %vm748, %v738, %v758
    %v769 = vsel %vm749, %v739, %v759
    %v770 = vsel %vm750, %v740, %v760
    %v771 = vsel %vm751, %v741, %v761
    %v772 = vsel %vm752, %v742, %v762
    %v773 = vsel %vm753, %v743, %v763
    %v774 = vsel %vm754, %v744, %v764
    %v775 = vsel %vm755, %v745, %v765
    %v776 = vsel %vm756, %v746, %v766
    %v777 = vsel %vm757, %v747, %v767
    %v778 = vsel %vm273, 1, 0
    %v779 = vsel %vm274, 1, 0
    %vm780 = vcmp.eq.s32.totalorder %v778, 1
    %vm781 = vcmp.eq.s32.totalorder %v779, 1
    %v782 = vsel %vm780, %v768, -1e+30
    %v783 = vsel %vm781, %v769, -1e+30
    %v784 = vsel %vm780, %v770, -1e+30
    %v785 = vsel %vm781, %v771, -1e+30
    %v786 = vsel %vm780, %v772, -1e+30
    %v787 = vsel %vm781, %v773, -1e+30
    %v788 = vsel %vm780, %v774, -1e+30
    %v789 = vsel %vm781, %v775, -1e+30
    %v790 = vsel %vm780, %v776, -1e+30
    %v791 = vsel %vm781, %v777, -1e+30
    %v792 = vsel %vm283, %v782, -inf
    %793 = vmax.xlane.f32.xlu0 %v792
    %v794 = vpop.xlane.xlu0 %793
    %v795 = vsel %vm283, %v783, -inf
    %796 = vmax.xlane.f32.xlu0 %v795
    %v797 = vpop.xlane.xlu0 %796
    %v798 = vsel %vm283, %v784, -inf
    %799 = vmax.xlane.f32.xlu0 %v798
    %v800 = vpop.xlane.xlu0 %799
    %v801 = vsel %vm283, %v785, -inf
    %802 = vmax.xlane.f32.xlu0 %v801
    %v803 = vpop.xlane.xlu0 %802
    %v804 = vsel %vm283, %v786, -inf
    %805 = vmax.xlane.f32.xlu0 %v804
    %v806 = vpop.xlane.xlu0 %805
    %v807 = vsel %vm283, %v787, -inf
    %808 = vmax.xlane.f32.xlu0 %v807
    %v809 = vpop.xlane.xlu0 %808
    %v810 = vsel %vm283, %v788, -inf
    %811 = vmax.xlane.f32.xlu0 %v810
    %v812 = vpop.xlane.xlu0 %811
    %v813 = vsel %vm283, %v789, -inf
    %814 = vmax.xlane.f32.xlu0 %v813
    %v815 = vpop.xlane.xlu0 %814
    %v816 = vsel %vm283, %v790, -inf
    %817 = vmax.xlane.f32.xlu0 %v816
    %v818 = vpop.xlane.xlu0 %817
    %v819 = vsel %vm283, %v791, -inf
    %820 = vmax.xlane.f32.xlu0 %v819
    %v821 = vpop.xlane.xlu0 %820
    %v822 = vsub.f32 %v782, %v794
    %v823 = vsub.f32 %v783, %v797
    %v824 = vsub.f32 %v784, %v800
    %v825 = vsub.f32 %v785, %v803
    %v826 = vsub.f32 %v786, %v806
    %v827 = vsub.f32 %v787, %v809
    %v828 = vsub.f32 %v788, %v812
    %v829 = vsub.f32 %v789, %v815
    %v830 = vsub.f32 %v790, %v818
    %v831 = vsub.f32 %v791, %v821
    %v832 = vmul.f32 %v822, 1.442695
    %v833 = vpow.pop %v832
    %v834 = vmul.f32 %v823, 1.442695
    %v835 = vpow.pop %v834
    %v836 = vmul.f32 %v824, 1.442695
    %v837 = vpow.pop %v836
    %v838 = vmul.f32 %v825, 1.442695
    %v839 = vpow.pop %v838
    %v840 = vmul.f32 %v826, 1.442695
    %v841 = vpow.pop %v840
    %v842 = vmul.f32 %v827, 1.442695
    %v843 = vpow.pop %v842
    %v844 = vmul.f32 %v828, 1.442695
    %v845 = vpow.pop %v844
    %v846 = vmul.f32 %v829, 1.442695
    %v847 = vpow.pop %v846
    %v848 = vmul.f32 %v830, 1.442695
    %v849 = vpow.pop %v848
    %v850 = vmul.f32 %v831, 1.442695
    %v851 = vpow.pop %v850
    %v852 = vsel %vm283, %v833, 0.0
    %853 = vadd.xlane.f32.xlu0 %v852
    %v854 = vpop.xlane.xlu0 %853
    %v855 = vsel %vm283, %v835, 0.0
    %856 = vadd.xlane.f32.xlu0 %v855
    %v857 = vpop.xlane.xlu0 %856
    %v858 = vsel %vm283, %v837, 0.0
    %859 = vadd.xlane.f32.xlu0 %v858
    %v860 = vpop.xlane.xlu0 %859
    %v861 = vsel %vm283, %v839, 0.0
    %862 = vadd.xlane.f32.xlu0 %v861
    %v863 = vpop.xlane.xlu0 %862
    %v864 = vsel %vm283, %v841, 0.0
    %865 = vadd.xlane.f32.xlu0 %v864
    %v866 = vpop.xlane.xlu0 %865
    %v867 = vsel %vm283, %v843, 0.0
    %868 = vadd.xlane.f32.xlu0 %v867
    %v869 = vpop.xlane.xlu0 %868
    %v870 = vsel %vm283, %v845, 0.0
    %871 = vadd.xlane.f32.xlu0 %v870
    %v872 = vpop.xlane.xlu0 %871
    %v873 = vsel %vm283, %v847, 0.0
    %874 = vadd.xlane.f32.xlu0 %v873
    %v875 = vpop.xlane.xlu0 %874
    %v876 = vsel %vm283, %v849, 0.0
    %877 = vadd.xlane.f32.xlu0 %v876
    %v878 = vpop.xlane.xlu0 %877
    %v879 = vsel %vm283, %v851, 0.0
    %880 = vadd.xlane.f32.xlu0 %v879
    %v881 = vpop.xlane.xlu0 %880
    %v882 = vrcp.pop %v854
    %v883 = vrcp.pop %v857
    %v884 = vrcp.pop %v860
    %v885 = vrcp.pop %v863
    %v886 = vrcp.pop %v866
    %v887 = vrcp.pop %v869
    %v888 = vrcp.pop %v872
    %v889 = vrcp.pop %v875
    %v890 = vrcp.pop %v878
    %v891 = vrcp.pop %v881
    %v892 = vmul.f32 %v833, %v882
    %v893 = vmul.f32 %v835, %v883
    %v894 = vmul.f32 %v837, %v884
    %v895 = vmul.f32 %v839, %v885
    %v896 = vmul.f32 %v841, %v886
    %v897 = vmul.f32 %v843, %v887
    %v898 = vmul.f32 %v845, %v888
    %v899 = vmul.f32 %v847, %v889
    %v900 = vmul.f32 %v849, %v890
    %v901 = vmul.f32 %v851, %v891
    %v903 = vsel %vm283, %v94, 0
    %v906 = vsel %vm283, %v95, 0
    %v909 = vsel %vm283, %v96, 0
    %v912 = vsel %vm283, %v97, 0
    %v915 = vsel %vm283, %v98, 0
    %v918 = vsel %vm283, %v99, 0
    %920 = vmatprep.subr.mxu0 0.0
    %921 = vmatpush1.msra.mxu0 0.0
    %922 = vmatprep.subr.mxu0 0.0
    %923 = vmatpush1.msra.mxu0 0.0
    %924 = vmatprep.subr.mxu0 0.0
    %925 = vmatpush1.msra.mxu0 0.0
    %926 = vmatprep.subr.mxu0 0.0
    %927 = vmatpush1.msra.mxu0 0.0
    %928 = vmatprep.subr.mxu0 0.0
    %929 = vmatpush1.msra.mxu0 0.0
    %930 = vmatprep.subr.mxu0 0.0
    %931 = vmatpush1.msra.mxu0 0.0
    %932 = vmatprep.subr.mxu0 0.0
    %933 = vmatpush1.msra.mxu0 0.0
    %934 = vmatprep.subr.mxu0 0.0
    %935 = vmatpush1.msra.mxu0 0.0
    %936 = vmatprep.subr.mxu0 0.0
    %937 = vmatpush1.msra.mxu0 0.0
    %938 = vmatprep.subr.mxu0 0.0
    %939 = vmatpush1.msra.mxu0 0.0
    %940 = vmatprep.subr.mxu0 0.0
    %941 = vmatpush1.msra.mxu0 0.0
    %942 = vmatprep.subr.mxu0 0.0
    %943 = vmatpush1.msra.mxu0 0.0
    %944 = vmatprep.subr.mxu0 0.0
    %945 = vmatpush1.msra.mxu0 0.0
    %946 = vmatprep.subr.mxu0 0.0
    %947 = vmatpush1.msra.mxu0 0.0
    %948 = vmatprep.subr.mxu0 0.0
    %949 = vmatpush1.msra.mxu0 %v893
    %950 = vmatprep.subr.mxu0 0.0
    %951 = vmatpush1.msra.mxu0 %v892
    %952 = vmatprep.subr.mxu0 0.0
    %953 = vmatpush2.msra.mxu0 0.0
    %954 = vmatprep.subr.mxu0 0.0
    %955 = vmatpush2.msra.mxu0 0.0
    %956 = vmatprep.subr.mxu0 0.0
    %957 = vmatpush2.msra.mxu0 0.0
    %958 = vmatprep.subr.mxu0 0.0
    %959 = vmatpush2.msra.mxu0 0.0
    %960 = vmatprep.subr.mxu0 0.0
    %961 = vmatpush2.msra.mxu0 0.0
    %962 = vmatprep.subr.mxu0 0.0
    %963 = vmatpush2.msra.mxu0 0.0
    %964 = vmatprep.subr.mxu0 0.0
    %965 = vmatpush2.msra.mxu0 0.0
    %966 = vmatprep.subr.mxu0 0.0
    %967 = vmatpush2.msra.mxu0 0.0
    %968 = vmatprep.subr.mxu0 0.0
    %969 = vmatpush2.msra.mxu0 0.0
    %970 = vmatprep.subr.mxu0 0.0
    %971 = vmatpush2.msra.mxu0 0.0
    %972 = vmatprep.subr.mxu0 0.0
    %973 = vmatpush2.msra.mxu0 0.0
    %974 = vmatprep.subr.mxu0 0.0
    %975 = vmatpush2.msra.mxu0 0.0
    %976 = vmatprep.subr.mxu0 0.0
    %977 = vmatpush2.msra.mxu0 0.0
    %978 = vmatprep.subr.mxu0 0.0
    %979 = vmatpush2.msra.mxu0 0.0
    %980 = vmatprep.subr.mxu0 0.0
    %981 = vmatpush2.msra.mxu0 0.0
    %982 = vmatprep.subr.mxu0 0.0
    %983 = vmatpush2.msra.mxu0 0.0
    %984 = vmatprep.mubr.f32.mxu0 0.0
    %985 = vmatmul.mubr.f32.gmra.mxu0 %v903
    %v986 = vpop.f32.mrf.mxu0
    %v987 = vadd.f32 0.0, %v986
    %v988 = vpop.f32.mrf.mxu0
    %989 = vmatprep.mubr.f32.mxu0 0.0
    %990 = vmatmul.mubr.f32.gmra.mxu0 %v906
    %v991 = vpop.f32.mrf.mxu0
    %v992 = vadd.f32 0.0, %v991
    %v993 = vpop.f32.mrf.mxu0
    %994 = vmatprep.mubr.f32.mxu0 0.0
    %995 = vmatmul.mubr.f32.gmra.mxu0 %v909
    %v996 = vpop.f32.mrf.mxu0
    %v997 = vadd.f32 0.0, %v996
    %v998 = vpop.f32.mrf.mxu0
    %999 = vmatprep.mubr.f32.mxu0 0.0
    %1000 = vmatmul.mubr.f32.gmra.mxu0 %v912
    %v1001 = vpop.f32.mrf.mxu0
    %v1002 = vadd.f32 0.0, %v1001
    %v1003 = vpop.f32.mrf.mxu0
    %1004 = vmatprep.mubr.f32.mxu0 0.0
    %1005 = vmatmul.mubr.f32.gmra.mxu0 %v915
    %v1006 = vpop.f32.mrf.mxu0
    %v1007 = vadd.f32 0.0, %v1006
    %v1008 = vpop.f32.mrf.mxu0
    %1009 = vmatprep.mubr.f32.mxu0 0.0
    %1010 = vmatmul.mubr.f32.gmra.mxu0 %v918
    %v1011 = vpop.f32.mrf.mxu0
    %v1012 = vadd.f32 0.0, %v1011
    %v1013 = vpop.f32.mrf.mxu0
    %1014 = vdwg.mxu0
    %1015 = vmatprep.subr.mxu0 0.0
    %1016 = vmatpush1.msra.mxu0 0.0
    %1017 = vmatprep.subr.mxu0 0.0
    %1018 = vmatpush1.msra.mxu0 0.0
    %1019 = vmatprep.subr.mxu0 0.0
    %1020 = vmatpush1.msra.mxu0 0.0
    %1021 = vmatprep.subr.mxu0 0.0
    %1022 = vmatpush1.msra.mxu0 0.0
    %1023 = vmatprep.subr.mxu0 0.0
    %1024 = vmatpush1.msra.mxu0 0.0
    %1025 = vmatprep.subr.mxu0 0.0
    %1026 = vmatpush1.msra.mxu0 0.0
    %1027 = vmatprep.subr.mxu0 0.0
    %1028 = vmatpush1.msra.mxu0 0.0
    %1029 = vmatprep.subr.mxu0 0.0
    %1030 = vmatpush1.msra.mxu0 0.0
    %1031 = vmatprep.subr.mxu0 0.0
    %1032 = vmatpush1.msra.mxu0 0.0
    %1033 = vmatprep.subr.mxu0 0.0
    %1034 = vmatpush1.msra.mxu0 0.0
    %1035 = vmatprep.subr.mxu0 0.0
    %1036 = vmatpush1.msra.mxu0 0.0
    %1037 = vmatprep.subr.mxu0 0.0
    %1038 = vmatpush1.msra.mxu0 0.0
    %1039 = vmatprep.subr.mxu0 0.0
    %1040 = vmatpush1.msra.mxu0 0.0
    %1041 = vmatprep.subr.mxu0 0.0
    %1042 = vmatpush1.msra.mxu0 0.0
    %1043 = vmatprep.subr.mxu0 0.0
    %1044 = vmatpush1.msra.mxu0 %v895
    %1045 = vmatprep.subr.mxu0 0.0
    %1046 = vmatpush1.msra.mxu0 %v894
    %1047 = vmatprep.subr.mxu0 0.0
    %1048 = vmatpush2.msra.mxu0 0.0
    %1049 = vmatprep.subr.mxu0 0.0
    %1050 = vmatpush2.msra.mxu0 0.0
    %1051 = vmatprep.subr.mxu0 0.0
    %1052 = vmatpush2.msra.mxu0 0.0
    %1053 = vmatprep.subr.mxu0 0.0
    %1054 = vmatpush2.msra.mxu0 0.0
    %1055 = vmatprep.subr.mxu0 0.0
    %1056 = vmatpush2.msra.mxu0 0.0
    %1057 = vmatprep.subr.mxu0 0.0
    %1058 = vmatpush2.msra.mxu0 0.0
    %1059 = vmatprep.subr.mxu0 0.0
    %1060 = vmatpush2.msra.mxu0 0.0
    %1061 = vmatprep.subr.mxu0 0.0
    %1062 = vmatpush2.msra.mxu0 0.0
    %1063 = vmatprep.subr.mxu0 0.0
    %1064 = vmatpush2.msra.mxu0 0.0
    %1065 = vmatprep.subr.mxu0 0.0
    %1066 = vmatpush2.msra.mxu0 0.0
    %1067 = vmatprep.subr.mxu0 0.0
    %1068 = vmatpush2.msra.mxu0 0.0
    %1069 = vmatprep.subr.mxu0 0.0
    %1070 = vmatpush2.msra.mxu0 0.0
    %1071 = vmatprep.subr.mxu0 0.0
    %1072 = vmatpush2.msra.mxu0 0.0
    %1073 = vmatprep.subr.mxu0 0.0
    %1074 = vmatpush2.msra.mxu0 0.0
    %1075 = vmatprep.subr.mxu0 0.0
    %1076 = vmatpush2.msra.mxu0 0.0
    %1077 = vmatprep.subr.mxu0 0.0
    %1078 = vmatpush2.msra.mxu0 0.0
    %1079 = vmatprep.mubr.f32.mxu0 0.0
    %1080 = vmatmul.mubr.f32.gmra.mxu0 %v903
    %v1081 = vpop.f32.mrf.mxu0
    %v1082 = vadd.f32 0.0, %v1081
    %v1083 = vpop.f32.mrf.mxu0
    %1084 = vmatprep.mubr.f32.mxu0 0.0
    %1085 = vmatmul.mubr.f32.gmra.mxu0 %v906
    %v1086 = vpop.f32.mrf.mxu0
    %v1087 = vadd.f32 0.0, %v1086
    %v1088 = vpop.f32.mrf.mxu0
    %1089 = vmatprep.mubr.f32.mxu0 0.0
    %1090 = vmatmul.mubr.f32.gmra.mxu0 %v909
    %v1091 = vpop.f32.mrf.mxu0
    %v1092 = vadd.f32 0.0, %v1091
    %v1093 = vpop.f32.mrf.mxu0
    %1094 = vmatprep.mubr.f32.mxu0 0.0
    %1095 = vmatmul.mubr.f32.gmra.mxu0 %v912
    %v1096 = vpop.f32.mrf.mxu0
    %v1097 = vadd.f32 0.0, %v1096
    %v1098 = vpop.f32.mrf.mxu0
    %1099 = vmatprep.mubr.f32.mxu0 0.0
    %1100 = vmatmul.mubr.f32.gmra.mxu0 %v915
    %v1101 = vpop.f32.mrf.mxu0
    %v1102 = vadd.f32 0.0, %v1101
    %v1103 = vpop.f32.mrf.mxu0
    %1104 = vmatprep.mubr.f32.mxu0 0.0
    %1105 = vmatmul.mubr.f32.gmra.mxu0 %v918
    %v1106 = vpop.f32.mrf.mxu0
    %v1107 = vadd.f32 0.0, %v1106
    %v1108 = vpop.f32.mrf.mxu0
    %1109 = vdwg.mxu0
    %1110 = vmatprep.subr.mxu0 0.0
    %1111 = vmatpush1.msra.mxu0 0.0
    %1112 = vmatprep.subr.mxu0 0.0
    %1113 = vmatpush1.msra.mxu0 0.0
    %1114 = vmatprep.subr.mxu0 0.0
    %1115 = vmatpush1.msra.mxu0 0.0
    %1116 = vmatprep.subr.mxu0 0.0
    %1117 = vmatpush1.msra.mxu0 0.0
    %1118 = vmatprep.subr.mxu0 0.0
    %1119 = vmatpush1.msra.mxu0 0.0
    %1120 = vmatprep.subr.mxu0 0.0
    %1121 = vmatpush1.msra.mxu0 0.0
    %1122 = vmatprep.subr.mxu0 0.0
    %1123 = vmatpush1.msra.mxu0 0.0
    %1124 = vmatprep.subr.mxu0 0.0
    %1125 = vmatpush1.msra.mxu0 0.0
    %1126 = vmatprep.subr.mxu0 0.0
    %1127 = vmatpush1.msra.mxu0 0.0
    %1128 = vmatprep.subr.mxu0 0.0
    %1129 = vmatpush1.msra.mxu0 0.0
    %1130 = vmatprep.subr.mxu0 0.0
    %1131 = vmatpush1.msra.mxu0 0.0
    %1132 = vmatprep.subr.mxu0 0.0
    %1133 = vmatpush1.msra.mxu0 0.0
    %1134 = vmatprep.subr.mxu0 0.0
    %1135 = vmatpush1.msra.mxu0 0.0
    %1136 = vmatprep.subr.mxu0 0.0
    %1137 = vmatpush1.msra.mxu0 0.0
    %1138 = vmatprep.subr.mxu0 0.0
    %1139 = vmatpush1.msra.mxu0 %v897
    %1140 = vmatprep.subr.mxu0 0.0
    %1141 = vmatpush1.msra.mxu0 %v896
    %1142 = vmatprep.subr.mxu0 0.0
    %1143 = vmatpush2.msra.mxu0 0.0
    %1144 = vmatprep.subr.mxu0 0.0
    %1145 = vmatpush2.msra.mxu0 0.0
    %1146 = vmatprep.subr.mxu0 0.0
    %1147 = vmatpush2.msra.mxu0 0.0
    %1148 = vmatprep.subr.mxu0 0.0
    %1149 = vmatpush2.msra.mxu0 0.0
    %1150 = vmatprep.subr.mxu0 0.0
    %1151 = vmatpush2.msra.mxu0 0.0
    %1152 = vmatprep.subr.mxu0 0.0
    %1153 = vmatpush2.msra.mxu0 0.0
    %1154 = vmatprep.subr.mxu0 0.0
    %1155 = vmatpush2.msra.mxu0 0.0
    %1156 = vmatprep.subr.mxu0 0.0
    %1157 = vmatpush2.msra.mxu0 0.0
    %1158 = vmatprep.subr.mxu0 0.0
    %1159 = vmatpush2.msra.mxu0 0.0
    %1160 = vmatprep.subr.mxu0 0.0
    %1161 = vmatpush2.msra.mxu0 0.0
    %1162 = vmatprep.subr.mxu0 0.0
    %1163 = vmatpush2.msra.mxu0 0.0
    %1164 = vmatprep.subr.mxu0 0.0
    %1165 = vmatpush2.msra.mxu0 0.0
    %1166 = vmatprep.subr.mxu0 0.0
    %1167 = vmatpush2.msra.mxu0 0.0
    %1168 = vmatprep.subr.mxu0 0.0
    %1169 = vmatpush2.msra.mxu0 0.0
    %1170 = vmatprep.subr.mxu0 0.0
    %1171 = vmatpush2.msra.mxu0 0.0
    %1172 = vmatprep.subr.mxu0 0.0
    %1173 = vmatpush2.msra.mxu0 0.0
    %1174 = vmatprep.mubr.f32.mxu0 0.0
    %1175 = vmatmul.mubr.f32.gmra.mxu0 %v903
    %v1176 = vpop.f32.mrf.mxu0
    %v1177 = vadd.f32 0.0, %v1176
    %v1178 = vpop.f32.mrf.mxu0
    %1179 = vmatprep.mubr.f32.mxu0 0.0
    %1180 = vmatmul.mubr.f32.gmra.mxu0 %v906
    %v1181 = vpop.f32.mrf.mxu0
    %v1182 = vadd.f32 0.0, %v1181
    %v1183 = vpop.f32.mrf.mxu0
    %1184 = vmatprep.mubr.f32.mxu0 0.0
    %1185 = vmatmul.mubr.f32.gmra.mxu0 %v909
    %v1186 = vpop.f32.mrf.mxu0
    %v1187 = vadd.f32 0.0, %v1186
    %v1188 = vpop.f32.mrf.mxu0
    %1189 = vmatprep.mubr.f32.mxu0 0.0
    %1190 = vmatmul.mubr.f32.gmra.mxu0 %v912
    %v1191 = vpop.f32.mrf.mxu0
    %v1192 = vadd.f32 0.0, %v1191
    %v1193 = vpop.f32.mrf.mxu0
    %1194 = vmatprep.mubr.f32.mxu0 0.0
    %1195 = vmatmul.mubr.f32.gmra.mxu0 %v915
    %v1196 = vpop.f32.mrf.mxu0
    %v1197 = vadd.f32 0.0, %v1196
    %v1198 = vpop.f32.mrf.mxu0
    %1199 = vmatprep.mubr.f32.mxu0 0.0
    %1200 = vmatmul.mubr.f32.gmra.mxu0 %v918
    %v1201 = vpop.f32.mrf.mxu0
    %v1202 = vadd.f32 0.0, %v1201
    %v1203 = vpop.f32.mrf.mxu0
    %1204 = vdwg.mxu0
    %1205 = vmatprep.subr.mxu0 0.0
    %1206 = vmatpush1.msra.mxu0 0.0
    %1207 = vmatprep.subr.mxu0 0.0
    %1208 = vmatpush1.msra.mxu0 0.0
    %1209 = vmatprep.subr.mxu0 0.0
    %1210 = vmatpush1.msra.mxu0 0.0
    %1211 = vmatprep.subr.mxu0 0.0
    %1212 = vmatpush1.msra.mxu0 0.0
    %1213 = vmatprep.subr.mxu0 0.0
    %1214 = vmatpush1.msra.mxu0 0.0
    %1215 = vmatprep.subr.mxu0 0.0
    %1216 = vmatpush1.msra.mxu0 0.0
    %1217 = vmatprep.subr.mxu0 0.0
    %1218 = vmatpush1.msra.mxu0 0.0
    %1219 = vmatprep.subr.mxu0 0.0
    %1220 = vmatpush1.msra.mxu0 0.0
    %1221 = vmatprep.subr.mxu0 0.0
    %1222 = vmatpush1.msra.mxu0 0.0
    %1223 = vmatprep.subr.mxu0 0.0
    %1224 = vmatpush1.msra.mxu0 0.0
    %1225 = vmatprep.subr.mxu0 0.0
    %1226 = vmatpush1.msra.mxu0 0.0
    %1227 = vmatprep.subr.mxu0 0.0
    %1228 = vmatpush1.msra.mxu0 0.0
    %1229 = vmatprep.subr.mxu0 0.0
    %1230 = vmatpush1.msra.mxu0 0.0
    %1231 = vmatprep.subr.mxu0 0.0
    %1232 = vmatpush1.msra.mxu0 0.0
    %1233 = vmatprep.subr.mxu0 0.0
    %1234 = vmatpush1.msra.mxu0 %v899
    %1235 = vmatprep.subr.mxu0 0.0
    %1236 = vmatpush1.msra.mxu0 %v898
    %1237 = vmatprep.subr.mxu0 0.0
    %1238 = vmatpush2.msra.mxu0 0.0
    %1239 = vmatprep.subr.mxu0 0.0
    %1240 = vmatpush2.msra.mxu0 0.0
    %1241 = vmatprep.subr.mxu0 0.0
    %1242 = vmatpush2.msra.mxu0 0.0
    %1243 = vmatprep.subr.mxu0 0.0
    %1244 = vmatpush2.msra.mxu0 0.0
    %1245 = vmatprep.subr.mxu0 0.0
    %1246 = vmatpush2.msra.mxu0 0.0
    %1247 = vmatprep.subr.mxu0 0.0
    %1248 = vmatpush2.msra.mxu0 0.0
    %1249 = vmatprep.subr.mxu0 0.0
    %1250 = vmatpush2.msra.mxu0 0.0
    %1251 = vmatprep.subr.mxu0 0.0
    %1252 = vmatpush2.msra.mxu0 0.0
    %1253 = vmatprep.subr.mxu0 0.0
    %1254 = vmatpush2.msra.mxu0 0.0
    %1255 = vmatprep.subr.mxu0 0.0
    %1256 = vmatpush2.msra.mxu0 0.0
    %1257 = vmatprep.subr.mxu0 0.0
    %1258 = vmatpush2.msra.mxu0 0.0
    %1259 = vmatprep.subr.mxu0 0.0
    %1260 = vmatpush2.msra.mxu0 0.0
    %1261 = vmatprep.subr.mxu0 0.0
    %1262 = vmatpush2.msra.mxu0 0.0
    %1263 = vmatprep.subr.mxu0 0.0
    %1264 = vmatpush2.msra.mxu0 0.0
    %1265 = vmatprep.subr.mxu0 0.0
    %1266 = vmatpush2.msra.mxu0 0.0
    %1267 = vmatprep.subr.mxu0 0.0
    %1268 = vmatpush2.msra.mxu0 0.0
    %1269 = vmatprep.mubr.f32.mxu0 0.0
    %1270 = vmatmul.mubr.f32.gmra.mxu0 %v903
    %v1271 = vpop.f32.mrf.mxu0
    %v1272 = vadd.f32 0.0, %v1271
    %v1273 = vpop.f32.mrf.mxu0
    %1274 = vmatprep.mubr.f32.mxu0 0.0
    %1275 = vmatmul.mubr.f32.gmra.mxu0 %v906
    %v1276 = vpop.f32.mrf.mxu0
    %v1277 = vadd.f32 0.0, %v1276
    %v1278 = vpop.f32.mrf.mxu0
    %1279 = vmatprep.mubr.f32.mxu0 0.0
    %1280 = vmatmul.mubr.f32.gmra.mxu0 %v909
    %v1281 = vpop.f32.mrf.mxu0
    %v1282 = vadd.f32 0.0, %v1281
    %v1283 = vpop.f32.mrf.mxu0
    %1284 = vmatprep.mubr.f32.mxu0 0.0
    %1285 = vmatmul.mubr.f32.gmra.mxu0 %v912
    %v1286 = vpop.f32.mrf.mxu0
    %v1287 = vadd.f32 0.0, %v1286
    %v1288 = vpop.f32.mrf.mxu0
    %1289 = vmatprep.mubr.f32.mxu0 0.0
    %1290 = vmatmul.mubr.f32.gmra.mxu0 %v915
    %v1291 = vpop.f32.mrf.mxu0
    %v1292 = vadd.f32 0.0, %v1291
    %v1293 = vpop.f32.mrf.mxu0
    %1294 = vmatprep.mubr.f32.mxu0 0.0
    %1295 = vmatmul.mubr.f32.gmra.mxu0 %v918
    %v1296 = vpop.f32.mrf.mxu0
    %v1297 = vadd.f32 0.0, %v1296
    %v1298 = vpop.f32.mrf.mxu0
    %1299 = vdwg.mxu0
    %1300 = vmatprep.subr.mxu0 0.0
    %1301 = vmatpush1.msra.mxu0 0.0
    %1302 = vmatprep.subr.mxu0 0.0
    %1303 = vmatpush1.msra.mxu0 0.0
    %1304 = vmatprep.subr.mxu0 0.0
    %1305 = vmatpush1.msra.mxu0 0.0
    %1306 = vmatprep.subr.mxu0 0.0
    %1307 = vmatpush1.msra.mxu0 0.0
    %1308 = vmatprep.subr.mxu0 0.0
    %1309 = vmatpush1.msra.mxu0 0.0
    %1310 = vmatprep.subr.mxu0 0.0
    %1311 = vmatpush1.msra.mxu0 0.0
    %1312 = vmatprep.subr.mxu0 0.0
    %1313 = vmatpush1.msra.mxu0 0.0
    %1314 = vmatprep.subr.mxu0 0.0
    %1315 = vmatpush1.msra.mxu0 0.0
    %1316 = vmatprep.subr.mxu0 0.0
    %1317 = vmatpush1.msra.mxu0 0.0
    %1318 = vmatprep.subr.mxu0 0.0
    %1319 = vmatpush1.msra.mxu0 0.0
    %1320 = vmatprep.subr.mxu0 0.0
    %1321 = vmatpush1.msra.mxu0 0.0
    %1322 = vmatprep.subr.mxu0 0.0
    %1323 = vmatpush1.msra.mxu0 0.0
    %1324 = vmatprep.subr.mxu0 0.0
    %1325 = vmatpush1.msra.mxu0 0.0
    %1326 = vmatprep.subr.mxu0 0.0
    %1327 = vmatpush1.msra.mxu0 0.0
    %1328 = vmatprep.subr.mxu0 0.0
    %1329 = vmatpush1.msra.mxu0 %v901
    %1330 = vmatprep.subr.mxu0 0.0
    %1331 = vmatpush1.msra.mxu0 %v900
    %1332 = vmatprep.subr.mxu0 0.0
    %1333 = vmatpush2.msra.mxu0 0.0
    %1334 = vmatprep.subr.mxu0 0.0
    %1335 = vmatpush2.msra.mxu0 0.0
    %1336 = vmatprep.subr.mxu0 0.0
    %1337 = vmatpush2.msra.mxu0 0.0
    %1338 = vmatprep.subr.mxu0 0.0
    %1339 = vmatpush2.msra.mxu0 0.0
    %1340 = vmatprep.subr.mxu0 0.0
    %1341 = vmatpush2.msra.mxu0 0.0
    %1342 = vmatprep.subr.mxu0 0.0
    %1343 = vmatpush2.msra.mxu0 0.0
    %1344 = vmatprep.subr.mxu0 0.0
    %1345 = vmatpush2.msra.mxu0 0.0
    %1346 = vmatprep.subr.mxu0 0.0
    %1347 = vmatpush2.msra.mxu0 0.0
    %1348 = vmatprep.subr.mxu0 0.0
    %1349 = vmatpush2.msra.mxu0 0.0
    %1350 = vmatprep.subr.mxu0 0.0
    %1351 = vmatpush2.msra.mxu0 0.0
    %1352 = vmatprep.subr.mxu0 0.0
    %1353 = vmatpush2.msra.mxu0 0.0
    %1354 = vmatprep.subr.mxu0 0.0
    %1355 = vmatpush2.msra.mxu0 0.0
    %1356 = vmatprep.subr.mxu0 0.0
    %1357 = vmatpush2.msra.mxu0 0.0
    %1358 = vmatprep.subr.mxu0 0.0
    %1359 = vmatpush2.msra.mxu0 0.0
    %1360 = vmatprep.subr.mxu0 0.0
    %1361 = vmatpush2.msra.mxu0 0.0
    %1362 = vmatprep.subr.mxu0 0.0
    %1363 = vmatpush2.msra.mxu0 0.0
    %1364 = vmatprep.mubr.f32.mxu0 0.0
    %1365 = vmatmul.mubr.f32.gmra.mxu0 %v903
    %v1366 = vpop.f32.mrf.mxu0
    %v1367 = vadd.f32 0.0, %v1366
    %v1368 = vpop.f32.mrf.mxu0
    %1369 = vmatprep.mubr.f32.mxu0 0.0
    %1370 = vmatmul.mubr.f32.gmra.mxu0 %v906
    %v1371 = vpop.f32.mrf.mxu0
    %v1372 = vadd.f32 0.0, %v1371
    %v1373 = vpop.f32.mrf.mxu0
    %1374 = vmatprep.mubr.f32.mxu0 0.0
    %1375 = vmatmul.mubr.f32.gmra.mxu0 %v909
    %v1376 = vpop.f32.mrf.mxu0
    %v1377 = vadd.f32 0.0, %v1376
    %v1378 = vpop.f32.mrf.mxu0
    %1379 = vmatprep.mubr.f32.mxu0 0.0
    %1380 = vmatmul.mubr.f32.gmra.mxu0 %v912
    %v1381 = vpop.f32.mrf.mxu0
    %v1382 = vadd.f32 0.0, %v1381
    %v1383 = vpop.f32.mrf.mxu0
    %1384 = vmatprep.mubr.f32.mxu0 0.0
    %1385 = vmatmul.mubr.f32.gmra.mxu0 %v915
    %v1386 = vpop.f32.mrf.mxu0
    %v1387 = vadd.f32 0.0, %v1386
    %v1388 = vpop.f32.mrf.mxu0
    %1389 = vmatprep.mubr.f32.mxu0 0.0
    %1390 = vmatmul.mubr.f32.gmra.mxu0 %v918
    %v1391 = vpop.f32.mrf.mxu0
    %v1392 = vadd.f32 0.0, %v1391
    %v1393 = vpop.f32.mrf.mxu0
    %1394 = vdwg.mxu0
    %v1395 = vmul.f32 %v987, %v88
    %v1396 = vmul.f32 %v992, %v89
    %v1397 = vmul.f32 %v997, %v90
    %v1398 = vmul.f32 %v1002, %v91
    %v1399 = vmul.f32 %v1007, %v92
    %v1400 = vmul.f32 %v1012, %v93
    %v1401 = vmul.f32 %v1082, %v88
    %v1402 = vmul.f32 %v1087, %v89
    %v1403 = vmul.f32 %v1092, %v90
    %v1404 = vmul.f32 %v1097, %v91
    %v1405 = vmul.f32 %v1102, %v92
    %v1406 = vmul.f32 %v1107, %v93
    %v1407 = vmul.f32 %v1177, %v88
    %v1408 = vmul.f32 %v1182, %v89
    %v1409 = vmul.f32 %v1187, %v90
    %v1410 = vmul.f32 %v1192, %v91
    %v1411 = vmul.f32 %v1197, %v92
    %v1412 = vmul.f32 %v1202, %v93
    %v1413 = vmul.f32 %v1272, %v88
    %v1414 = vmul.f32 %v1277, %v89
    %v1415 = vmul.f32 %v1282, %v90
    %v1416 = vmul.f32 %v1287, %v91
    %v1417 = vmul.f32 %v1292, %v92
    %v1418 = vmul.f32 %v1297, %v93
    %v1419 = vmul.f32 %v1367, %v88
    %v1420 = vmul.f32 %v1372, %v89
    %v1421 = vmul.f32 %v1377, %v90
    %v1422 = vmul.f32 %v1382, %v91
    %v1423 = vmul.f32 %v1387, %v92
    %v1424 = vmul.f32 %v1392, %v93
    %v1425 = vsel %vm283, %v1395, 0.0
    %1426 = vadd.xlane.f32.xlu0 %v1425
    %v1427 = vpop.xlane.xlu0 %1426
    %v1428 = vsel %vm283, %v1396, 0.0
    %1429 = vadd.xlane.f32.xlu0 %v1428
    %v1430 = vpop.xlane.xlu0 %1429
    %v1431 = vsel %vm283, %v1397, 0.0
    %1432 = vadd.xlane.f32.xlu0 %v1431
    %v1433 = vpop.xlane.xlu0 %1432
    %v1434 = vsel %vm283, %v1398, 0.0
    %1435 = vadd.xlane.f32.xlu0 %v1434
    %v1436 = vpop.xlane.xlu0 %1435
    %v1437 = vsel %vm283, %v1399, 0.0
    %1438 = vadd.xlane.f32.xlu0 %v1437
    %v1439 = vpop.xlane.xlu0 %1438
    %v1440 = vsel %vm283, %v1400, 0.0
    %1441 = vadd.xlane.f32.xlu0 %v1440
    %v1442 = vpop.xlane.xlu0 %1441
    %v1443 = vsel %vm283, %v1401, 0.0
    %1444 = vadd.xlane.f32.xlu0 %v1443
    %v1445 = vpop.xlane.xlu0 %1444
    %v1446 = vsel %vm283, %v1402, 0.0
    %1447 = vadd.xlane.f32.xlu0 %v1446
    %v1448 = vpop.xlane.xlu0 %1447
    %v1449 = vsel %vm283, %v1403, 0.0
    %1450 = vadd.xlane.f32.xlu0 %v1449
    %v1451 = vpop.xlane.xlu0 %1450
    %v1452 = vsel %vm283, %v1404, 0.0
    %1453 = vadd.xlane.f32.xlu0 %v1452
    %v1454 = vpop.xlane.xlu0 %1453
    %v1455 = vsel %vm283, %v1405, 0.0
    %1456 = vadd.xlane.f32.xlu0 %v1455
    %v1457 = vpop.xlane.xlu0 %1456
    %v1458 = vsel %vm283, %v1406, 0.0
    %1459 = vadd.xlane.f32.xlu0 %v1458
    %v1460 = vpop.xlane.xlu0 %1459
    %v1461 = vsel %vm283, %v1407, 0.0
    %1462 = vadd.xlane.f32.xlu0 %v1461
    %v1463 = vpop.xlane.xlu0 %1462
    %v1464 = vsel %vm283, %v1408, 0.0
    %1465 = vadd.xlane.f32.xlu0 %v1464
    %v1466 = vpop.xlane.xlu0 %1465
    %v1467 = vsel %vm283, %v1409, 0.0
    %1468 = vadd.xlane.f32.xlu0 %v1467
    %v1469 = vpop.xlane.xlu0 %1468
    %v1470 = vsel %vm283, %v1410, 0.0
    %1471 = vadd.xlane.f32.xlu0 %v1470
    %v1472 = vpop.xlane.xlu0 %1471
    %v1473 = vsel %vm283, %v1411, 0.0
    %1474 = vadd.xlane.f32.xlu0 %v1473
    %v1475 = vpop.xlane.xlu0 %1474
    %v1476 = vsel %vm283, %v1412, 0.0
    %1477 = vadd.xlane.f32.xlu0 %v1476
    %v1478 = vpop.xlane.xlu0 %1477
    %v1479 = vsel %vm283, %v1413, 0.0
    %1480 = vadd.xlane.f32.xlu0 %v1479
    %v1481 = vpop.xlane.xlu0 %1480
    %v1482 = vsel %vm283, %v1414, 0.0
    %1483 = vadd.xlane.f32.xlu0 %v1482
    %v1484 = vpop.xlane.xlu0 %1483
    %v1485 = vsel %vm283, %v1415, 0.0
    %1486 = vadd.xlane.f32.xlu0 %v1485
    %v1487 = vpop.xlane.xlu0 %1486
    %v1488 = vsel %vm283, %v1416, 0.0
    %1489 = vadd.xlane.f32.xlu0 %v1488
    %v1490 = vpop.xlane.xlu0 %1489
    %v1491 = vsel %vm283, %v1417, 0.0
    %1492 = vadd.xlane.f32.xlu0 %v1491
    %v1493 = vpop.xlane.xlu0 %1492
    %v1494 = vsel %vm283, %v1418, 0.0
    %1495 = vadd.xlane.f32.xlu0 %v1494
    %v1496 = vpop.xlane.xlu0 %1495
    %v1497 = vsel %vm283, %v1419, 0.0
    %1498 = vadd.xlane.f32.xlu0 %v1497
    %v1499 = vpop.xlane.xlu0 %1498
    %v1500 = vsel %vm283, %v1420, 0.0
    %1501 = vadd.xlane.f32.xlu0 %v1500
    %v1502 = vpop.xlane.xlu0 %1501
    %v1503 = vsel %vm283, %v1421, 0.0
    %1504 = vadd.xlane.f32.xlu0 %v1503
    %v1505 = vpop.xlane.xlu0 %1504
    %v1506 = vsel %vm283, %v1422, 0.0
    %1507 = vadd.xlane.f32.xlu0 %v1506
    %v1508 = vpop.xlane.xlu0 %1507
    %v1509 = vsel %vm283, %v1423, 0.0
    %1510 = vadd.xlane.f32.xlu0 %v1509
    %v1511 = vpop.xlane.xlu0 %1510
    %v1512 = vsel %vm283, %v1424, 0.0
    %1513 = vadd.xlane.f32.xlu0 %v1512
    %v1514 = vpop.xlane.xlu0 %1513
    %v1545 = vlaneseq
    %v1546 = vand.u32 %v1545, 127
    %v1547 = vlaneseq
    %v1548 = vshrl.u32 %v1547, 7
    %v1549 = vsub.s32 %v1546, %v1548
    %v1550 = vrot.slane %v1427, %v1549
    %v1551 = vadd.s32 %v1546, 4294967288
    %v1552 = vlaneseq
    %v1553 = vshrl.u32 %v1552, 7
    %v1554 = vsub.s32 %v1551, %v1553
    %v1555 = vrot.slane %v1430, %v1554
    %vm1556 = vcmask 130112
    %v1557 = vsel %vm1556, %v1555, %v1550
    %v1558 = vadd.s32 %v1546, 4294967280
    %v1559 = vlaneseq
    %v1560 = vshrl.u32 %v1559, 7
    %v1561 = vsub.s32 %v1558, %v1560
    %v1562 = vrot.slane %v1433, %v1561
    %vm1563 = vcmask 195712
    %v1564 = vsel %vm1563, %v1562, %v1557
    %v1565 = vadd.s32 %v1546, 4294967272
    %v1566 = vlaneseq
    %v1567 = vshrl.u32 %v1566, 7
    %v1568 = vsub.s32 %v1565, %v1567
    %v1569 = vrot.slane %v1436, %v1568
    %vm1570 = vcmask 261312
    %v1571 = vsel %vm1570, %v1569, %v1564
    %v1572 = vadd.s32 %v1546, 4294967264
    %v1573 = vlaneseq
    %v1574 = vshrl.u32 %v1573, 7
    %v1575 = vsub.s32 %v1572, %v1574
    %v1576 = vrot.slane %v1439, %v1575
    %vm1577 = vcmask 326912
    %v1578 = vsel %vm1577, %v1576, %v1571
    %v1579 = vadd.s32 %v1546, 4294967256
    %v1580 = vlaneseq
    %v1581 = vshrl.u32 %v1580, 7
    %v1582 = vsub.s32 %v1579, %v1581
    %v1583 = vrot.slane %v1442, %v1582
    %vm1584 = vcmask 392512
    %v1585 = vsel %vm1584, %v1583, %v1578
    %v1586 = vlaneseq
    %v1587 = vshrl.u32 %v1586, 7
    %v1588 = vsub.s32 %v1546, %v1587
    %v1589 = vrot.slane %v1445, %v1588
    %v1590 = vlaneseq
    %v1591 = vshrl.u32 %v1590, 7
    %v1592 = vsub.s32 %v1551, %v1591
    %v1593 = vrot.slane %v1448, %v1592
    %v1594 = vsel %vm1556, %v1593, %v1589
    %v1595 = vlaneseq
    %v1596 = vshrl.u32 %v1595, 7
    %v1597 = vsub.s32 %v1558, %v1596
    %v1598 = vrot.slane %v1451, %v1597
    %v1599 = vsel %vm1563, %v1598, %v1594
    %v1600 = vlaneseq
    %v1601 = vshrl.u32 %v1600, 7
    %v1602 = vsub.s32 %v1565, %v1601
    %v1603 = vrot.slane %v1454, %v1602
    %v1604 = vsel %vm1570, %v1603, %v1599
    %v1605 = vlaneseq
    %v1606 = vshrl.u32 %v1605, 7
    %v1607 = vsub.s32 %v1572, %v1606
    %v1608 = vrot.slane %v1457, %v1607
    %v1609 = vsel %vm1577, %v1608, %v1604
    %v1610 = vlaneseq
    %v1611 = vshrl.u32 %v1610, 7
    %v1612 = vsub.s32 %v1579, %v1611
    %v1613 = vrot.slane %v1460, %v1612
    %v1614 = vsel %vm1584, %v1613, %v1609
    %v1615 = vlaneseq
    %v1616 = vshrl.u32 %v1615, 7
    %v1617 = vsub.s32 %v1546, %v1616
    %v1618 = vrot.slane %v1463, %v1617
    %v1619 = vlaneseq
    %v1620 = vshrl.u32 %v1619, 7
    %v1621 = vsub.s32 %v1551, %v1620
    %v1622 = vrot.slane %v1466, %v1621
    %v1623 = vsel %vm1556, %v1622, %v1618
    %v1624 = vlaneseq
    %v1625 = vshrl.u32 %v1624, 7
    %v1626 = vsub.s32 %v1558, %v1625
    %v1627 = vrot.slane %v1469, %v1626
    %v1628 = vsel %vm1563, %v1627, %v1623
    %v1629 = vlaneseq
    %v1630 = vshrl.u32 %v1629, 7
    %v1631 = vsub.s32 %v1565, %v1630
    %v1632 = vrot.slane %v1472, %v1631
    %v1633 = vsel %vm1570, %v1632, %v1628
    %v1634 = vlaneseq
    %v1635 = vshrl.u32 %v1634, 7
    %v1636 = vsub.s32 %v1572, %v1635
    %v1637 = vrot.slane %v1475, %v1636
    %v1638 = vsel %vm1577, %v1637, %v1633
    %v1639 = vlaneseq
    %v1640 = vshrl.u32 %v1639, 7
    %v1641 = vsub.s32 %v1579, %v1640
    %v1642 = vrot.slane %v1478, %v1641
    %v1643 = vsel %vm1584, %v1642, %v1638
    %v1644 = vlaneseq
    %v1645 = vshrl.u32 %v1644, 7
    %v1646 = vsub.s32 %v1546, %v1645
    %v1647 = vrot.slane %v1481, %v1646
    %v1648 = vlaneseq
    %v1649 = vshrl.u32 %v1648, 7
    %v1650 = vsub.s32 %v1551, %v1649
    %v1651 = vrot.slane %v1484, %v1650
    %v1652 = vsel %vm1556, %v1651, %v1647
    %v1653 = vlaneseq
    %v1654 = vshrl.u32 %v1653, 7
    %v1655 = vsub.s32 %v1558, %v1654
    %v1656 = vrot.slane %v1487, %v1655
    %v1657 = vsel %vm1563, %v1656, %v1652
    %v1658 = vlaneseq
    %v1659 = vshrl.u32 %v1658, 7
    %v1660 = vsub.s32 %v1565, %v1659
    %v1661 = vrot.slane %v1490, %v1660
    %v1662 = vsel %vm1570, %v1661, %v1657
    %v1663 = vlaneseq
    %v1664 = vshrl.u32 %v1663, 7
    %v1665 = vsub.s32 %v1572, %v1664
    %v1666 = vrot.slane %v1493, %v1665
    %v1667 = vsel %vm1577, %v1666, %v1662
    %v1668 = vlaneseq
    %v1669 = vshrl.u32 %v1668, 7
    %v1670 = vsub.s32 %v1579, %v1669
    %v1671 = vrot.slane %v1496, %v1670
    %v1672 = vsel %vm1584, %v1671, %v1667
    %v1673 = vlaneseq
    %v1674 = vshrl.u32 %v1673, 7
    %v1675 = vsub.s32 %v1546, %v1674
    %v1676 = vrot.slane %v1499, %v1675
    %v1677 = vlaneseq
    %v1678 = vshrl.u32 %v1677, 7
    %v1679 = vsub.s32 %v1551, %v1678
    %v1680 = vrot.slane %v1502, %v1679
    %v1681 = vsel %vm1556, %v1680, %v1676
    %v1682 = vlaneseq
    %v1683 = vshrl.u32 %v1682, 7
    %v1684 = vsub.s32 %v1558, %v1683
    %v1685 = vrot.slane %v1505, %v1684
    %v1686 = vsel %vm1563, %v1685, %v1681
    %v1687 = vlaneseq
    %v1688 = vshrl.u32 %v1687, 7
    %v1689 = vsub.s32 %v1565, %v1688
    %v1690 = vrot.slane %v1508, %v1689
    %v1691 = vsel %vm1570, %v1690, %v1686
    %v1692 = vlaneseq
    %v1693 = vshrl.u32 %v1692, 7
    %v1694 = vsub.s32 %v1572, %v1693
    %v1695 = vrot.slane %v1511, %v1694
    %v1696 = vsel %vm1577, %v1695, %v1691
    %v1697 = vlaneseq
    %v1698 = vshrl.u32 %v1697, 7
    %v1699 = vsub.s32 %v1579, %v1698
    %v1700 = vrot.slane %v1514, %v1699
    %v1701 = vsel %vm1584, %v1700, %v1696
    %vm1702 = vcmask 1041409
    %v1703 = vsel %vm1702, %v1614, %v1585
    %vm1704 = vcmask 1042434
    %v1705 = vsel %vm1704, %v1643, %v1703
    %vm1706 = vcmask 1043459
    %v1707 = vsel %vm1706, %v1672, %v1705
    %vm1708 = vcmask 1044484
    %v1709 = vsel %vm1708, %v1701, %v1707
    %vm1711 = vcmask 389120
    %1712 = vst.msk [vmem:[#allocation6] sm:$0x1f] %vm1711, %v1709
    %v1714 = vsel %vm283, %v892, 0
    %v1717 = vsel %vm283, %v893, 0
    %1719 = vmatprep.subr.mxu0 0.0
    %1720 = vmatpush1.msra.mxu0 0.0
    %1721 = vmatprep.subr.mxu0 0.0
    %1722 = vmatpush1.msra.mxu0 0.0
    %1723 = vmatprep.subr.mxu0 0.0
    %1724 = vmatpush1.msra.mxu0 0.0
    %1725 = vmatprep.subr.mxu0 0.0
    %1726 = vmatpush1.msra.mxu0 0.0
    %1727 = vmatprep.subr.mxu0 0.0
    %1728 = vmatpush1.msra.mxu0 0.0
    %1729 = vmatprep.subr.mxu0 0.0
    %1730 = vmatpush1.msra.mxu0 0.0
    %1731 = vmatprep.subr.mxu0 0.0
    %1732 = vmatpush1.msra.mxu0 0.0
    %1733 = vmatprep.subr.mxu0 0.0
    %1734 = vmatpush1.msra.mxu0 0.0
    %1735 = vmatprep.subr.mxu0 0.0
    %1736 = vmatpush1.msra.mxu0 0.0
    %1737 = vmatprep.subr.mxu0 0.0
    %1738 = vmatpush1.msra.mxu0 0.0
    %1739 = vmatprep.subr.mxu0 0.0
    %1740 = vmatpush1.msra.mxu0 0.0
    %1741 = vmatprep.subr.mxu0 0.0
    %1742 = vmatpush1.msra.mxu0 0.0
    %1743 = vmatprep.subr.mxu0 0.0
    %1744 = vmatpush1.msra.mxu0 0.0
    %1745 = vmatprep.subr.mxu0 0.0
    %1746 = vmatpush1.msra.mxu0 0.0
    %1747 = vmatprep.subr.mxu0 0.0
    %1748 = vmatpush1.msra.mxu0 %v362
    %1749 = vmatprep.subr.mxu0 0.0
    %1750 = vmatpush1.msra.mxu0 %v357
    %1751 = vmatprep.subr.mxu0 0.0
    %1752 = vmatpush2.msra.mxu0 0.0
    %1753 = vmatprep.subr.mxu0 0.0
    %1754 = vmatpush2.msra.mxu0 0.0
    %1755 = vmatprep.subr.mxu0 0.0
    %1756 = vmatpush2.msra.mxu0 0.0
    %1757 = vmatprep.subr.mxu0 0.0
    %1758 = vmatpush2.msra.mxu0 0.0
    %1759 = vmatprep.subr.mxu0 0.0
    %1760 = vmatpush2.msra.mxu0 0.0
    %1761 = vmatprep.subr.mxu0 0.0
    %1762 = vmatpush2.msra.mxu0 0.0
    %1763 = vmatprep.subr.mxu0 0.0
    %1764 = vmatpush2.msra.mxu0 0.0
    %1765 = vmatprep.subr.mxu0 0.0
    %1766 = vmatpush2.msra.mxu0 0.0
    %1767 = vmatprep.subr.mxu0 0.0
    %1768 = vmatpush2.msra.mxu0 0.0
    %1769 = vmatprep.subr.mxu0 0.0
    %1770 = vmatpush2.msra.mxu0 0.0
    %1771 = vmatprep.subr.mxu0 0.0
    %1772 = vmatpush2.msra.mxu0 0.0
    %1773 = vmatprep.subr.mxu0 0.0
    %1774 = vmatpush2.msra.mxu0 0.0
    %1775 = vmatprep.subr.mxu0 0.0
    %1776 = vmatpush2.msra.mxu0 0.0
    %1777 = vmatprep.subr.mxu0 0.0
    %1778 = vmatpush2.msra.mxu0 0.0
    %1779 = vmatprep.subr.mxu0 0.0
    %1780 = vmatpush2.msra.mxu0 0.0
    %1781 = vmatprep.subr.mxu0 0.0
    %1782 = vmatpush2.msra.mxu0 0.0
    %1783 = vmatprep.mubr.f32.mxu0 0.0
    %1784 = vmatmul.mubr.f32.gmra.mxu0 %v1714
    %v1785 = vpop.f32.mrf.mxu0
    %v1786 = vadd.f32 0.0, %v1785
    %v1787 = vpop.f32.mrf.mxu0
    %1788 = vmatprep.mubr.f32.mxu0 0.0
    %1789 = vmatmul.mubr.f32.gmra.mxu0 %v1717
    %v1790 = vpop.f32.mrf.mxu0
    %v1791 = vadd.f32 0.0, %v1790
    %v1792 = vpop.f32.mrf.mxu0
    %1793 = vdwg.mxu0
    %v1795 = vsel %vm283, %v894, 0
    %v1798 = vsel %vm283, %v895, 0
    %1800 = vmatprep.subr.mxu0 0.0
    %1801 = vmatpush1.msra.mxu0 0.0
    %1802 = vmatprep.subr.mxu0 0.0
    %1803 = vmatpush1.msra.mxu0 0.0
    %1804 = vmatprep.subr.mxu0 0.0
    %1805 = vmatpush1.msra.mxu0 0.0
    %1806 = vmatprep.subr.mxu0 0.0
    %1807 = vmatpush1.msra.mxu0 0.0
    %1808 = vmatprep.subr.mxu0 0.0
    %1809 = vmatpush1.msra.mxu0 0.0
    %1810 = vmatprep.subr.mxu0 0.0
    %1811 = vmatpush1.msra.mxu0 0.0
    %1812 = vmatprep.subr.mxu0 0.0
    %1813 = vmatpush1.msra.mxu0 0.0
    %1814 = vmatprep.subr.mxu0 0.0
    %1815 = vmatpush1.msra.mxu0 0.0
    %1816 = vmatprep.subr.mxu0 0.0
    %1817 = vmatpush1.msra.mxu0 0.0
    %1818 = vmatprep.subr.mxu0 0.0
    %1819 = vmatpush1.msra.mxu0 0.0
    %1820 = vmatprep.subr.mxu0 0.0
    %1821 = vmatpush1.msra.mxu0 0.0
    %1822 = vmatprep.subr.mxu0 0.0
    %1823 = vmatpush1.msra.mxu0 0.0
    %1824 = vmatprep.subr.mxu0 0.0
    %1825 = vmatpush1.msra.mxu0 0.0
    %1826 = vmatprep.subr.mxu0 0.0
    %1827 = vmatpush1.msra.mxu0 0.0
    %1828 = vmatprep.subr.mxu0 0.0
    %1829 = vmatpush1.msra.mxu0 %v362
    %1830 = vmatprep.subr.mxu0 0.0
    %1831 = vmatpush1.msra.mxu0 %v357
    %1832 = vmatprep.subr.mxu0 0.0
    %1833 = vmatpush2.msra.mxu0 0.0
    %1834 = vmatprep.subr.mxu0 0.0
    %1835 = vmatpush2.msra.mxu0 0.0
    %1836 = vmatprep.subr.mxu0 0.0
    %1837 = vmatpush2.msra.mxu0 0.0
    %1838 = vmatprep.subr.mxu0 0.0
    %1839 = vmatpush2.msra.mxu0 0.0
    %1840 = vmatprep.subr.mxu0 0.0
    %1841 = vmatpush2.msra.mxu0 0.0
    %1842 = vmatprep.subr.mxu0 0.0
    %1843 = vmatpush2.msra.mxu0 0.0
    %1844 = vmatprep.subr.mxu0 0.0
    %1845 = vmatpush2.msra.mxu0 0.0
    %1846 = vmatprep.subr.mxu0 0.0
    %1847 = vmatpush2.msra.mxu0 0.0
    %1848 = vmatprep.subr.mxu0 0.0
    %1849 = vmatpush2.msra.mxu0 0.0
    %1850 = vmatprep.subr.mxu0 0.0
    %1851 = vmatpush2.msra.mxu0 0.0
    %1852 = vmatprep.subr.mxu0 0.0
    %1853 = vmatpush2.msra.mxu0 0.0
    %1854 = vmatprep.subr.mxu0 0.0
    %1855 = vmatpush2.msra.mxu0 0.0
    %1856 = vmatprep.subr.mxu0 0.0
    %1857 = vmatpush2.msra.mxu0 0.0
    %1858 = vmatprep.subr.mxu0 0.0
    %1859 = vmatpush2.msra.mxu0 0.0
    %1860 = vmatprep.subr.mxu0 0.0
    %1861 = vmatpush2.msra.mxu0 0.0
    %1862 = vmatprep.subr.mxu0 0.0
    %1863 = vmatpush2.msra.mxu0 0.0
    %1864 = vmatprep.mubr.f32.mxu0 0.0
    %1865 = vmatmul.mubr.f32.gmra.mxu0 %v1795
    %v1866 = vpop.f32.mrf.mxu0
    %v1867 = vadd.f32 0.0, %v1866
    %v1868 = vpop.f32.mrf.mxu0
    %1869 = vmatprep.mubr.f32.mxu0 0.0
    %1870 = vmatmul.mubr.f32.gmra.mxu0 %v1798
    %v1871 = vpop.f32.mrf.mxu0
    %v1872 = vadd.f32 0.0, %v1871
    %v1873 = vpop.f32.mrf.mxu0
    %1874 = vdwg.mxu0
    %v1876 = vsel %vm283, %v896, 0
    %v1879 = vsel %vm283, %v897, 0
    %1881 = vmatprep.subr.mxu0 0.0
    %1882 = vmatpush1.msra.mxu0 0.0
    %1883 = vmatprep.subr.mxu0 0.0
    %1884 = vmatpush1.msra.mxu0 0.0
    %1885 = vmatprep.subr.mxu0 0.0
    %1886 = vmatpush1.msra.mxu0 0.0
    %1887 = vmatprep.subr.mxu0 0.0
    %1888 = vmatpush1.msra.mxu0 0.0
    %1889 = vmatprep.subr.mxu0 0.0
    %1890 = vmatpush1.msra.mxu0 0.0
    %1891 = vmatprep.subr.mxu0 0.0
    %1892 = vmatpush1.msra.mxu0 0.0
    %1893 = vmatprep.subr.mxu0 0.0
    %1894 = vmatpush1.msra.mxu0 0.0
    %1895 = vmatprep.subr.mxu0 0.0
    %1896 = vmatpush1.msra.mxu0 0.0
    %1897 = vmatprep.subr.mxu0 0.0
    %1898 = vmatpush1.msra.mxu0 0.0
    %1899 = vmatprep.subr.mxu0 0.0
    %1900 = vmatpush1.msra.mxu0 0.0
    %1901 = vmatprep.subr.mxu0 0.0
    %1902 = vmatpush1.msra.mxu0 0.0
    %1903 = vmatprep.subr.mxu0 0.0
    %1904 = vmatpush1.msra.mxu0 0.0
    %1905 = vmatprep.subr.mxu0 0.0
    %1906 = vmatpush1.msra.mxu0 0.0
    %1907 = vmatprep.subr.mxu0 0.0
    %1908 = vmatpush1.msra.mxu0 0.0
    %1909 = vmatprep.subr.mxu0 0.0
    %1910 = vmatpush1.msra.mxu0 %v362
    %1911 = vmatprep.subr.mxu0 0.0
    %1912 = vmatpush1.msra.mxu0 %v357
    %1913 = vmatprep.subr.mxu0 0.0
    %1914 = vmatpush2.msra.mxu0 0.0
    %1915 = vmatprep.subr.mxu0 0.0
    %1916 = vmatpush2.msra.mxu0 0.0
    %1917 = vmatprep.subr.mxu0 0.0
    %1918 = vmatpush2.msra.mxu0 0.0
    %1919 = vmatprep.subr.mxu0 0.0
    %1920 = vmatpush2.msra.mxu0 0.0
    %1921 = vmatprep.subr.mxu0 0.0
    %1922 = vmatpush2.msra.mxu0 0.0
    %1923 = vmatprep.subr.mxu0 0.0
    %1924 = vmatpush2.msra.mxu0 0.0
    %1925 = vmatprep.subr.mxu0 0.0
    %1926 = vmatpush2.msra.mxu0 0.0
    %1927 = vmatprep.subr.mxu0 0.0
    %1928 = vmatpush2.msra.mxu0 0.0
    %1929 = vmatprep.subr.mxu0 0.0
    %1930 = vmatpush2.msra.mxu0 0.0
    %1931 = vmatprep.subr.mxu0 0.0
    %1932 = vmatpush2.msra.mxu0 0.0
    %1933 = vmatprep.subr.mxu0 0.0
    %1934 = vmatpush2.msra.mxu0 0.0
    %1935 = vmatprep.subr.mxu0 0.0
    %1936 = vmatpush2.msra.mxu0 0.0
    %1937 = vmatprep.subr.mxu0 0.0
    %1938 = vmatpush2.msra.mxu0 0.0
    %1939 = vmatprep.subr.mxu0 0.0
    %1940 = vmatpush2.msra.mxu0 0.0
    %1941 = vmatprep.subr.mxu0 0.0
    %1942 = vmatpush2.msra.mxu0 0.0
    %1943 = vmatprep.subr.mxu0 0.0
    %1944 = vmatpush2.msra.mxu0 0.0
    %1945 = vmatprep.mubr.f32.mxu0 0.0
    %1946 = vmatmul.mubr.f32.gmra.mxu0 %v1876
    %v1947 = vpop.f32.mrf.mxu0
    %v1948 = vadd.f32 0.0, %v1947
    %v1949 = vpop.f32.mrf.mxu0
    %1950 = vmatprep.mubr.f32.mxu0 0.0
    %1951 = vmatmul.mubr.f32.gmra.mxu0 %v1879
    %v1952 = vpop.f32.mrf.mxu0
    %v1953 = vadd.f32 0.0, %v1952
    %v1954 = vpop.f32.mrf.mxu0
    %1955 = vdwg.mxu0
    %v1957 = vsel %vm283, %v898, 0
    %v1960 = vsel %vm283, %v899, 0
    %1962 = vmatprep.subr.mxu0 0.0
    %1963 = vmatpush1.msra.mxu0 0.0
    %1964 = vmatprep.subr.mxu0 0.0
    %1965 = vmatpush1.msra.mxu0 0.0
    %1966 = vmatprep.subr.mxu0 0.0
    %1967 = vmatpush1.msra.mxu0 0.0
    %1968 = vmatprep.subr.mxu0 0.0
    %1969 = vmatpush1.msra.mxu0 0.0
    %1970 = vmatprep.subr.mxu0 0.0
    %1971 = vmatpush1.msra.mxu0 0.0
    %1972 = vmatprep.subr.mxu0 0.0
    %1973 = vmatpush1.msra.mxu0 0.0
    %1974 = vmatprep.subr.mxu0 0.0
    %1975 = vmatpush1.msra.mxu0 0.0
    %1976 = vmatprep.subr.mxu0 0.0
    %1977 = vmatpush1.msra.mxu0 0.0
    %1978 = vmatprep.subr.mxu0 0.0
    %1979 = vmatpush1.msra.mxu0 0.0
    %1980 = vmatprep.subr.mxu0 0.0
    %1981 = vmatpush1.msra.mxu0 0.0
    %1982 = vmatprep.subr.mxu0 0.0
    %1983 = vmatpush1.msra.mxu0 0.0
    %1984 = vmatprep.subr.mxu0 0.0
    %1985 = vmatpush1.msra.mxu0 0.0
    %1986 = vmatprep.subr.mxu0 0.0
    %1987 = vmatpush1.msra.mxu0 0.0
    %1988 = vmatprep.subr.mxu0 0.0
    %1989 = vmatpush1.msra.mxu0 0.0
    %1990 = vmatprep.subr.mxu0 0.0
    %1991 = vmatpush1.msra.mxu0 %v362
    %1992 = vmatprep.subr.mxu0 0.0
    %1993 = vmatpush1.msra.mxu0 %v357
    %1994 = vmatprep.subr.mxu0 0.0
    %1995 = vmatpush2.msra.mxu0 0.0
    %1996 = vmatprep.subr.mxu0 0.0
    %1997 = vmatpush2.msra.mxu0 0.0
    %1998 = vmatprep.subr.mxu0 0.0
    %1999 = vmatpush2.msra.mxu0 0.0
    %2000 = vmatprep.subr.mxu0 0.0
    %2001 = vmatpush2.msra.mxu0 0.0
    %2002 = vmatprep.subr.mxu0 0.0
    %2003 = vmatpush2.msra.mxu0 0.0
    %2004 = vmatprep.subr.mxu0 0.0
    %2005 = vmatpush2.msra.mxu0 0.0
    %2006 = vmatprep.subr.mxu0 0.0
    %2007 = vmatpush2.msra.mxu0 0.0
    %2008 = vmatprep.subr.mxu0 0.0
    %2009 = vmatpush2.msra.mxu0 0.0
    %2010 = vmatprep.subr.mxu0 0.0
    %2011 = vmatpush2.msra.mxu0 0.0
    %2012 = vmatprep.subr.mxu0 0.0
    %2013 = vmatpush2.msra.mxu0 0.0
    %2014 = vmatprep.subr.mxu0 0.0
    %2015 = vmatpush2.msra.mxu0 0.0
    %2016 = vmatprep.subr.mxu0 0.0
    %2017 = vmatpush2.msra.mxu0 0.0
    %2018 = vmatprep.subr.mxu0 0.0
    %2019 = vmatpush2.msra.mxu0 0.0
    %2020 = vmatprep.subr.mxu0 0.0
    %2021 = vmatpush2.msra.mxu0 0.0
    %2022 = vmatprep.subr.mxu0 0.0
    %2023 = vmatpush2.msra.mxu0 0.0
    %2024 = vmatprep.subr.mxu0 0.0
    %2025 = vmatpush2.msra.mxu0 0.0
    %2026 = vmatprep.mubr.f32.mxu0 0.0
    %2027 = vmatmul.mubr.f32.gmra.mxu0 %v1957
    %v2028 = vpop.f32.mrf.mxu0
    %v2029 = vadd.f32 0.0, %v2028
    %v2030 = vpop.f32.mrf.mxu0
    %2031 = vmatprep.mubr.f32.mxu0 0.0
    %2032 = vmatmul.mubr.f32.gmra.mxu0 %v1960
    %v2033 = vpop.f32.mrf.mxu0
    %v2034 = vadd.f32 0.0, %v2033
    %v2035 = vpop.f32.mrf.mxu0
    %2036 = vdwg.mxu0
    %v2038 = vsel %vm283, %v900, 0
    %v2041 = vsel %vm283, %v901, 0
    %2043 = vmatprep.subr.mxu0 0.0
    %2044 = vmatpush1.msra.mxu0 0.0
    %2045 = vmatprep.subr.mxu0 0.0
    %2046 = vmatpush1.msra.mxu0 0.0
    %2047 = vmatprep.subr.mxu0 0.0
    %2048 = vmatpush1.msra.mxu0 0.0
    %2049 = vmatprep.subr.mxu0 0.0
    %2050 = vmatpush1.msra.mxu0 0.0
    %2051 = vmatprep.subr.mxu0 0.0
    %2052 = vmatpush1.msra.mxu0 0.0
    %2053 = vmatprep.subr.mxu0 0.0
    %2054 = vmatpush1.msra.mxu0 0.0
    %2055 = vmatprep.subr.mxu0 0.0
    %2056 = vmatpush1.msra.mxu0 0.0
    %2057 = vmatprep.subr.mxu0 0.0
    %2058 = vmatpush1.msra.mxu0 0.0
    %2059 = vmatprep.subr.mxu0 0.0
    %2060 = vmatpush1.msra.mxu0 0.0
    %2061 = vmatprep.subr.mxu0 0.0
    %2062 = vmatpush1.msra.mxu0 0.0
    %2063 = vmatprep.subr.mxu0 0.0
    %2064 = vmatpush1.msra.mxu0 0.0
    %2065 = vmatprep.subr.mxu0 0.0
    %2066 = vmatpush1.msra.mxu0 0.0
    %2067 = vmatprep.subr.mxu0 0.0
    %2068 = vmatpush1.msra.mxu0 0.0
    %2069 = vmatprep.subr.mxu0 0.0
    %2070 = vmatpush1.msra.mxu0 0.0
    %2071 = vmatprep.subr.mxu0 0.0
    %2072 = vmatpush1.msra.mxu0 %v362
    %2073 = vmatprep.subr.mxu0 0.0
    %2074 = vmatpush1.msra.mxu0 %v357
    %2075 = vmatprep.subr.mxu0 0.0
    %2076 = vmatpush2.msra.mxu0 0.0
    %2077 = vmatprep.subr.mxu0 0.0
    %2078 = vmatpush2.msra.mxu0 0.0
    %2079 = vmatprep.subr.mxu0 0.0
    %2080 = vmatpush2.msra.mxu0 0.0
    %2081 = vmatprep.subr.mxu0 0.0
    %2082 = vmatpush2.msra.mxu0 0.0
    %2083 = vmatprep.subr.mxu0 0.0
    %2084 = vmatpush2.msra.mxu0 0.0
    %2085 = vmatprep.subr.mxu0 0.0
    %2086 = vmatpush2.msra.mxu0 0.0
    %2087 = vmatprep.subr.mxu0 0.0
    %2088 = vmatpush2.msra.mxu0 0.0
    %2089 = vmatprep.subr.mxu0 0.0
    %2090 = vmatpush2.msra.mxu0 0.0
    %2091 = vmatprep.subr.mxu0 0.0
    %2092 = vmatpush2.msra.mxu0 0.0
    %2093 = vmatprep.subr.mxu0 0.0
    %2094 = vmatpush2.msra.mxu0 0.0
    %2095 = vmatprep.subr.mxu0 0.0
    %2096 = vmatpush2.msra.mxu0 0.0
    %2097 = vmatprep.subr.mxu0 0.0
    %2098 = vmatpush2.msra.mxu0 0.0
    %2099 = vmatprep.subr.mxu0 0.0
    %2100 = vmatpush2.msra.mxu0 0.0
    %2101 = vmatprep.subr.mxu0 0.0
    %2102 = vmatpush2.msra.mxu0 0.0
    %2103 = vmatprep.subr.mxu0 0.0
    %2104 = vmatpush2.msra.mxu0 0.0
    %2105 = vmatprep.subr.mxu0 0.0
    %2106 = vmatpush2.msra.mxu0 0.0
    %2107 = vmatprep.mubr.f32.mxu0 0.0
    %2108 = vmatmul.mubr.f32.gmra.mxu0 %v2038
    %v2109 = vpop.f32.mrf.mxu0
    %v2110 = vadd.f32 0.0, %v2109
    %v2111 = vpop.f32.mrf.mxu0
    %2112 = vmatprep.mubr.f32.mxu0 0.0
    %2113 = vmatmul.mubr.f32.gmra.mxu0 %v2041
    %v2114 = vpop.f32.mrf.mxu0
    %v2115 = vadd.f32 0.0, %v2114
    %v2116 = vpop.f32.mrf.mxu0
    %2117 = vdwg.mxu0
    %v2119 = vcombine.high %v101, %v101
    %v2121 = vunpack.c.l.s4 1966171168
    %v2122 = vunpack.c.0.s8 %v2121
    %v2123 = vlaneseq
    %v2124 = vshrl.u32 %v2123, 7
    %v2125 = vsub.s32 %v2122, %v2124
    %v2126 = vrot.slane %v101, %v2125
    %v2128 = vunpack.c.l.s4 1966171168
    %v2129 = vunpack.c.0.s8 %v2128
    %v2130 = vlaneseq
    %v2131 = vshrl.u32 %v2130, 7
    %v2132 = vsub.s32 %v2129, %v2131
    %v2133 = vrot.slane %v2119, %v2132
    %v2134 = vcombine.high %v2126, %v2126
    %v2136 = vunpack.c.l.s4 1966171168
    %v2137 = vunpack.c.0.s8 %v2136
    %v2138 = vlaneseq
    %v2139 = vshrl.u32 %v2138, 7
    %v2140 = vsub.s32 %v2137, %v2139
    %v2141 = vrot.slane %v2126, %v2140
    %v2143 = vunpack.c.l.s4 1966171168
    %v2144 = vunpack.c.0.s8 %v2143
    %v2145 = vlaneseq
    %v2146 = vshrl.u32 %v2145, 7
    %v2147 = vsub.s32 %v2144, %v2146
    %v2148 = vrot.slane %v2133, %v2147
    %v2150 = vunpack.c.l.s4 1966171168
    %v2151 = vunpack.c.0.s8 %v2150
    %v2152 = vlaneseq
    %v2153 = vshrl.u32 %v2152, 7
    %v2154 = vsub.s32 %v2151, %v2153
    %v2155 = vrot.slane %v2134, %v2154
    %v2156 = vcombine.high %v2141, %v2141
    %v2157 = vcombine.high %v2155, %v2155
    %v2158 = vlaneseq
    %v2159 = vshrl.u32 %v2158, 7
    %v2160 = vsub.s32 0, %v2159
    %v2161 = vrot.slane %v2141, %v2160
    %v2162 = vlaneseq
    %v2163 = vshrl.u32 %v2162, 7
    %v2164 = vsub.s32 0, %v2163
    %v2165 = vrot.slane %v2155, %v2164
    %v2166 = vlaneseq
    %v2167 = vshrl.u32 %v2166, 7
    %v2168 = vsub.s32 0, %v2167
    %v2169 = vrot.slane %v2156, %v2168
    %v2170 = vlaneseq
    %v2171 = vshrl.u32 %v2170, 7
    %v2172 = vsub.s32 0, %v2171
    %v2173 = vrot.slane %v2157, %v2172
    %v2174 = vlaneseq
    %v2175 = vshrl.u32 %v2174, 7
    %v2176 = vsub.s32 0, %v2175
    %v2177 = vrot.slane %v2148, %v2176
    %v2183 = vmul.f32 %v1786, %v2161
    %v2184 = vmul.f32 %v1791, %v2161
    %v2185 = vmul.f32 %v1867, %v2165
    %v2186 = vmul.f32 %v1872, %v2165
    %v2187 = vmul.f32 %v1948, %v2169
    %v2188 = vmul.f32 %v1953, %v2169
    %v2189 = vmul.f32 %v2029, %v2173
    %v2190 = vmul.f32 %v2034, %v2173
    %v2191 = vmul.f32 %v2110, %v2177
    %v2192 = vmul.f32 %v2115, %v2177
    %v2193 = vsel %vm365, %v2183, 0.0
    %v2194 = vsel %vm365, %v2185, 0.0
    %v2195 = vadd.f32 %v2193, %v2194
    %v2196 = vsel %vm365, %v2187, 0.0
    %v2197 = vadd.f32 %v2195, %v2196
    %v2198 = vsel %vm365, %v2189, 0.0
    %v2199 = vadd.f32 %v2197, %v2198
    %v2200 = vsel %vm365, %v2191, 0.0
    %v2201 = vadd.f32 %v2199, %v2200
    %v2202 = vsel %vm365, %v2184, 0.0
    %v2203 = vsel %vm365, %v2186, 0.0
    %v2204 = vadd.f32 %v2202, %v2203
    %v2205 = vsel %vm365, %v2188, 0.0
    %v2206 = vadd.f32 %v2204, %v2205
    %v2207 = vsel %vm365, %v2190, 0.0
    %v2208 = vadd.f32 %v2206, %v2207
    %v2209 = vsel %vm365, %v2192, 0.0
    %v2210 = vadd.f32 %v2208, %v2209
    %v2212 = vlaneseq
    %v2213 = vshrl.u32 %v2212, 7
    %v2214 = vsub.s32 0, %v2213
    %v2215 = vrot.slane %v280, %v2214
    %v2217 = vadd.f32 %v2201, %v2215
    %v2218 = vadd.f32 %v2210, %v2215
    %vm2219 = vcmp.gt.f32.partialorder %v2217, 0.0
    %vm2220 = vcmp.gt.f32.partialorder %v2218, 0.0
    %v2221 = vmul.f32 %v2217, 0.01
    %v2222 = vmul.f32 %v2218, 0.01
    %v2223 = vsel %vm2219, %v2217, %v2221
    %v2224 = vsel %vm2220, %v2218, %v2222
    %v2225 = vsel %vm365, %v2223, 0.0
    %2226 = vadd.xlane.f32.xlu0 %v2225
    %v2227 = vpop.xlane.xlu0 %2226
    %v2228 = vsel %vm365, %v2224, 0.0
    %2229 = vadd.xlane.f32.xlu0 %v2228
    %v2230 = vpop.xlane.xlu0 %2229
    %v2231 = vrcp.pop 40.0
    %v2232 = vmul.f32 %v2227, %v2231
    %v2233 = vmul.f32 %v2230, %v2231
    %v2234 = vsub.f32 %v2223, %v2232
    %v2235 = vsub.f32 %v2224, %v2233
    %v2236 = vmul.f32 %v2234, %v2234
    %v2237 = vmul.f32 %v2235, %v2235
    %v2238 = vsel %vm365, %v2236, 0.0
    %2239 = vadd.xlane.f32.xlu0 %v2238
    %v2240 = vpop.xlane.xlu0 %2239
    %v2241 = vsel %vm365, %v2237, 0.0
    %2242 = vadd.xlane.f32.xlu0 %v2241
    %v2243 = vpop.xlane.xlu0 %2242
    %v2244 = vmul.f32 %v2240, %v2231
    %v2245 = vmul.f32 %v2243, %v2231
    %v2246 = vadd.f32 %v2244, 1e-05
    %v2247 = vadd.f32 %v2245, 1e-05
    %v2248 = vrsqrt.pop %v2246
    %v2249 = vrsqrt.pop %v2247
    %v2250 = vmul.f32 %v2234, %v2248
    %v2251 = vmul.f32 %v2235, %v2249
    %v2253 = vlaneseq
    %v2254 = vshrl.u32 %v2253, 7
    %v2255 = vsub.s32 0, %v2254
    %v2256 = vrot.slane %v281, %v2255
    %v2258 = vmul.f32 %v2250, %v2256
    %v2259 = vmul.f32 %v2251, %v2256
    %v2261 = vlaneseq
    %v2262 = vshrl.u32 %v2261, 7
    %v2263 = vsub.s32 0, %v2262
    %v2264 = vrot.slane %v282, %v2263
    %v2266 = vadd.f32 %v2258, %v2264
    %v2267 = vadd.f32 %v2259, %v2264
    %v2268 = vld [vmem:[%s15] sm:$0xff]
    %v2269 = vld [vmem:[%s15 + $0x8] sm:$0xff]
    %v2270 = vld [vmem:[%s15 + $0x10] sm:$0xff]
    %v2271 = vld [vmem:[%s15 + $0x18] sm:$0xff]
    %v2272 = vld [vmem:[%s15 + $0x20] sm:$0xff]
    %v2273 = vld [vmem:[%s16] sm:$0x1f]
    %v2274 = vld [vmem:[%s17] sm:$0x1f]
    %v2275 = vld [vmem:[%s18] sm:$0x1f]
    %v2276 = vld [vmem:[%s19] sm:$0x1]
    %v2277 = vld [vmem:[%s20] sm:$0x1]
    %v2278 = vld [vmem:[%s21] sm:$0x1]
    %v2280 = vsel %vm365, %v2266, 0
    %v2283 = vsel %vm365, %v2267, 0
    %2285 = vmatprep.subr.mxu0 0.0
    %2286 = vmatpush1.msra.mxu0 0.0
    %2287 = vmatprep.subr.mxu0 0.0
    %2288 = vmatpush1.msra.mxu0 0.0
    %2289 = vmatprep.subr.mxu0 0.0
    %2290 = vmatpush1.msra.mxu0 0.0
    %2291 = vmatprep.subr.mxu0 0.0
    %2292 = vmatpush1.msra.mxu0 0.0
    %2293 = vmatprep.subr.mxu0 0.0
    %2294 = vmatpush1.msra.mxu0 0.0
    %2295 = vmatprep.subr.mxu0 0.0
    %2296 = vmatpush1.msra.mxu0 0.0
    %2297 = vmatprep.subr.mxu0 0.0
    %2298 = vmatpush1.msra.mxu0 0.0
    %2299 = vmatprep.subr.mxu0 0.0
    %2300 = vmatpush1.msra.mxu0 0.0
    %2301 = vmatprep.subr.mxu0 0.0
    %2302 = vmatpush1.msra.mxu0 0.0
    %2303 = vmatprep.subr.mxu0 0.0
    %2304 = vmatpush1.msra.mxu0 0.0
    %2305 = vmatprep.subr.mxu0 0.0
    %2306 = vmatpush1.msra.mxu0 0.0
    %2307 = vmatprep.subr.mxu0 0.0
    %2308 = vmatpush1.msra.mxu0 %v2272
    %2309 = vmatprep.subr.mxu0 0.0
    %2310 = vmatpush1.msra.mxu0 %v2271
    %2311 = vmatprep.subr.mxu0 0.0
    %2312 = vmatpush1.msra.mxu0 %v2270
    %2313 = vmatprep.subr.mxu0 0.0
    %2314 = vmatpush1.msra.mxu0 %v2269
    %2315 = vmatprep.subr.mxu0 0.0
    %2316 = vmatpush1.msra.mxu0 %v2268
    %2317 = vmatprep.subr.mxu0 0.0
    %2318 = vmatpush2.msra.mxu0 0.0
    %2319 = vmatprep.subr.mxu0 0.0
    %2320 = vmatpush2.msra.mxu0 0.0
    %2321 = vmatprep.subr.mxu0 0.0
    %2322 = vmatpush2.msra.mxu0 0.0
    %2323 = vmatprep.subr.mxu0 0.0
    %2324 = vmatpush2.msra.mxu0 0.0
    %2325 = vmatprep.subr.mxu0 0.0
    %2326 = vmatpush2.msra.mxu0 0.0
    %2327 = vmatprep.subr.mxu0 0.0
    %2328 = vmatpush2.msra.mxu0 0.0
    %2329 = vmatprep.subr.mxu0 0.0
    %2330 = vmatpush2.msra.mxu0 0.0
    %2331 = vmatprep.subr.mxu0 0.0
    %2332 = vmatpush2.msra.mxu0 0.0
    %2333 = vmatprep.subr.mxu0 0.0
    %2334 = vmatpush2.msra.mxu0 0.0
    %2335 = vmatprep.subr.mxu0 0.0
    %2336 = vmatpush2.msra.mxu0 0.0
    %2337 = vmatprep.subr.mxu0 0.0
    %2338 = vmatpush2.msra.mxu0 0.0
    %2339 = vmatprep.subr.mxu0 0.0
    %2340 = vmatpush2.msra.mxu0 0.0
    %2341 = vmatprep.subr.mxu0 0.0
    %2342 = vmatpush2.msra.mxu0 0.0
    %2343 = vmatprep.subr.mxu0 0.0
    %2344 = vmatpush2.msra.mxu0 0.0
    %2345 = vmatprep.subr.mxu0 0.0
    %2346 = vmatpush2.msra.mxu0 0.0
    %2347 = vmatprep.subr.mxu0 0.0
    %2348 = vmatpush2.msra.mxu0 0.0
    %2349 = vmatprep.mubr.f32.mxu0 0.0
    %2350 = vmatmul.mubr.f32.gmra.mxu0 %v2280
    %v2351 = vpop.f32.mrf.mxu0
    %v2352 = vadd.f32 0.0, %v2351
    %v2353 = vpop.f32.mrf.mxu0
    %2354 = vmatprep.mubr.f32.mxu0 0.0
    %2355 = vmatmul.mubr.f32.gmra.mxu0 %v2283
    %v2356 = vpop.f32.mrf.mxu0
    %v2357 = vadd.f32 0.0, %v2356
    %v2358 = vpop.f32.mrf.mxu0
    %2359 = vdwg.mxu0
    %v2361 = vsel %vm365, %v2273, 0
    %v2364 = vsel %vm365, %v2352, 0
    %v2367 = vsel %vm365, %v2357, 0
    %2369 = vmatprep.subr.mxu0 0.0
    %2370 = vmatpush1.xpose.msra.mxu0 0.0
    %2371 = vmatprep.subr.mxu0 0.0
    %2372 = vmatpush1.xpose.msra.mxu0 0.0
    %2373 = vmatprep.subr.mxu0 0.0
    %2374 = vmatpush1.xpose.msra.mxu0 0.0
    %2375 = vmatprep.subr.mxu0 0.0
    %2376 = vmatpush1.xpose.msra.mxu0 0.0
    %2377 = vmatprep.subr.mxu0 0.0
    %2378 = vmatpush1.xpose.msra.mxu0 0.0
    %2379 = vmatprep.subr.mxu0 0.0
    %2380 = vmatpush1.xpose.msra.mxu0 0.0
    %2381 = vmatprep.subr.mxu0 0.0
    %2382 = vmatpush1.xpose.msra.mxu0 0.0
    %2383 = vmatprep.subr.mxu0 0.0
    %2384 = vmatpush1.xpose.msra.mxu0 0.0
    %2385 = vmatprep.subr.mxu0 0.0
    %2386 = vmatpush1.xpose.msra.mxu0 0.0
    %2387 = vmatprep.subr.mxu0 0.0
    %2388 = vmatpush1.xpose.msra.mxu0 0.0
    %2389 = vmatprep.subr.mxu0 0.0
    %2390 = vmatpush1.xpose.msra.mxu0 0.0
    %2391 = vmatprep.subr.mxu0 0.0
    %2392 = vmatpush1.xpose.msra.mxu0 0.0
    %2393 = vmatprep.subr.mxu0 0.0
    %2394 = vmatpush1.xpose.msra.mxu0 0.0
    %2395 = vmatprep.subr.mxu0 0.0
    %2396 = vmatpush1.xpose.msra.mxu0 0.0
    %2397 = vmatprep.subr.mxu0 0.0
    %2398 = vmatpush1.xpose.msra.mxu0 %v2367
    %2399 = vmatprep.subr.mxu0 0.0
    %2400 = vmatpush1.xpose.msra.mxu0 %v2364
    %2401 = vmatprep.subr.mxu0 0.0
    %2402 = vmatpush2.xpose.msra.mxu0 0.0
    %2403 = vmatprep.subr.mxu0 0.0
    %2404 = vmatpush2.xpose.msra.mxu0 0.0
    %2405 = vmatprep.subr.mxu0 0.0
    %2406 = vmatpush2.xpose.msra.mxu0 0.0
    %2407 = vmatprep.subr.mxu0 0.0
    %2408 = vmatpush2.xpose.msra.mxu0 0.0
    %2409 = vmatprep.subr.mxu0 0.0
    %2410 = vmatpush2.xpose.msra.mxu0 0.0
    %2411 = vmatprep.subr.mxu0 0.0
    %2412 = vmatpush2.xpose.msra.mxu0 0.0
    %2413 = vmatprep.subr.mxu0 0.0
    %2414 = vmatpush2.xpose.msra.mxu0 0.0
    %2415 = vmatprep.subr.mxu0 0.0
    %2416 = vmatpush2.xpose.msra.mxu0 0.0
    %2417 = vmatprep.subr.mxu0 0.0
    %2418 = vmatpush2.xpose.msra.mxu0 0.0
    %2419 = vmatprep.subr.mxu0 0.0
    %2420 = vmatpush2.xpose.msra.mxu0 0.0
    %2421 = vmatprep.subr.mxu0 0.0
    %2422 = vmatpush2.xpose.msra.mxu0 0.0
    %2423 = vmatprep.subr.mxu0 0.0
    %2424 = vmatpush2.xpose.msra.mxu0 0.0
    %2425 = vmatprep.subr.mxu0 0.0
    %2426 = vmatpush2.xpose.msra.mxu0 0.0
    %2427 = vmatprep.subr.mxu0 0.0
    %2428 = vmatpush2.xpose.msra.mxu0 0.0
    %2429 = vmatprep.subr.mxu0 0.0
    %2430 = vmatpush2.xpose.msra.mxu0 0.0
    %2431 = vmatprep.subr.mxu0 0.0
    %2432 = vmatpush2.xpose.msra.mxu0 0.0
    %2433 = vmatprep.mubr.f32.mxu0 0.0
    %2434 = vmatmul.mubr.f32.gmra.mxu0 %v2361
    %v2435 = vpop.f32.mrf.mxu0
    %v2436 = vadd.f32 0.0, %v2435
    %v2437 = vpop.f32.mrf.mxu0
    %2438 = vdwg.mxu0
    %v2440 = vsel %vm365, %v2274, 0
    %2442 = vmatprep.subr.mxu0 0.0
    %2443 = vmatpush1.xpose.msra.mxu0 0.0
    %2444 = vmatprep.subr.mxu0 0.0
    %2445 = vmatpush1.xpose.msra.mxu0 0.0
    %2446 = vmatprep.subr.mxu0 0.0
    %2447 = vmatpush1.xpose.msra.mxu0 0.0
    %2448 = vmatprep.subr.mxu0 0.0
    %2449 = vmatpush1.xpose.msra.mxu0 0.0
    %2450 = vmatprep.subr.mxu0 0.0
    %2451 = vmatpush1.xpose.msra.mxu0 0.0
    %2452 = vmatprep.subr.mxu0 0.0
    %2453 = vmatpush1.xpose.msra.mxu0 0.0
    %2454 = vmatprep.subr.mxu0 0.0
    %2455 = vmatpush1.xpose.msra.mxu0 0.0
    %2456 = vmatprep.subr.mxu0 0.0
    %2457 = vmatpush1.xpose.msra.mxu0 0.0
    %2458 = vmatprep.subr.mxu0 0.0
    %2459 = vmatpush1.xpose.msra.mxu0 0.0
    %2460 = vmatprep.subr.mxu0 0.0
    %2461 = vmatpush1.xpose.msra.mxu0 0.0
    %2462 = vmatprep.subr.mxu0 0.0
    %2463 = vmatpush1.xpose.msra.mxu0 0.0
    %2464 = vmatprep.subr.mxu0 0.0
    %2465 = vmatpush1.xpose.msra.mxu0 0.0
    %2466 = vmatprep.subr.mxu0 0.0
    %2467 = vmatpush1.xpose.msra.mxu0 0.0
    %2468 = vmatprep.subr.mxu0 0.0
    %2469 = vmatpush1.xpose.msra.mxu0 0.0
    %2470 = vmatprep.subr.mxu0 0.0
    %2471 = vmatpush1.xpose.msra.mxu0 %v2367
    %2472 = vmatprep.subr.mxu0 0.0
    %2473 = vmatpush1.xpose.msra.mxu0 %v2364
    %2474 = vmatprep.subr.mxu0 0.0
    %2475 = vmatpush2.xpose.msra.mxu0 0.0
    %2476 = vmatprep.subr.mxu0 0.0
    %2477 = vmatpush2.xpose.msra.mxu0 0.0
    %2478 = vmatprep.subr.mxu0 0.0
    %2479 = vmatpush2.xpose.msra.mxu0 0.0
    %2480 = vmatprep.subr.mxu0 0.0
    %2481 = vmatpush2.xpose.msra.mxu0 0.0
    %2482 = vmatprep.subr.mxu0 0.0
    %2483 = vmatpush2.xpose.msra.mxu0 0.0
    %2484 = vmatprep.subr.mxu0 0.0
    %2485 = vmatpush2.xpose.msra.mxu0 0.0
    %2486 = vmatprep.subr.mxu0 0.0
    %2487 = vmatpush2.xpose.msra.mxu0 0.0
    %2488 = vmatprep.subr.mxu0 0.0
    %2489 = vmatpush2.xpose.msra.mxu0 0.0
    %2490 = vmatprep.subr.mxu0 0.0
    %2491 = vmatpush2.xpose.msra.mxu0 0.0
    %2492 = vmatprep.subr.mxu0 0.0
    %2493 = vmatpush2.xpose.msra.mxu0 0.0
    %2494 = vmatprep.subr.mxu0 0.0
    %2495 = vmatpush2.xpose.msra.mxu0 0.0
    %2496 = vmatprep.subr.mxu0 0.0
    %2497 = vmatpush2.xpose.msra.mxu0 0.0
    %2498 = vmatprep.subr.mxu0 0.0
    %2499 = vmatpush2.xpose.msra.mxu0 0.0
    %2500 = vmatprep.subr.mxu0 0.0
    %2501 = vmatpush2.xpose.msra.mxu0 0.0
    %2502 = vmatprep.subr.mxu0 0.0
    %2503 = vmatpush2.xpose.msra.mxu0 0.0
    %2504 = vmatprep.subr.mxu0 0.0
    %2505 = vmatpush2.xpose.msra.mxu0 0.0
    %2506 = vmatprep.mubr.f32.mxu0 0.0
    %2507 = vmatmul.mubr.f32.gmra.mxu0 %v2440
    %v2508 = vpop.f32.mrf.mxu0
    %v2509 = vadd.f32 0.0, %v2508
    %v2510 = vpop.f32.mrf.mxu0
    %2511 = vdwg.mxu0
    %v2512 = vlaneseq
    %v2513 = vshrl.u32 %v2512, 7
    %v2514 = vsub.s32 0, %v2513
    %v2515 = vrot.slane %v2509, %v2514
    %2517 = vbcast.lane.b32.xlu0 %v2515, 256
    %v2518 = vpop.permute.xlu0 %2517
    %s2520 = sor.u32 256, 8
    %2521 = vbcast.lane.b32.xlu0 %v2515, %s2520
    %v2522 = vpop.permute.xlu0 %2521
    %v2523 = vlaneseq
    %v2524 = vshrl.u32 %v2523, 7
    %v2525 = vsub.s32 1, %v2524
    %v2526 = vrot.slane %v2509, %v2525
    %2528 = vbcast.lane.b32.xlu0 %v2526, 256
    %v2529 = vpop.permute.xlu0 %2528
    %s2531 = sor.u32 256, 8
    %2532 = vbcast.lane.b32.xlu0 %v2526, %s2531
    %v2533 = vpop.permute.xlu0 %2532
    %v2534 = vlaneseq
    %v2535 = vshrl.u32 %v2534, 7
    %v2536 = vsub.s32 2, %v2535
    %v2537 = vrot.slane %v2509, %v2536
    %2539 = vbcast.lane.b32.xlu0 %v2537, 256
    %v2540 = vpop.permute.xlu0 %2539
    %s2542 = sor.u32 256, 8
    %2543 = vbcast.lane.b32.xlu0 %v2537, %s2542
    %v2544 = vpop.permute.xlu0 %2543
    %v2545 = vlaneseq
    %v2546 = vshrl.u32 %v2545, 7
    %v2547 = vsub.s32 3, %v2546
    %v2548 = vrot.slane %v2509, %v2547
    %2550 = vbcast.lane.b32.xlu0 %v2548, 256
    %v2551 = vpop.permute.xlu0 %2550
    %s2553 = sor.u32 256, 8
    %2554 = vbcast.lane.b32.xlu0 %v2548, %s2553
    %v2555 = vpop.permute.xlu0 %2554
    %v2556 = vlaneseq
    %v2557 = vshrl.u32 %v2556, 7
    %v2558 = vsub.s32 4, %v2557
    %v2559 = vrot.slane %v2509, %v2558
    %2561 = vbcast.lane.b32.xlu0 %v2559, 256
    %v2562 = vpop.permute.xlu0 %2561
    %s2564 = sor.u32 256, 8
    %2565 = vbcast.lane.b32.xlu0 %v2559, %s2564
    %v2566 = vpop.permute.xlu0 %2565
    %v2568 = vcombine.high %v2436, %v2436
    %v2570 = vunpack.c.l.s4 1966171168
    %v2571 = vunpack.c.0.s8 %v2570
    %v2572 = vlaneseq
    %v2573 = vshrl.u32 %v2572, 7
    %v2574 = vsub.s32 %v2571, %v2573
    %v2575 = vrot.slane %v2436, %v2574
    %v2577 = vunpack.c.l.s4 1966171168
    %v2578 = vunpack.c.0.s8 %v2577
    %v2579 = vlaneseq
    %v2580 = vshrl.u32 %v2579, 7
    %v2581 = vsub.s32 %v2578, %v2580
    %v2582 = vrot.slane %v2568, %v2581
    %v2583 = vcombine.high %v2575, %v2575
    %v2585 = vunpack.c.l.s4 1966171168
    %v2586 = vunpack.c.0.s8 %v2585
    %v2587 = vlaneseq
    %v2588 = vshrl.u32 %v2587, 7
    %v2589 = vsub.s32 %v2586, %v2588
    %v2590 = vrot.slane %v2575, %v2589
    %v2592 = vunpack.c.l.s4 1966171168
    %v2593 = vunpack.c.0.s8 %v2592
    %v2594 = vlaneseq
    %v2595 = vshrl.u32 %v2594, 7
    %v2596 = vsub.s32 %v2593, %v2595
    %v2597 = vrot.slane %v2582, %v2596
    %v2599 = vunpack.c.l.s4 1966171168
    %v2600 = vunpack.c.0.s8 %v2599
    %v2601 = vlaneseq
    %v2602 = vshrl.u32 %v2601, 7
    %v2603 = vsub.s32 %v2600, %v2602
    %v2604 = vrot.slane %v2583, %v2603
    %v2605 = vcombine.high %v2590, %v2590
    %v2606 = vcombine.high %v2604, %v2604
    %v2607 = vlaneseq
    %v2608 = vshrl.u32 %v2607, 7
    %v2609 = vsub.s32 0, %v2608
    %v2610 = vrot.slane %v2590, %v2609
    %v2611 = vlaneseq
    %v2612 = vshrl.u32 %v2611, 7
    %v2613 = vsub.s32 0, %v2612
    %v2614 = vrot.slane %v2604, %v2613
    %v2615 = vlaneseq
    %v2616 = vshrl.u32 %v2615, 7
    %v2617 = vsub.s32 0, %v2616
    %v2618 = vrot.slane %v2605, %v2617
    %v2619 = vlaneseq
    %v2620 = vshrl.u32 %v2619, 7
    %v2621 = vsub.s32 0, %v2620
    %v2622 = vrot.slane %v2606, %v2621
    %v2623 = vlaneseq
    %v2624 = vshrl.u32 %v2623, 7
    %v2625 = vsub.s32 0, %v2624
    %v2626 = vrot.slane %v2597, %v2625
    %v2632 = vadd.f32 %v2518, %v2610
    %v2633 = vadd.f32 %v2522, %v2610
    %v2634 = vadd.f32 %v2529, %v2614
    %v2635 = vadd.f32 %v2533, %v2614
    %v2636 = vadd.f32 %v2540, %v2618
    %v2637 = vadd.f32 %v2544, %v2618
    %v2638 = vadd.f32 %v2551, %v2622
    %v2639 = vadd.f32 %v2555, %v2622
    %v2640 = vadd.f32 %v2562, %v2626
    %v2641 = vadd.f32 %v2566, %v2626
    %v2643 = vcombine.high %v2275, %v2275
    %v2645 = vunpack.c.l.s4 1966171168
    %v2646 = vunpack.c.0.s8 %v2645
    %v2647 = vlaneseq
    %v2648 = vshrl.u32 %v2647, 7
    %v2649 = vsub.s32 %v2646, %v2648
    %v2650 = vrot.slane %v2275, %v2649
    %v2652 = vunpack.c.l.s4 1966171168
    %v2653 = vunpack.c.0.s8 %v2652
    %v2654 = vlaneseq
    %v2655 = vshrl.u32 %v2654, 7
    %v2656 = vsub.s32 %v2653, %v2655
    %v2657 = vrot.slane %v2643, %v2656
    %v2658 = vcombine.high %v2650, %v2650
    %v2660 = vunpack.c.l.s4 1966171168
    %v2661 = vunpack.c.0.s8 %v2660
    %v2662 = vlaneseq
    %v2663 = vshrl.u32 %v2662, 7
    %v2664 = vsub.s32 %v2661, %v2663
    %v2665 = vrot.slane %v2650, %v2664
    %v2667 = vunpack.c.l.s4 1966171168
    %v2668 = vunpack.c.0.s8 %v2667
    %v2669 = vlaneseq
    %v2670 = vshrl.u32 %v2669, 7
    %v2671 = vsub.s32 %v2668, %v2670
    %v2672 = vrot.slane %v2657, %v2671
    %v2674 = vunpack.c.l.s4 1966171168
    %v2675 = vunpack.c.0.s8 %v2674
    %v2676 = vlaneseq
    %v2677 = vshrl.u32 %v2676, 7
    %v2678 = vsub.s32 %v2675, %v2677
    %v2679 = vrot.slane %v2658, %v2678
    %v2680 = vcombine.high %v2665, %v2665
    %v2681 = vcombine.high %v2679, %v2679
    %v2682 = vlaneseq
    %v2683 = vshrl.u32 %v2682, 7
    %v2684 = vsub.s32 0, %v2683
    %v2685 = vrot.slane %v2665, %v2684
    %v2686 = vlaneseq
    %v2687 = vshrl.u32 %v2686, 7
    %v2688 = vsub.s32 0, %v2687
    %v2689 = vrot.slane %v2679, %v2688
    %v2690 = vlaneseq
    %v2691 = vshrl.u32 %v2690, 7
    %v2692 = vsub.s32 0, %v2691
    %v2693 = vrot.slane %v2680, %v2692
    %v2694 = vlaneseq
    %v2695 = vshrl.u32 %v2694, 7
    %v2696 = vsub.s32 0, %v2695
    %v2697 = vrot.slane %v2681, %v2696
    %v2698 = vlaneseq
    %v2699 = vshrl.u32 %v2698, 7
    %v2700 = vsub.s32 0, %v2699
    %v2701 = vrot.slane %v2672, %v2700
    %2702 = vset.pattern.permute.xlu0 0
    %2703 = vperm.xlu0 %2702, %v2685
    %v2704 = vpop.permute.xlu0 %2703
    %2706 = vset.pattern.permute.xlu0 0
    %2707 = vperm.xlu0 %2706, %v2689
    %v2708 = vpop.permute.xlu0 %2707
    %2710 = vset.pattern.permute.xlu0 0
    %2711 = vperm.xlu0 %2710, %v2693
    %v2712 = vpop.permute.xlu0 %2711
    %2714 = vset.pattern.permute.xlu0 0
    %2715 = vperm.xlu0 %2714, %v2697
    %v2716 = vpop.permute.xlu0 %2715
    %2718 = vset.pattern.permute.xlu0 0
    %2719 = vperm.xlu0 %2718, %v2701
    %v2720 = vpop.permute.xlu0 %2719
    %v2722 = vmul.f32 %v265, %v2704
    %v2723 = vmul.f32 %v270, %v2704
    %v2724 = vmul.f32 %v265, %v2708
    %v2725 = vmul.f32 %v270, %v2708
    %v2726 = vmul.f32 %v265, %v2712
    %v2727 = vmul.f32 %v270, %v2712
    %v2728 = vmul.f32 %v265, %v2716
    %v2729 = vmul.f32 %v270, %v2716
    %v2730 = vmul.f32 %v265, %v2720
    %v2731 = vmul.f32 %v270, %v2720
    %v2732 = vadd.f32 %v2632, %v2722
    %v2733 = vadd.f32 %v2633, %v2723
    %v2734 = vadd.f32 %v2634, %v2724
    %v2735 = vadd.f32 %v2635, %v2725
    %v2736 = vadd.f32 %v2636, %v2726
    %v2737 = vadd.f32 %v2637, %v2727
    %v2738 = vadd.f32 %v2638, %v2728
    %v2739 = vadd.f32 %v2639, %v2729
    %v2740 = vadd.f32 %v2640, %v2730
    %v2741 = vadd.f32 %v2641, %v2731
    %vm2742 = vcmp.gt.f32.partialorder %v2732, 0.0
    %vm2743 = vcmp.gt.f32.partialorder %v2733, 0.0
    %vm2744 = vcmp.gt.f32.partialorder %v2734, 0.0
    %vm2745 = vcmp.gt.f32.partialorder %v2735, 0.0
    %vm2746 = vcmp.gt.f32.partialorder %v2736, 0.0
    %vm2747 = vcmp.gt.f32.partialorder %v2737, 0.0
    %vm2748 = vcmp.gt.f32.partialorder %v2738, 0.0
    %vm2749 = vcmp.gt.f32.partialorder %v2739, 0.0
    %vm2750 = vcmp.gt.f32.partialorder %v2740, 0.0
    %vm2751 = vcmp.gt.f32.partialorder %v2741, 0.0
    %v2752 = vmul.f32 %v2732, 0.2
    %v2753 = vmul.f32 %v2733, 0.2
    %v2754 = vmul.f32 %v2734, 0.2
    %v2755 = vmul.f32 %v2735, 0.2
    %v2756 = vmul.f32 %v2736, 0.2
    %v2757 = vmul.f32 %v2737, 0.2
    %v2758 = vmul.f32 %v2738, 0.2
    %v2759 = vmul.f32 %v2739, 0.2
    %v2760 = vmul.f32 %v2740, 0.2
    %v2761 = vmul.f32 %v2741, 0.2
    %v2762 = vsel %vm2742, %v2732, %v2752
    %v2763 = vsel %vm2743, %v2733, %v2753
    %v2764 = vsel %vm2744, %v2734, %v2754
    %v2765 = vsel %vm2745, %v2735, %v2755
    %v2766 = vsel %vm2746, %v2736, %v2756
    %v2767 = vsel %vm2747, %v2737, %v2757
    %v2768 = vsel %vm2748, %v2738, %v2758
    %v2769 = vsel %vm2749, %v2739, %v2759
    %v2770 = vsel %vm2750, %v2740, %v2760
    %v2771 = vsel %vm2751, %v2741, %v2761
    %v2772 = vsel %vm780, %v2762, -1e+30
    %v2773 = vsel %vm781, %v2763, -1e+30
    %v2774 = vsel %vm780, %v2764, -1e+30
    %v2775 = vsel %vm781, %v2765, -1e+30
    %v2776 = vsel %vm780, %v2766, -1e+30
    %v2777 = vsel %vm781, %v2767, -1e+30
    %v2778 = vsel %vm780, %v2768, -1e+30
    %v2779 = vsel %vm781, %v2769, -1e+30
    %v2780 = vsel %vm780, %v2770, -1e+30
    %v2781 = vsel %vm781, %v2771, -1e+30
    %v2782 = vsel %vm283, %v2772, -inf
    %2783 = vmax.xlane.f32.xlu0 %v2782
    %v2784 = vpop.xlane.xlu0 %2783
    %v2785 = vsel %vm283, %v2773, -inf
    %2786 = vmax.xlane.f32.xlu0 %v2785
    %v2787 = vpop.xlane.xlu0 %2786
    %v2788 = vsel %vm283, %v2774, -inf
    %2789 = vmax.xlane.f32.xlu0 %v2788
    %v2790 = vpop.xlane.xlu0 %2789
    %v2791 = vsel %vm283, %v2775, -inf
    %2792 = vmax.xlane.f32.xlu0 %v2791
    %v2793 = vpop.xlane.xlu0 %2792
    %v2794 = vsel %vm283, %v2776, -inf
    %2795 = vmax.xlane.f32.xlu0 %v2794
    %v2796 = vpop.xlane.xlu0 %2795
    %v2797 = vsel %vm283, %v2777, -inf
    %2798 = vmax.xlane.f32.xlu0 %v2797
    %v2799 = vpop.xlane.xlu0 %2798
    %v2800 = vsel %vm283, %v2778, -inf
    %2801 = vmax.xlane.f32.xlu0 %v2800
    %v2802 = vpop.xlane.xlu0 %2801
    %v2803 = vsel %vm283, %v2779, -inf
    %2804 = vmax.xlane.f32.xlu0 %v2803
    %v2805 = vpop.xlane.xlu0 %2804
    %v2806 = vsel %vm283, %v2780, -inf
    %2807 = vmax.xlane.f32.xlu0 %v2806
    %v2808 = vpop.xlane.xlu0 %2807
    %v2809 = vsel %vm283, %v2781, -inf
    %2810 = vmax.xlane.f32.xlu0 %v2809
    %v2811 = vpop.xlane.xlu0 %2810
    %v2812 = vsub.f32 %v2772, %v2784
    %v2813 = vsub.f32 %v2773, %v2787
    %v2814 = vsub.f32 %v2774, %v2790
    %v2815 = vsub.f32 %v2775, %v2793
    %v2816 = vsub.f32 %v2776, %v2796
    %v2817 = vsub.f32 %v2777, %v2799
    %v2818 = vsub.f32 %v2778, %v2802
    %v2819 = vsub.f32 %v2779, %v2805
    %v2820 = vsub.f32 %v2780, %v2808
    %v2821 = vsub.f32 %v2781, %v2811
    %v2822 = vmul.f32 %v2812, 1.442695
    %v2823 = vpow.pop %v2822
    %v2824 = vmul.f32 %v2813, 1.442695
    %v2825 = vpow.pop %v2824
    %v2826 = vmul.f32 %v2814, 1.442695
    %v2827 = vpow.pop %v2826
    %v2828 = vmul.f32 %v2815, 1.442695
    %v2829 = vpow.pop %v2828
    %v2830 = vmul.f32 %v2816, 1.442695
    %v2831 = vpow.pop %v2830
    %v2832 = vmul.f32 %v2817, 1.442695
    %v2833 = vpow.pop %v2832
    %v2834 = vmul.f32 %v2818, 1.442695
    %v2835 = vpow.pop %v2834
    %v2836 = vmul.f32 %v2819, 1.442695
    %v2837 = vpow.pop %v2836
    %v2838 = vmul.f32 %v2820, 1.442695
    %v2839 = vpow.pop %v2838
    %v2840 = vmul.f32 %v2821, 1.442695
    %v2841 = vpow.pop %v2840
    %v2842 = vsel %vm283, %v2823, 0.0
    %2843 = vadd.xlane.f32.xlu0 %v2842
    %v2844 = vpop.xlane.xlu0 %2843
    %v2845 = vsel %vm283, %v2825, 0.0
    %2846 = vadd.xlane.f32.xlu0 %v2845
    %v2847 = vpop.xlane.xlu0 %2846
    %v2848 = vsel %vm283, %v2827, 0.0
    %2849 = vadd.xlane.f32.xlu0 %v2848
    %v2850 = vpop.xlane.xlu0 %2849
    %v2851 = vsel %vm283, %v2829, 0.0
    %2852 = vadd.xlane.f32.xlu0 %v2851
    %v2853 = vpop.xlane.xlu0 %2852
    %v2854 = vsel %vm283, %v2831, 0.0
    %2855 = vadd.xlane.f32.xlu0 %v2854
    %v2856 = vpop.xlane.xlu0 %2855
    %v2857 = vsel %vm283, %v2833, 0.0
    %2858 = vadd.xlane.f32.xlu0 %v2857
    %v2859 = vpop.xlane.xlu0 %2858
    %v2860 = vsel %vm283, %v2835, 0.0
    %2861 = vadd.xlane.f32.xlu0 %v2860
    %v2862 = vpop.xlane.xlu0 %2861
    %v2863 = vsel %vm283, %v2837, 0.0
    %2864 = vadd.xlane.f32.xlu0 %v2863
    %v2865 = vpop.xlane.xlu0 %2864
    %v2866 = vsel %vm283, %v2839, 0.0
    %2867 = vadd.xlane.f32.xlu0 %v2866
    %v2868 = vpop.xlane.xlu0 %2867
    %v2869 = vsel %vm283, %v2841, 0.0
    %2870 = vadd.xlane.f32.xlu0 %v2869
    %v2871 = vpop.xlane.xlu0 %2870
    %v2872 = vrcp.pop %v2844
    %v2873 = vrcp.pop %v2847
    %v2874 = vrcp.pop %v2850
    %v2875 = vrcp.pop %v2853
    %v2876 = vrcp.pop %v2856
    %v2877 = vrcp.pop %v2859
    %v2878 = vrcp.pop %v2862
    %v2879 = vrcp.pop %v2865
    %v2880 = vrcp.pop %v2868
    %v2881 = vrcp.pop %v2871
    %v2882 = vmul.f32 %v2823, %v2872
    %v2883 = vmul.f32 %v2825, %v2873
    %v2884 = vmul.f32 %v2827, %v2874
    %v2885 = vmul.f32 %v2829, %v2875
    %v2886 = vmul.f32 %v2831, %v2876
    %v2887 = vmul.f32 %v2833, %v2877
    %v2888 = vmul.f32 %v2835, %v2878
    %v2889 = vmul.f32 %v2837, %v2879
    %v2890 = vmul.f32 %v2839, %v2880
    %v2891 = vmul.f32 %v2841, %v2881
    %2892 = vmatprep.subr.mxu0 0.0
    %2893 = vmatpush1.msra.mxu0 0.0
    %2894 = vmatprep.subr.mxu0 0.0
    %2895 = vmatpush1.msra.mxu0 0.0
    %2896 = vmatprep.subr.mxu0 0.0
    %2897 = vmatpush1.msra.mxu0 0.0
    %2898 = vmatprep.subr.mxu0 0.0
    %2899 = vmatpush1.msra.mxu0 0.0
    %2900 = vmatprep.subr.mxu0 0.0
    %2901 = vmatpush1.msra.mxu0 0.0
    %2902 = vmatprep.subr.mxu0 0.0
    %2903 = vmatpush1.msra.mxu0 0.0
    %2904 = vmatprep.subr.mxu0 0.0
    %2905 = vmatpush1.msra.mxu0 0.0
    %2906 = vmatprep.subr.mxu0 0.0
    %2907 = vmatpush1.msra.mxu0 0.0
    %2908 = vmatprep.subr.mxu0 0.0
    %2909 = vmatpush1.msra.mxu0 0.0
    %2910 = vmatprep.subr.mxu0 0.0
    %2911 = vmatpush1.msra.mxu0 0.0
    %2912 = vmatprep.subr.mxu0 0.0
    %2913 = vmatpush1.msra.mxu0 0.0
    %2914 = vmatprep.subr.mxu0 0.0
    %2915 = vmatpush1.msra.mxu0 0.0
    %2916 = vmatprep.subr.mxu0 0.0
    %2917 = vmatpush1.msra.mxu0 0.0
    %2918 = vmatprep.subr.mxu0 0.0
    %2919 = vmatpush1.msra.mxu0 0.0
    %2920 = vmatprep.subr.mxu0 0.0
    %2921 = vmatpush1.msra.mxu0 %v2883
    %2922 = vmatprep.subr.mxu0 0.0
    %2923 = vmatpush1.msra.mxu0 %v2882
    %2924 = vmatprep.subr.mxu0 0.0
    %2925 = vmatpush2.msra.mxu0 0.0
    %2926 = vmatprep.subr.mxu0 0.0
    %2927 = vmatpush2.msra.mxu0 0.0
    %2928 = vmatprep.subr.mxu0 0.0
    %2929 = vmatpush2.msra.mxu0 0.0
    %2930 = vmatprep.subr.mxu0 0.0
    %2931 = vmatpush2.msra.mxu0 0.0
    %2932 = vmatprep.subr.mxu0 0.0
    %2933 = vmatpush2.msra.mxu0 0.0
    %2934 = vmatprep.subr.mxu0 0.0
    %2935 = vmatpush2.msra.mxu0 0.0
    %2936 = vmatprep.subr.mxu0 0.0
    %2937 = vmatpush2.msra.mxu0 0.0
    %2938 = vmatprep.subr.mxu0 0.0
    %2939 = vmatpush2.msra.mxu0 0.0
    %2940 = vmatprep.subr.mxu0 0.0
    %2941 = vmatpush2.msra.mxu0 0.0
    %2942 = vmatprep.subr.mxu0 0.0
    %2943 = vmatpush2.msra.mxu0 0.0
    %2944 = vmatprep.subr.mxu0 0.0
    %2945 = vmatpush2.msra.mxu0 0.0
    %2946 = vmatprep.subr.mxu0 0.0
    %2947 = vmatpush2.msra.mxu0 0.0
    %2948 = vmatprep.subr.mxu0 0.0
    %2949 = vmatpush2.msra.mxu0 0.0
    %2950 = vmatprep.subr.mxu0 0.0
    %2951 = vmatpush2.msra.mxu0 0.0
    %2952 = vmatprep.subr.mxu0 0.0
    %2953 = vmatpush2.msra.mxu0 0.0
    %2954 = vmatprep.subr.mxu0 0.0
    %2955 = vmatpush2.msra.mxu0 0.0
    %2956 = vmatprep.mubr.f32.mxu0 0.0
    %2957 = vmatmul.mubr.f32.gmra.mxu0 %v903
    %v2958 = vpop.f32.mrf.mxu0
    %v2959 = vadd.f32 0.0, %v2958
    %v2960 = vpop.f32.mrf.mxu0
    %2961 = vmatprep.mubr.f32.mxu0 0.0
    %2962 = vmatmul.mubr.f32.gmra.mxu0 %v906
    %v2963 = vpop.f32.mrf.mxu0
    %v2964 = vadd.f32 0.0, %v2963
    %v2965 = vpop.f32.mrf.mxu0
    %2966 = vmatprep.mubr.f32.mxu0 0.0
    %2967 = vmatmul.mubr.f32.gmra.mxu0 %v909
    %v2968 = vpop.f32.mrf.mxu0
    %v2969 = vadd.f32 0.0, %v2968
    %v2970 = vpop.f32.mrf.mxu0
    %2971 = vmatprep.mubr.f32.mxu0 0.0
    %2972 = vmatmul.mubr.f32.gmra.mxu0 %v912
    %v2973 = vpop.f32.mrf.mxu0
    %v2974 = vadd.f32 0.0, %v2973
    %v2975 = vpop.f32.mrf.mxu0
    %2976 = vmatprep.mubr.f32.mxu0 0.0
    %2977 = vmatmul.mubr.f32.gmra.mxu0 %v915
    %v2978 = vpop.f32.mrf.mxu0
    %v2979 = vadd.f32 0.0, %v2978
    %v2980 = vpop.f32.mrf.mxu0
    %2981 = vmatprep.mubr.f32.mxu0 0.0
    %2982 = vmatmul.mubr.f32.gmra.mxu0 %v918
    %v2983 = vpop.f32.mrf.mxu0
    %v2984 = vadd.f32 0.0, %v2983
    %v2985 = vpop.f32.mrf.mxu0
    %2986 = vdwg.mxu0
    %2987 = vmatprep.subr.mxu0 0.0
    %2988 = vmatpush1.msra.mxu0 0.0
    %2989 = vmatprep.subr.mxu0 0.0
    %2990 = vmatpush1.msra.mxu0 0.0
    %2991 = vmatprep.subr.mxu0 0.0
    %2992 = vmatpush1.msra.mxu0 0.0
    %2993 = vmatprep.subr.mxu0 0.0
    %2994 = vmatpush1.msra.mxu0 0.0
    %2995 = vmatprep.subr.mxu0 0.0
    %2996 = vmatpush1.msra.mxu0 0.0
    %2997 = vmatprep.subr.mxu0 0.0
    %2998 = vmatpush1.msra.mxu0 0.0
    %2999 = vmatprep.subr.mxu0 0.0
    %3000 = vmatpush1.msra.mxu0 0.0
    %3001 = vmatprep.subr.mxu0 0.0
    %3002 = vmatpush1.msra.mxu0 0.0
    %3003 = vmatprep.subr.mxu0 0.0
    %3004 = vmatpush1.msra.mxu0 0.0
    %3005 = vmatprep.subr.mxu0 0.0
    %3006 = vmatpush1.msra.mxu0 0.0
    %3007 = vmatprep.subr.mxu0 0.0
    %3008 = vmatpush1.msra.mxu0 0.0
    %3009 = vmatprep.subr.mxu0 0.0
    %3010 = vmatpush1.msra.mxu0 0.0
    %3011 = vmatprep.subr.mxu0 0.0
    %3012 = vmatpush1.msra.mxu0 0.0
    %3013 = vmatprep.subr.mxu0 0.0
    %3014 = vmatpush1.msra.mxu0 0.0
    %3015 = vmatprep.subr.mxu0 0.0
    %3016 = vmatpush1.msra.mxu0 %v2885
    %3017 = vmatprep.subr.mxu0 0.0
    %3018 = vmatpush1.msra.mxu0 %v2884
    %3019 = vmatprep.subr.mxu0 0.0
    %3020 = vmatpush2.msra.mxu0 0.0
    %3021 = vmatprep.subr.mxu0 0.0
    %3022 = vmatpush2.msra.mxu0 0.0
    %3023 = vmatprep.subr.mxu0 0.0
    %3024 = vmatpush2.msra.mxu0 0.0
    %3025 = vmatprep.subr.mxu0 0.0
    %3026 = vmatpush2.msra.mxu0 0.0
    %3027 = vmatprep.subr.mxu0 0.0
    %3028 = vmatpush2.msra.mxu0 0.0
    %3029 = vmatprep.subr.mxu0 0.0
    %3030 = vmatpush2.msra.mxu0 0.0
    %3031 = vmatprep.subr.mxu0 0.0
    %3032 = vmatpush2.msra.mxu0 0.0
    %3033 = vmatprep.subr.mxu0 0.0
    %3034 = vmatpush2.msra.mxu0 0.0
    %3035 = vmatprep.subr.mxu0 0.0
    %3036 = vmatpush2.msra.mxu0 0.0
    %3037 = vmatprep.subr.mxu0 0.0
    %3038 = vmatpush2.msra.mxu0 0.0
    %3039 = vmatprep.subr.mxu0 0.0
    %3040 = vmatpush2.msra.mxu0 0.0
    %3041 = vmatprep.subr.mxu0 0.0
    %3042 = vmatpush2.msra.mxu0 0.0
    %3043 = vmatprep.subr.mxu0 0.0
    %3044 = vmatpush2.msra.mxu0 0.0
    %3045 = vmatprep.subr.mxu0 0.0
    %3046 = vmatpush2.msra.mxu0 0.0
    %3047 = vmatprep.subr.mxu0 0.0
    %3048 = vmatpush2.msra.mxu0 0.0
    %3049 = vmatprep.subr.mxu0 0.0
    %3050 = vmatpush2.msra.mxu0 0.0
    %3051 = vmatprep.mubr.f32.mxu0 0.0
    %3052 = vmatmul.mubr.f32.gmra.mxu0 %v903
    %v3053 = vpop.f32.mrf.mxu0
    %v3054 = vadd.f32 0.0, %v3053
    %v3055 = vpop.f32.mrf.mxu0
    %3056 = vmatprep.mubr.f32.mxu0 0.0
    %3057 = vmatmul.mubr.f32.gmra.mxu0 %v906
    %v3058 = vpop.f32.mrf.mxu0
    %v3059 = vadd.f32 0.0, %v3058
    %v3060 = vpop.f32.mrf.mxu0
    %3061 = vmatprep.mubr.f32.mxu0 0.0
    %3062 = vmatmul.mubr.f32.gmra.mxu0 %v909
    %v3063 = vpop.f32.mrf.mxu0
    %v3064 = vadd.f32 0.0, %v3063
    %v3065 = vpop.f32.mrf.mxu0
    %3066 = vmatprep.mubr.f32.mxu0 0.0
    %3067 = vmatmul.mubr.f32.gmra.mxu0 %v912
    %v3068 = vpop.f32.mrf.mxu0
    %v3069 = vadd.f32 0.0, %v3068
    %v3070 = vpop.f32.mrf.mxu0
    %3071 = vmatprep.mubr.f32.mxu0 0.0
    %3072 = vmatmul.mubr.f32.gmra.mxu0 %v915
    %v3073 = vpop.f32.mrf.mxu0
    %v3074 = vadd.f32 0.0, %v3073
    %v3075 = vpop.f32.mrf.mxu0
    %3076 = vmatprep.mubr.f32.mxu0 0.0
    %3077 = vmatmul.mubr.f32.gmra.mxu0 %v918
    %v3078 = vpop.f32.mrf.mxu0
    %v3079 = vadd.f32 0.0, %v3078
    %v3080 = vpop.f32.mrf.mxu0
    %3081 = vdwg.mxu0
    %3082 = vmatprep.subr.mxu0 0.0
    %3083 = vmatpush1.msra.mxu0 0.0
    %3084 = vmatprep.subr.mxu0 0.0
    %3085 = vmatpush1.msra.mxu0 0.0
    %3086 = vmatprep.subr.mxu0 0.0
    %3087 = vmatpush1.msra.mxu0 0.0
    %3088 = vmatprep.subr.mxu0 0.0
    %3089 = vmatpush1.msra.mxu0 0.0
    %3090 = vmatprep.subr.mxu0 0.0
    %3091 = vmatpush1.msra.mxu0 0.0
    %3092 = vmatprep.subr.mxu0 0.0
    %3093 = vmatpush1.msra.mxu0 0.0
    %3094 = vmatprep.subr.mxu0 0.0
    %3095 = vmatpush1.msra.mxu0 0.0
    %3096 = vmatprep.subr.mxu0 0.0
    %3097 = vmatpush1.msra.mxu0 0.0
    %3098 = vmatprep.subr.mxu0 0.0
    %3099 = vmatpush1.msra.mxu0 0.0
    %3100 = vmatprep.subr.mxu0 0.0
    %3101 = vmatpush1.msra.mxu0 0.0
    %3102 = vmatprep.subr.mxu0 0.0
    %3103 = vmatpush1.msra.mxu0 0.0
    %3104 = vmatprep.subr.mxu0 0.0
    %3105 = vmatpush1.msra.mxu0 0.0
    %3106 = vmatprep.subr.mxu0 0.0
    %3107 = vmatpush1.msra.mxu0 0.0
    %3108 = vmatprep.subr.mxu0 0.0
    %3109 = vmatpush1.msra.mxu0 0.0
    %3110 = vmatprep.subr.mxu0 0.0
    %3111 = vmatpush1.msra.mxu0 %v2887
    %3112 = vmatprep.subr.mxu0 0.0
    %3113 = vmatpush1.msra.mxu0 %v2886
    %3114 = vmatprep.subr.mxu0 0.0
    %3115 = vmatpush2.msra.mxu0 0.0
    %3116 = vmatprep.subr.mxu0 0.0
    %3117 = vmatpush2.msra.mxu0 0.0
    %3118 = vmatprep.subr.mxu0 0.0
    %3119 = vmatpush2.msra.mxu0 0.0
    %3120 = vmatprep.subr.mxu0 0.0
    %3121 = vmatpush2.msra.mxu0 0.0
    %3122 = vmatprep.subr.mxu0 0.0
    %3123 = vmatpush2.msra.mxu0 0.0
    %3124 = vmatprep.subr.mxu0 0.0
    %3125 = vmatpush2.msra.mxu0 0.0
    %3126 = vmatprep.subr.mxu0 0.0
    %3127 = vmatpush2.msra.mxu0 0.0
    %3128 = vmatprep.subr.mxu0 0.0
    %3129 = vmatpush2.msra.mxu0 0.0
    %3130 = vmatprep.subr.mxu0 0.0
    %3131 = vmatpush2.msra.mxu0 0.0
    %3132 = vmatprep.subr.mxu0 0.0
    %3133 = vmatpush2.msra.mxu0 0.0
    %3134 = vmatprep.subr.mxu0 0.0
    %3135 = vmatpush2.msra.mxu0 0.0
    %3136 = vmatprep.subr.mxu0 0.0
    %3137 = vmatpush2.msra.mxu0 0.0
    %3138 = vmatprep.subr.mxu0 0.0
    %3139 = vmatpush2.msra.mxu0 0.0
    %3140 = vmatprep.subr.mxu0 0.0
    %3141 = vmatpush2.msra.mxu0 0.0
    %3142 = vmatprep.subr.mxu0 0.0
    %3143 = vmatpush2.msra.mxu0 0.0
    %3144 = vmatprep.subr.mxu0 0.0
    %3145 = vmatpush2.msra.mxu0 0.0
    %3146 = vmatprep.mubr.f32.mxu0 0.0
    %3147 = vmatmul.mubr.f32.gmra.mxu0 %v903
    %v3148 = vpop.f32.mrf.mxu0
    %v3149 = vadd.f32 0.0, %v3148
    %v3150 = vpop.f32.mrf.mxu0
    %3151 = vmatprep.mubr.f32.mxu0 0.0
    %3152 = vmatmul.mubr.f32.gmra.mxu0 %v906
    %v3153 = vpop.f32.mrf.mxu0
    %v3154 = vadd.f32 0.0, %v3153
    %v3155 = vpop.f32.mrf.mxu0
    %3156 = vmatprep.mubr.f32.mxu0 0.0
    %3157 = vmatmul.mubr.f32.gmra.mxu0 %v909
    %v3158 = vpop.f32.mrf.mxu0
    %v3159 = vadd.f32 0.0, %v3158
    %v3160 = vpop.f32.mrf.mxu0
    %3161 = vmatprep.mubr.f32.mxu0 0.0
    %3162 = vmatmul.mubr.f32.gmra.mxu0 %v912
    %v3163 = vpop.f32.mrf.mxu0
    %v3164 = vadd.f32 0.0, %v3163
    %v3165 = vpop.f32.mrf.mxu0
    %3166 = vmatprep.mubr.f32.mxu0 0.0
    %3167 = vmatmul.mubr.f32.gmra.mxu0 %v915
    %v3168 = vpop.f32.mrf.mxu0
    %v3169 = vadd.f32 0.0, %v3168
    %v3170 = vpop.f32.mrf.mxu0
    %3171 = vmatprep.mubr.f32.mxu0 0.0
    %3172 = vmatmul.mubr.f32.gmra.mxu0 %v918
    %v3173 = vpop.f32.mrf.mxu0
    %v3174 = vadd.f32 0.0, %v3173
    %v3175 = vpop.f32.mrf.mxu0
    %3176 = vdwg.mxu0
    %3177 = vmatprep.subr.mxu0 0.0
    %3178 = vmatpush1.msra.mxu0 0.0
    %3179 = vmatprep.subr.mxu0 0.0
    %3180 = vmatpush1.msra.mxu0 0.0
    %3181 = vmatprep.subr.mxu0 0.0
    %3182 = vmatpush1.msra.mxu0 0.0
    %3183 = vmatprep.subr.mxu0 0.0
    %3184 = vmatpush1.msra.mxu0 0.0
    %3185 = vmatprep.subr.mxu0 0.0
    %3186 = vmatpush1.msra.mxu0 0.0
    %3187 = vmatprep.subr.mxu0 0.0
    %3188 = vmatpush1.msra.mxu0 0.0
    %3189 = vmatprep.subr.mxu0 0.0
    %3190 = vmatpush1.msra.mxu0 0.0
    %3191 = vmatprep.subr.mxu0 0.0
    %3192 = vmatpush1.msra.mxu0 0.0
    %3193 = vmatprep.subr.mxu0 0.0
    %3194 = vmatpush1.msra.mxu0 0.0
    %3195 = vmatprep.subr.mxu0 0.0
    %3196 = vmatpush1.msra.mxu0 0.0
    %3197 = vmatprep.subr.mxu0 0.0
    %3198 = vmatpush1.msra.mxu0 0.0
    %3199 = vmatprep.subr.mxu0 0.0
    %3200 = vmatpush1.msra.mxu0 0.0
    %3201 = vmatprep.subr.mxu0 0.0
    %3202 = vmatpush1.msra.mxu0 0.0
    %3203 = vmatprep.subr.mxu0 0.0
    %3204 = vmatpush1.msra.mxu0 0.0
    %3205 = vmatprep.subr.mxu0 0.0
    %3206 = vmatpush1.msra.mxu0 %v2889
    %3207 = vmatprep.subr.mxu0 0.0
    %3208 = vmatpush1.msra.mxu0 %v2888
    %3209 = vmatprep.subr.mxu0 0.0
    %3210 = vmatpush2.msra.mxu0 0.0
    %3211 = vmatprep.subr.mxu0 0.0
    %3212 = vmatpush2.msra.mxu0 0.0
    %3213 = vmatprep.subr.mxu0 0.0
    %3214 = vmatpush2.msra.mxu0 0.0
    %3215 = vmatprep.subr.mxu0 0.0
    %3216 = vmatpush2.msra.mxu0 0.0
    %3217 = vmatprep.subr.mxu0 0.0
    %3218 = vmatpush2.msra.mxu0 0.0
    %3219 = vmatprep.subr.mxu0 0.0
    %3220 = vmatpush2.msra.mxu0 0.0
    %3221 = vmatprep.subr.mxu0 0.0
    %3222 = vmatpush2.msra.mxu0 0.0
    %3223 = vmatprep.subr.mxu0 0.0
    %3224 = vmatpush2.msra.mxu0 0.0
    %3225 = vmatprep.subr.mxu0 0.0
    %3226 = vmatpush2.msra.mxu0 0.0
    %3227 = vmatprep.subr.mxu0 0.0
    %3228 = vmatpush2.msra.mxu0 0.0
    %3229 = vmatprep.subr.mxu0 0.0
    %3230 = vmatpush2.msra.mxu0 0.0
    %3231 = vmatprep.subr.mxu0 0.0
    %3232 = vmatpush2.msra.mxu0 0.0
    %3233 = vmatprep.subr.mxu0 0.0
    %3234 = vmatpush2.msra.mxu0 0.0
    %3235 = vmatprep.subr.mxu0 0.0
    %3236 = vmatpush2.msra.mxu0 0.0
    %3237 = vmatprep.subr.mxu0 0.0
    %3238 = vmatpush2.msra.mxu0 0.0
    %3239 = vmatprep.subr.mxu0 0.0
    %3240 = vmatpush2.msra.mxu0 0.0
    %3241 = vmatprep.mubr.f32.mxu0 0.0
    %3242 = vmatmul.mubr.f32.gmra.mxu0 %v903
    %v3243 = vpop.f32.mrf.mxu0
    %v3244 = vadd.f32 0.0, %v3243
    %v3245 = vpop.f32.mrf.mxu0
    %3246 = vmatprep.mubr.f32.mxu0 0.0
    %3247 = vmatmul.mubr.f32.gmra.mxu0 %v906
    %v3248 = vpop.f32.mrf.mxu0
    %v3249 = vadd.f32 0.0, %v3248
    %v3250 = vpop.f32.mrf.mxu0
    %3251 = vmatprep.mubr.f32.mxu0 0.0
    %3252 = vmatmul.mubr.f32.gmra.mxu0 %v909
    %v3253 = vpop.f32.mrf.mxu0
    %v3254 = vadd.f32 0.0, %v3253
    %v3255 = vpop.f32.mrf.mxu0
    %3256 = vmatprep.mubr.f32.mxu0 0.0
    %3257 = vmatmul.mubr.f32.gmra.mxu0 %v912
    %v3258 = vpop.f32.mrf.mxu0
    %v3259 = vadd.f32 0.0, %v3258
    %v3260 = vpop.f32.mrf.mxu0
    %3261 = vmatprep.mubr.f32.mxu0 0.0
    %3262 = vmatmul.mubr.f32.gmra.mxu0 %v915
    %v3263 = vpop.f32.mrf.mxu0
    %v3264 = vadd.f32 0.0, %v3263
    %v3265 = vpop.f32.mrf.mxu0
    %3266 = vmatprep.mubr.f32.mxu0 0.0
    %3267 = vmatmul.mubr.f32.gmra.mxu0 %v918
    %v3268 = vpop.f32.mrf.mxu0
    %v3269 = vadd.f32 0.0, %v3268
    %v3270 = vpop.f32.mrf.mxu0
    %3271 = vdwg.mxu0
    %3272 = vmatprep.subr.mxu0 0.0
    %3273 = vmatpush1.msra.mxu0 0.0
    %3274 = vmatprep.subr.mxu0 0.0
    %3275 = vmatpush1.msra.mxu0 0.0
    %3276 = vmatprep.subr.mxu0 0.0
    %3277 = vmatpush1.msra.mxu0 0.0
    %3278 = vmatprep.subr.mxu0 0.0
    %3279 = vmatpush1.msra.mxu0 0.0
    %3280 = vmatprep.subr.mxu0 0.0
    %3281 = vmatpush1.msra.mxu0 0.0
    %3282 = vmatprep.subr.mxu0 0.0
    %3283 = vmatpush1.msra.mxu0 0.0
    %3284 = vmatprep.subr.mxu0 0.0
    %3285 = vmatpush1.msra.mxu0 0.0
    %3286 = vmatprep.subr.mxu0 0.0
    %3287 = vmatpush1.msra.mxu0 0.0
    %3288 = vmatprep.subr.mxu0 0.0
    %3289 = vmatpush1.msra.mxu0 0.0
    %3290 = vmatprep.subr.mxu0 0.0
    %3291 = vmatpush1.msra.mxu0 0.0
    %3292 = vmatprep.subr.mxu0 0.0
    %3293 = vmatpush1.msra.mxu0 0.0
    %3294 = vmatprep.subr.mxu0 0.0
    %3295 = vmatpush1.msra.mxu0 0.0
    %3296 = vmatprep.subr.mxu0 0.0
    %3297 = vmatpush1.msra.mxu0 0.0
    %3298 = vmatprep.subr.mxu0 0.0
    %3299 = vmatpush1.msra.mxu0 0.0
    %3300 = vmatprep.subr.mxu0 0.0
    %3301 = vmatpush1.msra.mxu0 %v2891
    %3302 = vmatprep.subr.mxu0 0.0
    %3303 = vmatpush1.msra.mxu0 %v2890
    %3304 = vmatprep.subr.mxu0 0.0
    %3305 = vmatpush2.msra.mxu0 0.0
    %3306 = vmatprep.subr.mxu0 0.0
    %3307 = vmatpush2.msra.mxu0 0.0
    %3308 = vmatprep.subr.mxu0 0.0
    %3309 = vmatpush2.msra.mxu0 0.0
    %3310 = vmatprep.subr.mxu0 0.0
    %3311 = vmatpush2.msra.mxu0 0.0
    %3312 = vmatprep.subr.mxu0 0.0
    %3313 = vmatpush2.msra.mxu0 0.0
    %3314 = vmatprep.subr.mxu0 0.0
    %3315 = vmatpush2.msra.mxu0 0.0
    %3316 = vmatprep.subr.mxu0 0.0
    %3317 = vmatpush2.msra.mxu0 0.0
    %3318 = vmatprep.subr.mxu0 0.0
    %3319 = vmatpush2.msra.mxu0 0.0
    %3320 = vmatprep.subr.mxu0 0.0
    %3321 = vmatpush2.msra.mxu0 0.0
    %3322 = vmatprep.subr.mxu0 0.0
    %3323 = vmatpush2.msra.mxu0 0.0
    %3324 = vmatprep.subr.mxu0 0.0
    %3325 = vmatpush2.msra.mxu0 0.0
    %3326 = vmatprep.subr.mxu0 0.0
    %3327 = vmatpush2.msra.mxu0 0.0
    %3328 = vmatprep.subr.mxu0 0.0
    %3329 = vmatpush2.msra.mxu0 0.0
    %3330 = vmatprep.subr.mxu0 0.0
    %3331 = vmatpush2.msra.mxu0 0.0
    %3332 = vmatprep.subr.mxu0 0.0
    %3333 = vmatpush2.msra.mxu0 0.0
    %3334 = vmatprep.subr.mxu0 0.0
    %3335 = vmatpush2.msra.mxu0 0.0
    %3336 = vmatprep.mubr.f32.mxu0 0.0
    %3337 = vmatmul.mubr.f32.gmra.mxu0 %v903
    %v3338 = vpop.f32.mrf.mxu0
    %v3339 = vadd.f32 0.0, %v3338
    %v3340 = vpop.f32.mrf.mxu0
    %3341 = vmatprep.mubr.f32.mxu0 0.0
    %3342 = vmatmul.mubr.f32.gmra.mxu0 %v906
    %v3343 = vpop.f32.mrf.mxu0
    %v3344 = vadd.f32 0.0, %v3343
    %v3345 = vpop.f32.mrf.mxu0
    %3346 = vmatprep.mubr.f32.mxu0 0.0
    %3347 = vmatmul.mubr.f32.gmra.mxu0 %v909
    %v3348 = vpop.f32.mrf.mxu0
    %v3349 = vadd.f32 0.0, %v3348
    %v3350 = vpop.f32.mrf.mxu0
    %3351 = vmatprep.mubr.f32.mxu0 0.0
    %3352 = vmatmul.mubr.f32.gmra.mxu0 %v912
    %v3353 = vpop.f32.mrf.mxu0
    %v3354 = vadd.f32 0.0, %v3353
    %v3355 = vpop.f32.mrf.mxu0
    %3356 = vmatprep.mubr.f32.mxu0 0.0
    %3357 = vmatmul.mubr.f32.gmra.mxu0 %v915
    %v3358 = vpop.f32.mrf.mxu0
    %v3359 = vadd.f32 0.0, %v3358
    %v3360 = vpop.f32.mrf.mxu0
    %3361 = vmatprep.mubr.f32.mxu0 0.0
    %3362 = vmatmul.mubr.f32.gmra.mxu0 %v918
    %v3363 = vpop.f32.mrf.mxu0
    %v3364 = vadd.f32 0.0, %v3363
    %v3365 = vpop.f32.mrf.mxu0
    %3366 = vdwg.mxu0
    %v3367 = vmul.f32 %v2959, %v88
    %v3368 = vmul.f32 %v2964, %v89
    %v3369 = vmul.f32 %v2969, %v90
    %v3370 = vmul.f32 %v2974, %v91
    %v3371 = vmul.f32 %v2979, %v92
    %v3372 = vmul.f32 %v2984, %v93
    %v3373 = vmul.f32 %v3054, %v88
    %v3374 = vmul.f32 %v3059, %v89
    %v3375 = vmul.f32 %v3064, %v90
    %v3376 = vmul.f32 %v3069, %v91
    %v3377 = vmul.f32 %v3074, %v92
    %v3378 = vmul.f32 %v3079, %v93
    %v3379 = vmul.f32 %v3149, %v88
    %v3380 = vmul.f32 %v3154, %v89
    %v3381 = vmul.f32 %v3159, %v90
    %v3382 = vmul.f32 %v3164, %v91
    %v3383 = vmul.f32 %v3169, %v92
    %v3384 = vmul.f32 %v3174, %v93
    %v3385 = vmul.f32 %v3244, %v88
    %v3386 = vmul.f32 %v3249, %v89
    %v3387 = vmul.f32 %v3254, %v90
    %v3388 = vmul.f32 %v3259, %v91
    %v3389 = vmul.f32 %v3264, %v92
    %v3390 = vmul.f32 %v3269, %v93
    %v3391 = vmul.f32 %v3339, %v88
    %v3392 = vmul.f32 %v3344, %v89
    %v3393 = vmul.f32 %v3349, %v90
    %v3394 = vmul.f32 %v3354, %v91
    %v3395 = vmul.f32 %v3359, %v92
    %v3396 = vmul.f32 %v3364, %v93
    %v3397 = vsel %vm283, %v3367, 0.0
    %3398 = vadd.xlane.f32.xlu0 %v3397
    %v3399 = vpop.xlane.xlu0 %3398
    %v3400 = vsel %vm283, %v3368, 0.0
    %3401 = vadd.xlane.f32.xlu0 %v3400
    %v3402 = vpop.xlane.xlu0 %3401
    %v3403 = vsel %vm283, %v3369, 0.0
    %3404 = vadd.xlane.f32.xlu0 %v3403
    %v3405 = vpop.xlane.xlu0 %3404
    %v3406 = vsel %vm283, %v3370, 0.0
    %3407 = vadd.xlane.f32.xlu0 %v3406
    %v3408 = vpop.xlane.xlu0 %3407
    %v3409 = vsel %vm283, %v3371, 0.0
    %3410 = vadd.xlane.f32.xlu0 %v3409
    %v3411 = vpop.xlane.xlu0 %3410
    %v3412 = vsel %vm283, %v3372, 0.0
    %3413 = vadd.xlane.f32.xlu0 %v3412
    %v3414 = vpop.xlane.xlu0 %3413
    %v3415 = vsel %vm283, %v3373, 0.0
    %3416 = vadd.xlane.f32.xlu0 %v3415
    %v3417 = vpop.xlane.xlu0 %3416
    %v3418 = vsel %vm283, %v3374, 0.0
    %3419 = vadd.xlane.f32.xlu0 %v3418
    %v3420 = vpop.xlane.xlu0 %3419
    %v3421 = vsel %vm283, %v3375, 0.0
    %3422 = vadd.xlane.f32.xlu0 %v3421
    %v3423 = vpop.xlane.xlu0 %3422
    %v3424 = vsel %vm283, %v3376, 0.0
    %3425 = vadd.xlane.f32.xlu0 %v3424
    %v3426 = vpop.xlane.xlu0 %3425
    %v3427 = vsel %vm283, %v3377, 0.0
    %3428 = vadd.xlane.f32.xlu0 %v3427
    %v3429 = vpop.xlane.xlu0 %3428
    %v3430 = vsel %vm283, %v3378, 0.0
    %3431 = vadd.xlane.f32.xlu0 %v3430
    %v3432 = vpop.xlane.xlu0 %3431
    %v3433 = vsel %vm283, %v3379, 0.0
    %3434 = vadd.xlane.f32.xlu0 %v3433
    %v3435 = vpop.xlane.xlu0 %3434
    %v3436 = vsel %vm283, %v3380, 0.0
    %3437 = vadd.xlane.f32.xlu0 %v3436
    %v3438 = vpop.xlane.xlu0 %3437
    %v3439 = vsel %vm283, %v3381, 0.0
    %3440 = vadd.xlane.f32.xlu0 %v3439
    %v3441 = vpop.xlane.xlu0 %3440
    %v3442 = vsel %vm283, %v3382, 0.0
    %3443 = vadd.xlane.f32.xlu0 %v3442
    %v3444 = vpop.xlane.xlu0 %3443
    %v3445 = vsel %vm283, %v3383, 0.0
    %3446 = vadd.xlane.f32.xlu0 %v3445
    %v3447 = vpop.xlane.xlu0 %3446
    %v3448 = vsel %vm283, %v3384, 0.0
    %3449 = vadd.xlane.f32.xlu0 %v3448
    %v3450 = vpop.xlane.xlu0 %3449
    %v3451 = vsel %vm283, %v3385, 0.0
    %3452 = vadd.xlane.f32.xlu0 %v3451
    %v3453 = vpop.xlane.xlu0 %3452
    %v3454 = vsel %vm283, %v3386, 0.0
    %3455 = vadd.xlane.f32.xlu0 %v3454
    %v3456 = vpop.xlane.xlu0 %3455
    %v3457 = vsel %vm283, %v3387, 0.0
    %3458 = vadd.xlane.f32.xlu0 %v3457
    %v3459 = vpop.xlane.xlu0 %3458
    %v3460 = vsel %vm283, %v3388, 0.0
    %3461 = vadd.xlane.f32.xlu0 %v3460
    %v3462 = vpop.xlane.xlu0 %3461
    %v3463 = vsel %vm283, %v3389, 0.0
    %3464 = vadd.xlane.f32.xlu0 %v3463
    %v3465 = vpop.xlane.xlu0 %3464
    %v3466 = vsel %vm283, %v3390, 0.0
    %3467 = vadd.xlane.f32.xlu0 %v3466
    %v3468 = vpop.xlane.xlu0 %3467
    %v3469 = vsel %vm283, %v3391, 0.0
    %3470 = vadd.xlane.f32.xlu0 %v3469
    %v3471 = vpop.xlane.xlu0 %3470
    %v3472 = vsel %vm283, %v3392, 0.0
    %3473 = vadd.xlane.f32.xlu0 %v3472
    %v3474 = vpop.xlane.xlu0 %3473
    %v3475 = vsel %vm283, %v3393, 0.0
    %3476 = vadd.xlane.f32.xlu0 %v3475
    %v3477 = vpop.xlane.xlu0 %3476
    %v3478 = vsel %vm283, %v3394, 0.0
    %3479 = vadd.xlane.f32.xlu0 %v3478
    %v3480 = vpop.xlane.xlu0 %3479
    %v3481 = vsel %vm283, %v3395, 0.0
    %3482 = vadd.xlane.f32.xlu0 %v3481
    %v3483 = vpop.xlane.xlu0 %3482
    %v3484 = vsel %vm283, %v3396, 0.0
    %3485 = vadd.xlane.f32.xlu0 %v3484
    %v3486 = vpop.xlane.xlu0 %3485
    %v3517 = vlaneseq
    %v3518 = vshrl.u32 %v3517, 7
    %v3519 = vsub.s32 %v1546, %v3518
    %v3520 = vrot.slane %v3399, %v3519
    %v3521 = vlaneseq
    %v3522 = vshrl.u32 %v3521, 7
    %v3523 = vsub.s32 %v1551, %v3522
    %v3524 = vrot.slane %v3402, %v3523
    %v3525 = vsel %vm1556, %v3524, %v3520
    %v3526 = vlaneseq
    %v3527 = vshrl.u32 %v3526, 7
    %v3528 = vsub.s32 %v1558, %v3527
    %v3529 = vrot.slane %v3405, %v3528
    %v3530 = vsel %vm1563, %v3529, %v3525
    %v3531 = vlaneseq
    %v3532 = vshrl.u32 %v3531, 7
    %v3533 = vsub.s32 %v1565, %v3532
    %v3534 = vrot.slane %v3408, %v3533
    %v3535 = vsel %vm1570, %v3534, %v3530
    %v3536 = vlaneseq
    %v3537 = vshrl.u32 %v3536, 7
    %v3538 = vsub.s32 %v1572, %v3537
    %v3539 = vrot.slane %v3411, %v3538
    %v3540 = vsel %vm1577, %v3539, %v3535
    %v3541 = vlaneseq
    %v3542 = vshrl.u32 %v3541, 7
    %v3543 = vsub.s32 %v1579, %v3542
    %v3544 = vrot.slane %v3414, %v3543
    %v3545 = vsel %vm1584, %v3544, %v3540
    %v3546 = vlaneseq
    %v3547 = vshrl.u32 %v3546, 7
    %v3548 = vsub.s32 %v1546, %v3547
    %v3549 = vrot.slane %v3417, %v3548
    %v3550 = vlaneseq
    %v3551 = vshrl.u32 %v3550, 7
    %v3552 = vsub.s32 %v1551, %v3551
    %v3553 = vrot.slane %v3420, %v3552
    %v3554 = vsel %vm1556, %v3553, %v3549
    %v3555 = vlaneseq
    %v3556 = vshrl.u32 %v3555, 7
    %v3557 = vsub.s32 %v1558, %v3556
    %v3558 = vrot.slane %v3423, %v3557
    %v3559 = vsel %vm1563, %v3558, %v3554
    %v3560 = vlaneseq
    %v3561 = vshrl.u32 %v3560, 7
    %v3562 = vsub.s32 %v1565, %v3561
    %v3563 = vrot.slane %v3426, %v3562
    %v3564 = vsel %vm1570, %v3563, %v3559
    %v3565 = vlaneseq
    %v3566 = vshrl.u32 %v3565, 7
    %v3567 = vsub.s32 %v1572, %v3566
    %v3568 = vrot.slane %v3429, %v3567
    %v3569 = vsel %vm1577, %v3568, %v3564
    %v3570 = vlaneseq
    %v3571 = vshrl.u32 %v3570, 7
    %v3572 = vsub.s32 %v1579, %v3571
    %v3573 = vrot.slane %v3432, %v3572
    %v3574 = vsel %vm1584, %v3573, %v3569
    %v3575 = vlaneseq
    %v3576 = vshrl.u32 %v3575, 7
    %v3577 = vsub.s32 %v1546, %v3576
    %v3578 = vrot.slane %v3435, %v3577
    %v3579 = vlaneseq
    %v3580 = vshrl.u32 %v3579, 7
    %v3581 = vsub.s32 %v1551, %v3580
    %v3582 = vrot.slane %v3438, %v3581
    %v3583 = vsel %vm1556, %v3582, %v3578
    %v3584 = vlaneseq
    %v3585 = vshrl.u32 %v3584, 7
    %v3586 = vsub.s32 %v1558, %v3585
    %v3587 = vrot.slane %v3441, %v3586
    %v3588 = vsel %vm1563, %v3587, %v3583
    %v3589 = vlaneseq
    %v3590 = vshrl.u32 %v3589, 7
    %v3591 = vsub.s32 %v1565, %v3590
    %v3592 = vrot.slane %v3444, %v3591
    %v3593 = vsel %vm1570, %v3592, %v3588
    %v3594 = vlaneseq
    %v3595 = vshrl.u32 %v3594, 7
    %v3596 = vsub.s32 %v1572, %v3595
    %v3597 = vrot.slane %v3447, %v3596
    %v3598 = vsel %vm1577, %v3597, %v3593
    %v3599 = vlaneseq
    %v3600 = vshrl.u32 %v3599, 7
    %v3601 = vsub.s32 %v1579, %v3600
    %v3602 = vrot.slane %v3450, %v3601
    %v3603 = vsel %vm1584, %v3602, %v3598
    %v3604 = vlaneseq
    %v3605 = vshrl.u32 %v3604, 7
    %v3606 = vsub.s32 %v1546, %v3605
    %v3607 = vrot.slane %v3453, %v3606
    %v3608 = vlaneseq
    %v3609 = vshrl.u32 %v3608, 7
    %v3610 = vsub.s32 %v1551, %v3609
    %v3611 = vrot.slane %v3456, %v3610
    %v3612 = vsel %vm1556, %v3611, %v3607
    %v3613 = vlaneseq
    %v3614 = vshrl.u32 %v3613, 7
    %v3615 = vsub.s32 %v1558, %v3614
    %v3616 = vrot.slane %v3459, %v3615
    %v3617 = vsel %vm1563, %v3616, %v3612
    %v3618 = vlaneseq
    %v3619 = vshrl.u32 %v3618, 7
    %v3620 = vsub.s32 %v1565, %v3619
    %v3621 = vrot.slane %v3462, %v3620
    %v3622 = vsel %vm1570, %v3621, %v3617
    %v3623 = vlaneseq
    %v3624 = vshrl.u32 %v3623, 7
    %v3625 = vsub.s32 %v1572, %v3624
    %v3626 = vrot.slane %v3465, %v3625
    %v3627 = vsel %vm1577, %v3626, %v3622
    %v3628 = vlaneseq
    %v3629 = vshrl.u32 %v3628, 7
    %v3630 = vsub.s32 %v1579, %v3629
    %v3631 = vrot.slane %v3468, %v3630
    %v3632 = vsel %vm1584, %v3631, %v3627
    %v3633 = vlaneseq
    %v3634 = vshrl.u32 %v3633, 7
    %v3635 = vsub.s32 %v1546, %v3634
    %v3636 = vrot.slane %v3471, %v3635
    %v3637 = vlaneseq
    %v3638 = vshrl.u32 %v3637, 7
    %v3639 = vsub.s32 %v1551, %v3638
    %v3640 = vrot.slane %v3474, %v3639
    %v3641 = vsel %vm1556, %v3640, %v3636
    %v3642 = vlaneseq
    %v3643 = vshrl.u32 %v3642, 7
    %v3644 = vsub.s32 %v1558, %v3643
    %v3645 = vrot.slane %v3477, %v3644
    %v3646 = vsel %vm1563, %v3645, %v3641
    %v3647 = vlaneseq
    %v3648 = vshrl.u32 %v3647, 7
    %v3649 = vsub.s32 %v1565, %v3648
    %v3650 = vrot.slane %v3480, %v3649
    %v3651 = vsel %vm1570, %v3650, %v3646
    %v3652 = vlaneseq
    %v3653 = vshrl.u32 %v3652, 7
    %v3654 = vsub.s32 %v1572, %v3653
    %v3655 = vrot.slane %v3483, %v3654
    %v3656 = vsel %vm1577, %v3655, %v3651
    %v3657 = vlaneseq
    %v3658 = vshrl.u32 %v3657, 7
    %v3659 = vsub.s32 %v1579, %v3658
    %v3660 = vrot.slane %v3486, %v3659
    %v3661 = vsel %vm1584, %v3660, %v3656
    %v3662 = vsel %vm1702, %v3574, %v3545
    %v3663 = vsel %vm1704, %v3603, %v3662
    %v3664 = vsel %vm1706, %v3632, %v3663
    %v3665 = vsel %vm1708, %v3661, %v3664
    %3667 = vst.msk [vmem:[#allocation7] sm:$0x1f] %vm1711, %v3665
    %v3669 = vsel %vm283, %v2882, 0
    %v3672 = vsel %vm283, %v2883, 0
    %3674 = vmatprep.subr.mxu0 0.0
    %3675 = vmatpush1.msra.mxu0 0.0
    %3676 = vmatprep.subr.mxu0 0.0
    %3677 = vmatpush1.msra.mxu0 0.0
    %3678 = vmatprep.subr.mxu0 0.0
    %3679 = vmatpush1.msra.mxu0 0.0
    %3680 = vmatprep.subr.mxu0 0.0
    %3681 = vmatpush1.msra.mxu0 0.0
    %3682 = vmatprep.subr.mxu0 0.0
    %3683 = vmatpush1.msra.mxu0 0.0
    %3684 = vmatprep.subr.mxu0 0.0
    %3685 = vmatpush1.msra.mxu0 0.0
    %3686 = vmatprep.subr.mxu0 0.0
    %3687 = vmatpush1.msra.mxu0 0.0
    %3688 = vmatprep.subr.mxu0 0.0
    %3689 = vmatpush1.msra.mxu0 0.0
    %3690 = vmatprep.subr.mxu0 0.0
    %3691 = vmatpush1.msra.mxu0 0.0
    %3692 = vmatprep.subr.mxu0 0.0
    %3693 = vmatpush1.msra.mxu0 0.0
    %3694 = vmatprep.subr.mxu0 0.0
    %3695 = vmatpush1.msra.mxu0 0.0
    %3696 = vmatprep.subr.mxu0 0.0
    %3697 = vmatpush1.msra.mxu0 0.0
    %3698 = vmatprep.subr.mxu0 0.0
    %3699 = vmatpush1.msra.mxu0 0.0
    %3700 = vmatprep.subr.mxu0 0.0
    %3701 = vmatpush1.msra.mxu0 0.0
    %3702 = vmatprep.subr.mxu0 0.0
    %3703 = vmatpush1.msra.mxu0 %v2357
    %3704 = vmatprep.subr.mxu0 0.0
    %3705 = vmatpush1.msra.mxu0 %v2352
    %3706 = vmatprep.subr.mxu0 0.0
    %3707 = vmatpush2.msra.mxu0 0.0
    %3708 = vmatprep.subr.mxu0 0.0
    %3709 = vmatpush2.msra.mxu0 0.0
    %3710 = vmatprep.subr.mxu0 0.0
    %3711 = vmatpush2.msra.mxu0 0.0
    %3712 = vmatprep.subr.mxu0 0.0
    %3713 = vmatpush2.msra.mxu0 0.0
    %3714 = vmatprep.subr.mxu0 0.0
    %3715 = vmatpush2.msra.mxu0 0.0
    %3716 = vmatprep.subr.mxu0 0.0
    %3717 = vmatpush2.msra.mxu0 0.0
    %3718 = vmatprep.subr.mxu0 0.0
    %3719 = vmatpush2.msra.mxu0 0.0
    %3720 = vmatprep.subr.mxu0 0.0
    %3721 = vmatpush2.msra.mxu0 0.0
    %3722 = vmatprep.subr.mxu0 0.0
    %3723 = vmatpush2.msra.mxu0 0.0
    %3724 = vmatprep.subr.mxu0 0.0
    %3725 = vmatpush2.msra.mxu0 0.0
    %3726 = vmatprep.subr.mxu0 0.0
    %3727 = vmatpush2.msra.mxu0 0.0
    %3728 = vmatprep.subr.mxu0 0.0
    %3729 = vmatpush2.msra.mxu0 0.0
    %3730 = vmatprep.subr.mxu0 0.0
    %3731 = vmatpush2.msra.mxu0 0.0
    %3732 = vmatprep.subr.mxu0 0.0
    %3733 = vmatpush2.msra.mxu0 0.0
    %3734 = vmatprep.subr.mxu0 0.0
    %3735 = vmatpush2.msra.mxu0 0.0
    %3736 = vmatprep.subr.mxu0 0.0
    %3737 = vmatpush2.msra.mxu0 0.0
    %3738 = vmatprep.mubr.f32.mxu0 0.0
    %3739 = vmatmul.mubr.f32.gmra.mxu0 %v3669
    %v3740 = vpop.f32.mrf.mxu0
    %v3741 = vadd.f32 0.0, %v3740
    %v3742 = vpop.f32.mrf.mxu0
    %3743 = vmatprep.mubr.f32.mxu0 0.0
    %3744 = vmatmul.mubr.f32.gmra.mxu0 %v3672
    %v3745 = vpop.f32.mrf.mxu0
    %v3746 = vadd.f32 0.0, %v3745
    %v3747 = vpop.f32.mrf.mxu0
    %3748 = vdwg.mxu0
    %v3750 = vsel %vm283, %v2884, 0
    %v3753 = vsel %vm283, %v2885, 0
    %3755 = vmatprep.subr.mxu0 0.0
    %3756 = vmatpush1.msra.mxu0 0.0
    %3757 = vmatprep.subr.mxu0 0.0
    %3758 = vmatpush1.msra.mxu0 0.0
    %3759 = vmatprep.subr.mxu0 0.0
    %3760 = vmatpush1.msra.mxu0 0.0
    %3761 = vmatprep.subr.mxu0 0.0
    %3762 = vmatpush1.msra.mxu0 0.0
    %3763 = vmatprep.subr.mxu0 0.0
    %3764 = vmatpush1.msra.mxu0 0.0
    %3765 = vmatprep.subr.mxu0 0.0
    %3766 = vmatpush1.msra.mxu0 0.0
    %3767 = vmatprep.subr.mxu0 0.0
    %3768 = vmatpush1.msra.mxu0 0.0
    %3769 = vmatprep.subr.mxu0 0.0
    %3770 = vmatpush1.msra.mxu0 0.0
    %3771 = vmatprep.subr.mxu0 0.0
    %3772 = vmatpush1.msra.mxu0 0.0
    %3773 = vmatprep.subr.mxu0 0.0
    %3774 = vmatpush1.msra.mxu0 0.0
    %3775 = vmatprep.subr.mxu0 0.0
    %3776 = vmatpush1.msra.mxu0 0.0
    %3777 = vmatprep.subr.mxu0 0.0
    %3778 = vmatpush1.msra.mxu0 0.0
    %3779 = vmatprep.subr.mxu0 0.0
    %3780 = vmatpush1.msra.mxu0 0.0
    %3781 = vmatprep.subr.mxu0 0.0
    %3782 = vmatpush1.msra.mxu0 0.0
    %3783 = vmatprep.subr.mxu0 0.0
    %3784 = vmatpush1.msra.mxu0 %v2357
    %3785 = vmatprep.subr.mxu0 0.0
    %3786 = vmatpush1.msra.mxu0 %v2352
    %3787 = vmatprep.subr.mxu0 0.0
    %3788 = vmatpush2.msra.mxu0 0.0
    %3789 = vmatprep.subr.mxu0 0.0
    %3790 = vmatpush2.msra.mxu0 0.0
    %3791 = vmatprep.subr.mxu0 0.0
    %3792 = vmatpush2.msra.mxu0 0.0
    %3793 = vmatprep.subr.mxu0 0.0
    %3794 = vmatpush2.msra.mxu0 0.0
    %3795 = vmatprep.subr.mxu0 0.0
    %3796 = vmatpush2.msra.mxu0 0.0
    %3797 = vmatprep.subr.mxu0 0.0
    %3798 = vmatpush2.msra.mxu0 0.0
    %3799 = vmatprep.subr.mxu0 0.0
    %3800 = vmatpush2.msra.mxu0 0.0
    %3801 = vmatprep.subr.mxu0 0.0
    %3802 = vmatpush2.msra.mxu0 0.0
    %3803 = vmatprep.subr.mxu0 0.0
    %3804 = vmatpush2.msra.mxu0 0.0
    %3805 = vmatprep.subr.mxu0 0.0
    %3806 = vmatpush2.msra.mxu0 0.0
    %3807 = vmatprep.subr.mxu0 0.0
    %3808 = vmatpush2.msra.mxu0 0.0
    %3809 = vmatprep.subr.mxu0 0.0
    %3810 = vmatpush2.msra.mxu0 0.0
    %3811 = vmatprep.subr.mxu0 0.0
    %3812 = vmatpush2.msra.mxu0 0.0
    %3813 = vmatprep.subr.mxu0 0.0
    %3814 = vmatpush2.msra.mxu0 0.0
    %3815 = vmatprep.subr.mxu0 0.0
    %3816 = vmatpush2.msra.mxu0 0.0
    %3817 = vmatprep.subr.mxu0 0.0
    %3818 = vmatpush2.msra.mxu0 0.0
    %3819 = vmatprep.mubr.f32.mxu0 0.0
    %3820 = vmatmul.mubr.f32.gmra.mxu0 %v3750
    %v3821 = vpop.f32.mrf.mxu0
    %v3822 = vadd.f32 0.0, %v3821
    %v3823 = vpop.f32.mrf.mxu0
    %3824 = vmatprep.mubr.f32.mxu0 0.0
    %3825 = vmatmul.mubr.f32.gmra.mxu0 %v3753
    %v3826 = vpop.f32.mrf.mxu0
    %v3827 = vadd.f32 0.0, %v3826
    %v3828 = vpop.f32.mrf.mxu0
    %3829 = vdwg.mxu0
    %v3831 = vsel %vm283, %v2886, 0
    %v3834 = vsel %vm283, %v2887, 0
    %3836 = vmatprep.subr.mxu0 0.0
    %3837 = vmatpush1.msra.mxu0 0.0
    %3838 = vmatprep.subr.mxu0 0.0
    %3839 = vmatpush1.msra.mxu0 0.0
    %3840 = vmatprep.subr.mxu0 0.0
    %3841 = vmatpush1.msra.mxu0 0.0
    %3842 = vmatprep.subr.mxu0 0.0
    %3843 = vmatpush1.msra.mxu0 0.0
    %3844 = vmatprep.subr.mxu0 0.0
    %3845 = vmatpush1.msra.mxu0 0.0
    %3846 = vmatprep.subr.mxu0 0.0
    %3847 = vmatpush1.msra.mxu0 0.0
    %3848 = vmatprep.subr.mxu0 0.0
    %3849 = vmatpush1.msra.mxu0 0.0
    %3850 = vmatprep.subr.mxu0 0.0
    %3851 = vmatpush1.msra.mxu0 0.0
    %3852 = vmatprep.subr.mxu0 0.0
    %3853 = vmatpush1.msra.mxu0 0.0
    %3854 = vmatprep.subr.mxu0 0.0
    %3855 = vmatpush1.msra.mxu0 0.0
    %3856 = vmatprep.subr.mxu0 0.0
    %3857 = vmatpush1.msra.mxu0 0.0
    %3858 = vmatprep.subr.mxu0 0.0
    %3859 = vmatpush1.msra.mxu0 0.0
    %3860 = vmatprep.subr.mxu0 0.0
    %3861 = vmatpush1.msra.mxu0 0.0
    %3862 = vmatprep.subr.mxu0 0.0
    %3863 = vmatpush1.msra.mxu0 0.0
    %3864 = vmatprep.subr.mxu0 0.0
    %3865 = vmatpush1.msra.mxu0 %v2357
    %3866 = vmatprep.subr.mxu0 0.0
    %3867 = vmatpush1.msra.mxu0 %v2352
    %3868 = vmatprep.subr.mxu0 0.0
    %3869 = vmatpush2.msra.mxu0 0.0
    %3870 = vmatprep.subr.mxu0 0.0
    %3871 = vmatpush2.msra.mxu0 0.0
    %3872 = vmatprep.subr.mxu0 0.0
    %3873 = vmatpush2.msra.mxu0 0.0
    %3874 = vmatprep.subr.mxu0 0.0
    %3875 = vmatpush2.msra.mxu0 0.0
    %3876 = vmatprep.subr.mxu0 0.0
    %3877 = vmatpush2.msra.mxu0 0.0
    %3878 = vmatprep.subr.mxu0 0.0
    %3879 = vmatpush2.msra.mxu0 0.0
    %3880 = vmatprep.subr.mxu0 0.0
    %3881 = vmatpush2.msra.mxu0 0.0
    %3882 = vmatprep.subr.mxu0 0.0
    %3883 = vmatpush2.msra.mxu0 0.0
    %3884 = vmatprep.subr.mxu0 0.0
    %3885 = vmatpush2.msra.mxu0 0.0
    %3886 = vmatprep.subr.mxu0 0.0
    %3887 = vmatpush2.msra.mxu0 0.0
    %3888 = vmatprep.subr.mxu0 0.0
    %3889 = vmatpush2.msra.mxu0 0.0
    %3890 = vmatprep.subr.mxu0 0.0
    %3891 = vmatpush2.msra.mxu0 0.0
    %3892 = vmatprep.subr.mxu0 0.0
    %3893 = vmatpush2.msra.mxu0 0.0
    %3894 = vmatprep.subr.mxu0 0.0
    %3895 = vmatpush2.msra.mxu0 0.0
    %3896 = vmatprep.subr.mxu0 0.0
    %3897 = vmatpush2.msra.mxu0 0.0
    %3898 = vmatprep.subr.mxu0 0.0
    %3899 = vmatpush2.msra.mxu0 0.0
    %3900 = vmatprep.mubr.f32.mxu0 0.0
    %3901 = vmatmul.mubr.f32.gmra.mxu0 %v3831
    %v3902 = vpop.f32.mrf.mxu0
    %v3903 = vadd.f32 0.0, %v3902
    %v3904 = vpop.f32.mrf.mxu0
    %3905 = vmatprep.mubr.f32.mxu0 0.0
    %3906 = vmatmul.mubr.f32.gmra.mxu0 %v3834
    %v3907 = vpop.f32.mrf.mxu0
    %v3908 = vadd.f32 0.0, %v3907
    %v3909 = vpop.f32.mrf.mxu0
    %3910 = vdwg.mxu0
    %v3912 = vsel %vm283, %v2888, 0
    %v3915 = vsel %vm283, %v2889, 0
    %3917 = vmatprep.subr.mxu0 0.0
    %3918 = vmatpush1.msra.mxu0 0.0
    %3919 = vmatprep.subr.mxu0 0.0
    %3920 = vmatpush1.msra.mxu0 0.0
    %3921 = vmatprep.subr.mxu0 0.0
    %3922 = vmatpush1.msra.mxu0 0.0
    %3923 = vmatprep.subr.mxu0 0.0
    %3924 = vmatpush1.msra.mxu0 0.0
    %3925 = vmatprep.subr.mxu0 0.0
    %3926 = vmatpush1.msra.mxu0 0.0
    %3927 = vmatprep.subr.mxu0 0.0
    %3928 = vmatpush1.msra.mxu0 0.0
    %3929 = vmatprep.subr.mxu0 0.0
    %3930 = vmatpush1.msra.mxu0 0.0
    %3931 = vmatprep.subr.mxu0 0.0
    %3932 = vmatpush1.msra.mxu0 0.0
    %3933 = vmatprep.subr.mxu0 0.0
    %3934 = vmatpush1.msra.mxu0 0.0
    %3935 = vmatprep.subr.mxu0 0.0
    %3936 = vmatpush1.msra.mxu0 0.0
    %3937 = vmatprep.subr.mxu0 0.0
    %3938 = vmatpush1.msra.mxu0 0.0
    %3939 = vmatprep.subr.mxu0 0.0
    %3940 = vmatpush1.msra.mxu0 0.0
    %3941 = vmatprep.subr.mxu0 0.0
    %3942 = vmatpush1.msra.mxu0 0.0
    %3943 = vmatprep.subr.mxu0 0.0
    %3944 = vmatpush1.msra.mxu0 0.0
    %3945 = vmatprep.subr.mxu0 0.0
    %3946 = vmatpush1.msra.mxu0 %v2357
    %3947 = vmatprep.subr.mxu0 0.0
    %3948 = vmatpush1.msra.mxu0 %v2352
    %3949 = vmatprep.subr.mxu0 0.0
    %3950 = vmatpush2.msra.mxu0 0.0
    %3951 = vmatprep.subr.mxu0 0.0
    %3952 = vmatpush2.msra.mxu0 0.0
    %3953 = vmatprep.subr.mxu0 0.0
    %3954 = vmatpush2.msra.mxu0 0.0
    %3955 = vmatprep.subr.mxu0 0.0
    %3956 = vmatpush2.msra.mxu0 0.0
    %3957 = vmatprep.subr.mxu0 0.0
    %3958 = vmatpush2.msra.mxu0 0.0
    %3959 = vmatprep.subr.mxu0 0.0
    %3960 = vmatpush2.msra.mxu0 0.0
    %3961 = vmatprep.subr.mxu0 0.0
    %3962 = vmatpush2.msra.mxu0 0.0
    %3963 = vmatprep.subr.mxu0 0.0
    %3964 = vmatpush2.msra.mxu0 0.0
    %3965 = vmatprep.subr.mxu0 0.0
    %3966 = vmatpush2.msra.mxu0 0.0
    %3967 = vmatprep.subr.mxu0 0.0
    %3968 = vmatpush2.msra.mxu0 0.0
    %3969 = vmatprep.subr.mxu0 0.0
    %3970 = vmatpush2.msra.mxu0 0.0
    %3971 = vmatprep.subr.mxu0 0.0
    %3972 = vmatpush2.msra.mxu0 0.0
    %3973 = vmatprep.subr.mxu0 0.0
    %3974 = vmatpush2.msra.mxu0 0.0
    %3975 = vmatprep.subr.mxu0 0.0
    %3976 = vmatpush2.msra.mxu0 0.0
    %3977 = vmatprep.subr.mxu0 0.0
    %3978 = vmatpush2.msra.mxu0 0.0
    %3979 = vmatprep.subr.mxu0 0.0
    %3980 = vmatpush2.msra.mxu0 0.0
    %3981 = vmatprep.mubr.f32.mxu0 0.0
    %3982 = vmatmul.mubr.f32.gmra.mxu0 %v3912
    %v3983 = vpop.f32.mrf.mxu0
    %v3984 = vadd.f32 0.0, %v3983
    %v3985 = vpop.f32.mrf.mxu0
    %3986 = vmatprep.mubr.f32.mxu0 0.0
    %3987 = vmatmul.mubr.f32.gmra.mxu0 %v3915
    %v3988 = vpop.f32.mrf.mxu0
    %v3989 = vadd.f32 0.0, %v3988
    %v3990 = vpop.f32.mrf.mxu0
    %3991 = vdwg.mxu0
    %v3993 = vsel %vm283, %v2890, 0
    %v3996 = vsel %vm283, %v2891, 0
    %3998 = vmatprep.subr.mxu0 0.0
    %3999 = vmatpush1.msra.mxu0 0.0
    %4000 = vmatprep.subr.mxu0 0.0
    %4001 = vmatpush1.msra.mxu0 0.0
    %4002 = vmatprep.subr.mxu0 0.0
    %4003 = vmatpush1.msra.mxu0 0.0
    %4004 = vmatprep.subr.mxu0 0.0
    %4005 = vmatpush1.msra.mxu0 0.0
    %4006 = vmatprep.subr.mxu0 0.0
    %4007 = vmatpush1.msra.mxu0 0.0
    %4008 = vmatprep.subr.mxu0 0.0
    %4009 = vmatpush1.msra.mxu0 0.0
    %4010 = vmatprep.subr.mxu0 0.0
    %4011 = vmatpush1.msra.mxu0 0.0
    %4012 = vmatprep.subr.mxu0 0.0
    %4013 = vmatpush1.msra.mxu0 0.0
    %4014 = vmatprep.subr.mxu0 0.0
    %4015 = vmatpush1.msra.mxu0 0.0
    %4016 = vmatprep.subr.mxu0 0.0
    %4017 = vmatpush1.msra.mxu0 0.0
    %4018 = vmatprep.subr.mxu0 0.0
    %4019 = vmatpush1.msra.mxu0 0.0
    %4020 = vmatprep.subr.mxu0 0.0
    %4021 = vmatpush1.msra.mxu0 0.0
    %4022 = vmatprep.subr.mxu0 0.0
    %4023 = vmatpush1.msra.mxu0 0.0
    %4024 = vmatprep.subr.mxu0 0.0
    %4025 = vmatpush1.msra.mxu0 0.0
    %4026 = vmatprep.subr.mxu0 0.0
    %4027 = vmatpush1.msra.mxu0 %v2357
    %4028 = vmatprep.subr.mxu0 0.0
    %4029 = vmatpush1.msra.mxu0 %v2352
    %4030 = vmatprep.subr.mxu0 0.0
    %4031 = vmatpush2.msra.mxu0 0.0
    %4032 = vmatprep.subr.mxu0 0.0
    %4033 = vmatpush2.msra.mxu0 0.0
    %4034 = vmatprep.subr.mxu0 0.0
    %4035 = vmatpush2.msra.mxu0 0.0
    %4036 = vmatprep.subr.mxu0 0.0
    %4037 = vmatpush2.msra.mxu0 0.0
    %4038 = vmatprep.subr.mxu0 0.0
    %4039 = vmatpush2.msra.mxu0 0.0
    %4040 = vmatprep.subr.mxu0 0.0
    %4041 = vmatpush2.msra.mxu0 0.0
    %4042 = vmatprep.subr.mxu0 0.0
    %4043 = vmatpush2.msra.mxu0 0.0
    %4044 = vmatprep.subr.mxu0 0.0
    %4045 = vmatpush2.msra.mxu0 0.0
    %4046 = vmatprep.subr.mxu0 0.0
    %4047 = vmatpush2.msra.mxu0 0.0
    %4048 = vmatprep.subr.mxu0 0.0
    %4049 = vmatpush2.msra.mxu0 0.0
    %4050 = vmatprep.subr.mxu0 0.0
    %4051 = vmatpush2.msra.mxu0 0.0
    %4052 = vmatprep.subr.mxu0 0.0
    %4053 = vmatpush2.msra.mxu0 0.0
    %4054 = vmatprep.subr.mxu0 0.0
    %4055 = vmatpush2.msra.mxu0 0.0
    %4056 = vmatprep.subr.mxu0 0.0
    %4057 = vmatpush2.msra.mxu0 0.0
    %4058 = vmatprep.subr.mxu0 0.0
    %4059 = vmatpush2.msra.mxu0 0.0
    %4060 = vmatprep.subr.mxu0 0.0
    %4061 = vmatpush2.msra.mxu0 0.0
    %4062 = vmatprep.mubr.f32.mxu0 0.0
    %4063 = vmatmul.mubr.f32.gmra.mxu0 %v3993
    %v4064 = vpop.f32.mrf.mxu0
    %v4065 = vadd.f32 0.0, %v4064
    %v4066 = vpop.f32.mrf.mxu0
    %4067 = vmatprep.mubr.f32.mxu0 0.0
    %4068 = vmatmul.mubr.f32.gmra.mxu0 %v3996
    %v4069 = vpop.f32.mrf.mxu0
    %v4070 = vadd.f32 0.0, %v4069
    %v4071 = vpop.f32.mrf.mxu0
    %4072 = vdwg.mxu0
    %v4073 = vmul.f32 %v3741, %v2161
    %v4074 = vmul.f32 %v3746, %v2161
    %v4075 = vmul.f32 %v3822, %v2165
    %v4076 = vmul.f32 %v3827, %v2165
    %v4077 = vmul.f32 %v3903, %v2169
    %v4078 = vmul.f32 %v3908, %v2169
    %v4079 = vmul.f32 %v3984, %v2173
    %v4080 = vmul.f32 %v3989, %v2173
    %v4081 = vmul.f32 %v4065, %v2177
    %v4082 = vmul.f32 %v4070, %v2177
    %v4083 = vsel %vm365, %v4073, 0.0
    %v4084 = vsel %vm365, %v4075, 0.0
    %v4085 = vadd.f32 %v4083, %v4084
    %v4086 = vsel %vm365, %v4077, 0.0
    %v4087 = vadd.f32 %v4085, %v4086
    %v4088 = vsel %vm365, %v4079, 0.0
    %v4089 = vadd.f32 %v4087, %v4088
    %v4090 = vsel %vm365, %v4081, 0.0
    %v4091 = vadd.f32 %v4089, %v4090
    %v4092 = vsel %vm365, %v4074, 0.0
    %v4093 = vsel %vm365, %v4076, 0.0
    %v4094 = vadd.f32 %v4092, %v4093
    %v4095 = vsel %vm365, %v4078, 0.0
    %v4096 = vadd.f32 %v4094, %v4095
    %v4097 = vsel %vm365, %v4080, 0.0
    %v4098 = vadd.f32 %v4096, %v4097
    %v4099 = vsel %vm365, %v4082, 0.0
    %v4100 = vadd.f32 %v4098, %v4099
    %v4102 = vlaneseq
    %v4103 = vshrl.u32 %v4102, 7
    %v4104 = vsub.s32 0, %v4103
    %v4105 = vrot.slane %v2276, %v4104
    %v4107 = vadd.f32 %v4091, %v4105
    %v4108 = vadd.f32 %v4100, %v4105
    %vm4109 = vcmp.gt.f32.partialorder %v4107, 0.0
    %vm4110 = vcmp.gt.f32.partialorder %v4108, 0.0
    %v4111 = vmul.f32 %v4107, 0.01
    %v4112 = vmul.f32 %v4108, 0.01
    %v4113 = vsel %vm4109, %v4107, %v4111
    %v4114 = vsel %vm4110, %v4108, %v4112
    %v4115 = vsel %vm365, %v4113, 0.0
    %4116 = vadd.xlane.f32.xlu0 %v4115
    %v4117 = vpop.xlane.xlu0 %4116
    %v4118 = vsel %vm365, %v4114, 0.0
    %4119 = vadd.xlane.f32.xlu0 %v4118
    %v4120 = vpop.xlane.xlu0 %4119
    %v4121 = vmul.f32 %v4117, %v2231
    %v4122 = vmul.f32 %v4120, %v2231
    %v4123 = vsub.f32 %v4113, %v4121
    %v4124 = vsub.f32 %v4114, %v4122
    %v4125 = vmul.f32 %v4123, %v4123
    %v4126 = vmul.f32 %v4124, %v4124
    %v4127 = vsel %vm365, %v4125, 0.0
    %4128 = vadd.xlane.f32.xlu0 %v4127
    %v4129 = vpop.xlane.xlu0 %4128
    %v4130 = vsel %vm365, %v4126, 0.0
    %4131 = vadd.xlane.f32.xlu0 %v4130
    %v4132 = vpop.xlane.xlu0 %4131
    %v4133 = vmul.f32 %v4129, %v2231
    %v4134 = vmul.f32 %v4132, %v2231
    %v4135 = vadd.f32 %v4133, 1e-05
    %v4136 = vadd.f32 %v4134, 1e-05
    %v4137 = vrsqrt.pop %v4135
    %v4138 = vrsqrt.pop %v4136
    %v4139 = vmul.f32 %v4123, %v4137
    %v4140 = vmul.f32 %v4124, %v4138
    %v4142 = vlaneseq
    %v4143 = vshrl.u32 %v4142, 7
    %v4144 = vsub.s32 0, %v4143
    %v4145 = vrot.slane %v2277, %v4144
    %v4147 = vmul.f32 %v4139, %v4145
    %v4148 = vmul.f32 %v4140, %v4145
    %v4150 = vlaneseq
    %v4151 = vshrl.u32 %v4150, 7
    %v4152 = vsub.s32 0, %v4151
    %v4153 = vrot.slane %v2278, %v4152
    %v4155 = vadd.f32 %v4147, %v4153
    %v4156 = vadd.f32 %v4148, %v4153
    %v4157 = vld [vmem:[%s22] sm:$0xff]
    %v4158 = vld [vmem:[%s22 + $0x8] sm:$0xff]
    %v4159 = vld [vmem:[%s22 + $0x10] sm:$0xff]
    %v4160 = vld [vmem:[%s22 + $0x18] sm:$0xff]
    %v4161 = vld [vmem:[%s22 + $0x20] sm:$0xff]
    %v4162 = vld [vmem:[%s23] sm:$0x1]
    %v4164 = vlaneseq
    %v4165 = vshrl.u32 %v4164, 7
    %v4166 = vsub.s32 0, %v4165
    %v4167 = vrot.slane %v4162, %v4166
    %v4170 = vsel %vm365, %v4155, 0
    %v4173 = vsel %vm365, %v4156, 0
    %4175 = vmatprep.subr.mxu0 0.0
    %4176 = vmatpush1.msra.mxu0 0.0
    %4177 = vmatprep.subr.mxu0 0.0
    %4178 = vmatpush1.msra.mxu0 0.0
    %4179 = vmatprep.subr.mxu0 0.0
    %4180 = vmatpush1.msra.mxu0 0.0
    %4181 = vmatprep.subr.mxu0 0.0
    %4182 = vmatpush1.msra.mxu0 0.0
    %4183 = vmatprep.subr.mxu0 0.0
    %4184 = vmatpush1.msra.mxu0 0.0
    %4185 = vmatprep.subr.mxu0 0.0
    %4186 = vmatpush1.msra.mxu0 0.0
    %4187 = vmatprep.subr.mxu0 0.0
    %4188 = vmatpush1.msra.mxu0 0.0
    %4189 = vmatprep.subr.mxu0 0.0
    %4190 = vmatpush1.msra.mxu0 0.0
    %4191 = vmatprep.subr.mxu0 0.0
    %4192 = vmatpush1.msra.mxu0 0.0
    %4193 = vmatprep.subr.mxu0 0.0
    %4194 = vmatpush1.msra.mxu0 0.0
    %4195 = vmatprep.subr.mxu0 0.0
    %4196 = vmatpush1.msra.mxu0 0.0
    %4197 = vmatprep.subr.mxu0 0.0
    %4198 = vmatpush1.msra.mxu0 %v4161
    %4199 = vmatprep.subr.mxu0 0.0
    %4200 = vmatpush1.msra.mxu0 %v4160
    %4201 = vmatprep.subr.mxu0 0.0
    %4202 = vmatpush1.msra.mxu0 %v4159
    %4203 = vmatprep.subr.mxu0 0.0
    %4204 = vmatpush1.msra.mxu0 %v4158
    %4205 = vmatprep.subr.mxu0 0.0
    %4206 = vmatpush1.msra.mxu0 %v4157
    %4207 = vmatprep.subr.mxu0 0.0
    %4208 = vmatpush2.msra.mxu0 0.0
    %4209 = vmatprep.subr.mxu0 0.0
    %4210 = vmatpush2.msra.mxu0 0.0
    %4211 = vmatprep.subr.mxu0 0.0
    %4212 = vmatpush2.msra.mxu0 0.0
    %4213 = vmatprep.subr.mxu0 0.0
    %4214 = vmatpush2.msra.mxu0 0.0
    %4215 = vmatprep.subr.mxu0 0.0
    %4216 = vmatpush2.msra.mxu0 0.0
    %4217 = vmatprep.subr.mxu0 0.0
    %4218 = vmatpush2.msra.mxu0 0.0
    %4219 = vmatprep.subr.mxu0 0.0
    %4220 = vmatpush2.msra.mxu0 0.0
    %4221 = vmatprep.subr.mxu0 0.0
    %4222 = vmatpush2.msra.mxu0 0.0
    %4223 = vmatprep.subr.mxu0 0.0
    %4224 = vmatpush2.msra.mxu0 0.0
    %4225 = vmatprep.subr.mxu0 0.0
    %4226 = vmatpush2.msra.mxu0 0.0
    %4227 = vmatprep.subr.mxu0 0.0
    %4228 = vmatpush2.msra.mxu0 0.0
    %4229 = vmatprep.subr.mxu0 0.0
    %4230 = vmatpush2.msra.mxu0 0.0
    %4231 = vmatprep.subr.mxu0 0.0
    %4232 = vmatpush2.msra.mxu0 0.0
    %4233 = vmatprep.subr.mxu0 0.0
    %4234 = vmatpush2.msra.mxu0 0.0
    %4235 = vmatprep.subr.mxu0 0.0
    %4236 = vmatpush2.msra.mxu0 0.0
    %4237 = vmatprep.subr.mxu0 0.0
    %4238 = vmatpush2.msra.mxu0 0.0
    %4239 = vmatprep.mubr.f32.mxu0 0.0
    %4240 = vmatmul.mubr.f32.gmra.mxu0 %v4170
    %v4241 = vpop.f32.mrf.mxu0
    %v4242 = vadd.f32 %v4167, %v4241
    %v4243 = vpop.f32.mrf.mxu0
    %4244 = vmatprep.mubr.f32.mxu0 0.0
    %4245 = vmatmul.mubr.f32.gmra.mxu0 %v4173
    %v4246 = vpop.f32.mrf.mxu0
    %v4247 = vadd.f32 %v4167, %v4246
    %v4248 = vpop.f32.mrf.mxu0
    %4249 = vdwg.mxu0
    %vm4250 = vcmp.gt.f32.partialorder %v4242, 0.0
    %vm4251 = vcmp.gt.f32.partialorder %v4247, 0.0
    %v4252 = vmul.f32 %v4242, 0.01
    %v4253 = vmul.f32 %v4247, 0.01
    %v4254 = vsel %vm4250, %v4242, %v4252
    %v4255 = vsel %vm4251, %v4247, %v4253
    %4256 = vst.msk [vmem:[#allocation2] sm:$0xff] %vm365, %v4254
    %4257 = vst.msk [vmem:[#allocation2 + $0x8] sm:$0xff] %vm365, %v4255
    %v4258 = vld [vmem:[%s5] sm:$0x3]
    %v4260 = vsel %vm283, %v4258, 0
    %4262 = vmatprep.subr.mxu0 0.0
    %4263 = vmatpush1.msra.mxu0 0.0
    %4264 = vmatprep.subr.mxu0 0.0
    %4265 = vmatpush1.msra.mxu0 0.0
    %4266 = vmatprep.subr.mxu0 0.0
    %4267 = vmatpush1.msra.mxu0 0.0
    %4268 = vmatprep.subr.mxu0 0.0
    %4269 = vmatpush1.msra.mxu0 0.0
    %4270 = vmatprep.subr.mxu0 0.0
    %4271 = vmatpush1.msra.mxu0 0.0
    %4272 = vmatprep.subr.mxu0 0.0
    %4273 = vmatpush1.msra.mxu0 0.0
    %4274 = vmatprep.subr.mxu0 0.0
    %4275 = vmatpush1.msra.mxu0 0.0
    %4276 = vmatprep.subr.mxu0 0.0
    %4277 = vmatpush1.msra.mxu0 0.0
    %4278 = vmatprep.subr.mxu0 0.0
    %4279 = vmatpush1.msra.mxu0 0.0
    %4280 = vmatprep.subr.mxu0 0.0
    %4281 = vmatpush1.msra.mxu0 0.0
    %4282 = vmatprep.subr.mxu0 0.0
    %4283 = vmatpush1.msra.mxu0 0.0
    %4284 = vmatprep.subr.mxu0 0.0
    %4285 = vmatpush1.msra.mxu0 0.0
    %4286 = vmatprep.subr.mxu0 0.0
    %4287 = vmatpush1.msra.mxu0 0.0
    %4288 = vmatprep.subr.mxu0 0.0
    %4289 = vmatpush1.msra.mxu0 0.0
    %4290 = vmatprep.subr.mxu0 0.0
    %4291 = vmatpush1.msra.mxu0 %v4255
    %4292 = vmatprep.subr.mxu0 0.0
    %4293 = vmatpush1.msra.mxu0 %v4254
    %4294 = vmatprep.subr.mxu0 0.0
    %4295 = vmatpush2.msra.mxu0 0.0
    %4296 = vmatprep.subr.mxu0 0.0
    %4297 = vmatpush2.msra.mxu0 0.0
    %4298 = vmatprep.subr.mxu0 0.0
    %4299 = vmatpush2.msra.mxu0 0.0
    %4300 = vmatprep.subr.mxu0 0.0
    %4301 = vmatpush2.msra.mxu0 0.0
    %4302 = vmatprep.subr.mxu0 0.0
    %4303 = vmatpush2.msra.mxu0 0.0
    %4304 = vmatprep.subr.mxu0 0.0
    %4305 = vmatpush2.msra.mxu0 0.0
    %4306 = vmatprep.subr.mxu0 0.0
    %4307 = vmatpush2.msra.mxu0 0.0
    %4308 = vmatprep.subr.mxu0 0.0
    %4309 = vmatpush2.msra.mxu0 0.0
    %4310 = vmatprep.subr.mxu0 0.0
    %4311 = vmatpush2.msra.mxu0 0.0
    %4312 = vmatprep.subr.mxu0 0.0
    %4313 = vmatpush2.msra.mxu0 0.0
    %4314 = vmatprep.subr.mxu0 0.0
    %4315 = vmatpush2.msra.mxu0 0.0
    %4316 = vmatprep.subr.mxu0 0.0
    %4317 = vmatpush2.msra.mxu0 0.0
    %4318 = vmatprep.subr.mxu0 0.0
    %4319 = vmatpush2.msra.mxu0 0.0
    %4320 = vmatprep.subr.mxu0 0.0
    %4321 = vmatpush2.msra.mxu0 0.0
    %4322 = vmatprep.subr.mxu0 0.0
    %4323 = vmatpush2.msra.mxu0 0.0
    %4324 = vmatprep.subr.mxu0 0.0
    %4325 = vmatpush2.msra.mxu0 0.0
    %4326 = vmatprep.mubr.f32.mxu0 0.0
    %4327 = vmatmul.mubr.f32.gmra.mxu0 %v4260
    %v4328 = vpop.f32.mrf.mxu0
    %v4329 = vadd.f32 0.0, %v4328
    %v4330 = vpop.f32.mrf.mxu0
    %4331 = vdwg.mxu0
    %v4332 = vld [vmem:[%s6] sm:$0x3]
    %4334 = vset.pattern.permute.xlu0 0
    %4335 = vperm.xlu0 %4334, %v4332
    %v4336 = vpop.permute.xlu0 %4335
    %v4338 = vrcp.pop %v4336
    %v4339 = vmul.f32 %v4329, %v4338
    %vm4340 = vcmask 320512
    %4341 = vst.msk [vmem:[#allocation4] sm:$0x3] %vm4340, %v4339
    // Predicated region
    $region98: #{graph_encoder_forward.1} parent=1 // pred_check
      _
    $region99: #{graph_encoder_forward.1} parent=1 // pred_check_branch
      %4343 = sbr.rel (0) target = $region101
    $region100: #{graph_encoder_forward.1} parent=1 // pred_region
      %s4345 = ssub.s32 256, 256
      %4346 = vsyncadd [#allocation3], %s4345
      %s4347 = sshll.u32 [#allocation2], 4
      %s4348 = int_to_ptr.vmem [resolvable:$true] %s4347
      %4353 = dma.vmem_to_hbm [thread:$0]  %s4348, 256, %s24, [#allocation3], 128, 128, 8
    $region101: #{graph_encoder_forward.1} parent=1 // pred_fallthru
      _
    // Predicated region
    $region102: #{graph_encoder_forward.1} parent=1 // pred_check
      _
    $region103: #{graph_encoder_forward.1} parent=1 // pred_check_branch
      %4355 = sbr.rel (0) target = $region105
    $region104: #{graph_encoder_forward.1} parent=1 // pred_region
      %s4357 = ssub.s32 32, 32
      %4358 = vsyncadd [#allocation5], %s4357
      %s4360 = sshll.u32 [#allocation4], 4
      %s4361 = int_to_ptr.vmem [resolvable:$true] %s4360
      %4363 = dma.vmem_to_hbm [thread:$0]  %s4361, 32, %s25, [#allocation5]
    $region105: #{graph_encoder_forward.1} parent=1 // pred_fallthru
      _
    // Predicated region
    $region106: #{graph_encoder_forward.1} parent=1 // pred_check
      _
    $region107: #{graph_encoder_forward.1} parent=1 // pred_check_branch
      %4365 = sbr.rel (0) target = $region109
    $region108: #{graph_encoder_forward.1} parent=1 // pred_region
      %s4367 = ssub.s32 128, 128
      %4368 = vsyncadd [#allocation5], %s4367
      %s4370 = sshll.u32 [#allocation6], 4
      %s4371 = int_to_ptr.vmem [resolvable:$true] %s4370
      %4373 = dma.vmem_to_hbm [thread:$0]  %s4371, 128, %s26, [#allocation5]
    $region109: #{graph_encoder_forward.1} parent=1 // pred_fallthru
      _
    // Predicated region
    $region110: #{graph_encoder_forward.1} parent=1 // pred_check
      _
    $region111: #{graph_encoder_forward.1} parent=1 // pred_check_branch
      %4375 = sbr.rel (0) target = $region113
    $region112: #{graph_encoder_forward.1} parent=1 // pred_region
      %s4377 = ssub.s32 128, 128
      %4378 = vsyncadd [#allocation8], %s4377
      %s4380 = sshll.u32 [#allocation7], 4
      %s4381 = int_to_ptr.vmem [resolvable:$true] %s4380
      %4383 = dma.vmem_to_hbm [thread:$0]  %s4381, 128, %s27, [#allocation8]
    $region113: #{graph_encoder_forward.1} parent=1 // pred_fallthru
      _
    // Predicated region
    $region114: #{graph_encoder_forward.1} parent=1 // pred_check
      _
    $region115: #{graph_encoder_forward.1} parent=1 // pred_check_branch
      %4385 = sbr.rel (0) target = $region117
    $region116: #{graph_encoder_forward.1} parent=1 // pred_region
      %4386 = dma.done [#allocation3], 256
    $region117: #{graph_encoder_forward.1} parent=1 // pred_fallthru
      _
    // Predicated region
    $region118: #{graph_encoder_forward.1} parent=1 // pred_check
      _
    $region119: #{graph_encoder_forward.1} parent=1 // pred_check_branch
      %4388 = sbr.rel (0) target = $region121
    $region120: #{graph_encoder_forward.1} parent=1 // pred_region
      %4389 = dma.done [#allocation5], 32
    $region121: #{graph_encoder_forward.1} parent=1 // pred_fallthru
      _
    // Predicated region
    $region122: #{graph_encoder_forward.1} parent=1 // pred_check
      _
    $region123: #{graph_encoder_forward.1} parent=1 // pred_check_branch
      %4391 = sbr.rel (0) target = $region125
    $region124: #{graph_encoder_forward.1} parent=1 // pred_region
      %4392 = dma.done [#allocation5], 128
    $region125: #{graph_encoder_forward.1} parent=1 // pred_fallthru
      _
    // Predicated region
    $region126: #{graph_encoder_forward.1} parent=1 // pred_check
      _
    $region127: #{graph_encoder_forward.1} parent=1 // pred_check_branch
      %4394 = sbr.rel (0) target = $region129
    $region128: #{graph_encoder_forward.1} parent=1 // pred_region
      %4395 = dma.done [#allocation8], 128
    $region129: #{graph_encoder_forward.1} parent=1 // pred_fallthru
      _
    %4396 = vsyncpa [#allocation3], 1
    %4397 = vsyncpa [#allocation5], 1
    %4398 = vsyncpa [#allocation8], 1

</llo_original>
